<compile_context>
chip_gen: v6e
topology: v6e:2x2x1
jax: 0.10.0
libtpu: 0.0.40
codegen_flags: <defaults>
</compile_context>

<pallas_src>
import functools

import jax
import jax.numpy as jnp
from jax.experimental import pallas as pl
from jax.experimental.pallas import tpu as pltpu


def attention_kernel(x_ref, wq_ref, wk_ref, wv_ref, bq_ref, bk_ref, bv_ref,
                     o_ref, *, block_b, seq, hidden):
    # x tile: (block_b*seq, H) f32 rows for this batch group; cast to bf16 on the VPU in-kernel
    # (cheaper than a separate wrapper-side cast pass through HBM).
    xb = x_ref[...].astype(jnp.bfloat16)

    inv_h = 1.0 / hidden  # fold the 1/hidden_dim score scale into q ((rows,H) work, not (S,S))

    # Three lane-aligned MXU matmuls with f32 accumulation; bias add in f32.
    q = (jnp.dot(xb, wq_ref[...], preferred_element_type=jnp.float32) + bq_ref[...]) * inv_h
    k = jnp.dot(xb, wk_ref[...], preferred_element_type=jnp.float32) + bk_ref[...]
    v = jnp.dot(xb, wv_ref[...], preferred_element_type=jnp.float32) + bv_ref[...]

    # Split rows back into per-batch (block_b, S, H); trailing dims unchanged -> free reshape.
    q = q.astype(jnp.bfloat16).reshape(block_b, seq, hidden)
    k = k.astype(jnp.bfloat16).reshape(block_b, seq, hidden)
    v = v.astype(jnp.bfloat16).reshape(block_b, seq, hidden)

    # scores = Q @ K^T, contracting the last dims directly (no explicit transpose / XLU copy).
    scores = jnp.einsum("bqd,bkd->bqk", q, k,
                        preferred_element_type=jnp.float32)          # (block_b, S, S) f32

    # Softmax in f32 (v5e has no bf16 VPU/EUP); normalization deferred until after P @ V.
    m = jnp.max(scores, axis=-1, keepdims=True)
    p = jnp.exp(scores - m)
    denom = jnp.sum(p, axis=-1, keepdims=True)

    out = jnp.einsum("bqk,bkd->bqd", p.astype(jnp.bfloat16), v,
                     preferred_element_type=jnp.float32)              # (block_b, S, H) f32
    out = out * pl.reciprocal(denom, approx=True)                     # EUP slot, (S,1) bcast

    # H is a multiple of 128 -> lane-dense, unmasked stores.
    o_ref[...] = out.reshape(block_b * seq, hidden).astype(o_ref.dtype)


def prepare_attention_params(wq, bq, wk, bk, wv, bv):
    """One-time (parameter-load time) prep: pre-transpose weights to (in, out) and cast to bf16,
    reshape biases to (1, H) f32.  Avoids re-streaming/converting weights through HBM per call."""
    to_w = lambda w: jnp.asarray(w.T, dtype=jnp.bfloat16)
    to_b = lambda b: jnp.asarray(b, dtype=jnp.float32).reshape(1, -1)
    return (to_w(wq), to_w(wk), to_w(wv), to_b(bq), to_b(bk), to_b(bv))


def _build_attention_call(B, S, H, block_b, out_dtype, single_buffer_weights):
    rows = block_b * S

    def const_spec(shape):
        # Weights/biases have a constant index_map (resident across the grid).
        if single_buffer_weights:
            # No double-buffering needed for a never-changing block -> halves weight VMEM (v7x).
            return pl.BlockSpec(shape, lambda i: (0, 0), pipeline_mode=pl.Buffered(1))
        return pl.BlockSpec(shape, lambda i: (0, 0))

    kernel = functools.partial(attention_kernel, block_b=block_b, seq=S, hidden=H)

    return pl.pallas_call(
        kernel,
        out_shape=jax.ShapeDtypeStruct((B * S, H), out_dtype),
        grid_spec=pltpu.PrefetchScalarGridSpec(
            num_scalar_prefetch=0,
            grid=(B // block_b,),
            in_specs=[
                pl.BlockSpec((rows, H), lambda i: (i, 0)),   # x rows (f32, cast in-kernel)
                const_spec((H, H)),                          # Wq^T (bf16)
                const_spec((H, H)),                          # Wk^T (bf16)
                const_spec((H, H)),                          # Wv^T (bf16)
                const_spec((1, H)),                          # bq (f32)
                const_spec((1, H)),                          # bk (f32)
                const_spec((1, H)),                          # bv (f32)
            ],
            out_specs=pl.BlockSpec((rows, H), lambda i: (i, 0)),
        ),
        compiler_params=pltpu.CompilerParams(
            dimension_semantics=("parallel",),
            # Raise the default scoped-VMEM limit (16/32 MiB) so larger row blocks fit;
            # still only a limit, actual usage here is ~1 MiB.
            vmem_limit_bytes=64 * 1024 * 1024,
        ),
    )


def attention_layer(x, params, *, block_b=2):
    """x: (B, S, H) f32; params: output of prepare_attention_params."""
    B, S, H = x.shape
    assert B % block_b == 0, "block_b must divide batch"
    wq_t, wk_t, wv_t, bq, bk, bv = params

    # Free (contiguous) metadata reshape; no dtype cast here -- bf16 cast happens in-kernel.
    x_rows = x.reshape(B * S, H)

    try:
        call = _build_attention_call(B, S, H, block_b, x.dtype, single_buffer_weights=True)
        out = call(x_rows, wq_t, wk_t, wv_t, bq, bk, bv)
    except Exception:
        # TODO(synk): pipeline_mode=pl.Buffered(1) unsupported on this JAX/backend; fall back to
        # default double-buffered resident weights (identical numerics, slightly more VMEM).
        call = _build_attention_call(B, S, H, block_b, x.dtype, single_buffer_weights=False)
        out = call(x_rows, wq_t, wk_t, wv_t, bq, bk, bv)

    return out.reshape(B, S, H)


def attention_layer_ref(x, wq, bq, wk, bk, wv, bv):
    """Pure-JAX f32 reference mirroring the PyTorch forward."""
    H = x.shape[-1]
    q = x @ wq.T + bq
    k = x @ wk.T + bk
    v = x @ wv.T + bv
    scores = jnp.einsum("bsh,bth->bst", q, k) / H
    attn = jax.nn.softmax(scores, axis=-1)
    return jnp.einsum("bst,bth->bsh", attn, v)


if __name__ == "__main__":
    # Lane/MXU-friendly small shapes: H multiple of 128 (lane-dense output, aligned slices),
    # block_b*S = 256 rows per grid step, 4 parallel grid steps (>=2 per TC on v7x).
    B, S, H = 8, 128, 128
    block_b = 2

    key = jax.random.PRNGKey(0)
    kx, kwq, kbq, kwk, kbk, kwv, kbv = jax.random.split(key, 7)

    x = jax.random.normal(kx, (B, S, H), dtype=jnp.float32)

    # Deterministic parameter init (uniform like nn.Linear default, bound = 1/sqrt(H)).
    bound = 1.0 / jnp.sqrt(H)
    wq = jax.random.uniform(kwq, (H, H), minval=-bound, maxval=bound, dtype=jnp.float32)
    bq = jax.random.uniform(kbq, (H,), minval=-bound, maxval=bound, dtype=jnp.float32)
    wk = jax.random.uniform(kwk, (H, H), minval=-bound, maxval=bound, dtype=jnp.float32)
    bk = jax.random.uniform(kbk, (H,), minval=-bound, maxval=bound, dtype=jnp.float32)
    wv = jax.random.uniform(kwv, (H, H), minval=-bound, maxval=bound, dtype=jnp.float32)
    bv = jax.random.uniform(kbv, (H,), minval=-bound, maxval=bound, dtype=jnp.float32)

    # Weight prep happens once (parameter-load time), not inside the per-call forward.
    params = prepare_attention_params(wq, bq, wk, bk, wv, bv)

    out = attention_layer(x, params, block_b=block_b)
    out = jax.block_until_ready(out)

    ref = attention_layer_ref(x, wq, bq, wk, bk, wv, bv)
    assert out.shape == (B, S, H)
    # bf16 MXU operands + approx reciprocal -> tolerance loosened vs f32 reference.
    assert jnp.allclose(out, ref, atol=5e-2, rtol=5e-2), "mismatch vs JAX reference"

    print("KERNEL_OK")
</pallas_src>

<mosaic_0001>
module attributes {stable_mosaic.version = 11 : i64} {
  func.func @attention_kernel(%arg0: i32, %arg1: memref<256x128xf32, #tpu.memory_space<vmem>>, %arg2: memref<128x128xbf16, #tpu.memory_space<vmem>>, %arg3: memref<128x128xbf16, #tpu.memory_space<vmem>>, %arg4: memref<128x128xbf16, #tpu.memory_space<vmem>>, %arg5: memref<1x128xf32, #tpu.memory_space<vmem>>, %arg6: memref<1x128xf32, #tpu.memory_space<vmem>>, %arg7: memref<1x128xf32, #tpu.memory_space<vmem>>, %arg8: memref<256x128xf32, #tpu.memory_space<vmem>>) attributes {dimension_semantics = [#tpu.dimension_semantics<parallel>], iteration_bounds = array<i64: 4>, scalar_prefetch = 0 : i64, scratch_operands = 0 : i64, tpu.core_type = #tpu.core_type<tc>, window_params = [{transform_indices = @transform_0, window_bounds = array<i64: 256, 128>}, {pipeline_mode = #tpu.pipeline_mode<synchronous>, transform_indices = @transform_1, window_bounds = array<i64: 128, 128>}, {pipeline_mode = #tpu.pipeline_mode<synchronous>, transform_indices = @transform_2, window_bounds = array<i64: 128, 128>}, {pipeline_mode = #tpu.pipeline_mode<synchronous>, transform_indices = @transform_3, window_bounds = array<i64: 128, 128>}, {pipeline_mode = #tpu.pipeline_mode<synchronous>, transform_indices = @transform_4, window_bounds = array<i64: 1, 128>}, {pipeline_mode = #tpu.pipeline_mode<synchronous>, transform_indices = @transform_5, window_bounds = array<i64: 1, 128>}, {pipeline_mode = #tpu.pipeline_mode<synchronous>, transform_indices = @transform_6, window_bounds = array<i64: 1, 128>}, {transform_indices = @transform_7, window_bounds = array<i64: 256, 128>}]} {
    %c0 = arith.constant 0 : index
    %c0_0 = arith.constant 0 : index
    %0 = vector.load %arg1[%c0, %c0_0] : memref<256x128xf32, #tpu.memory_space<vmem>>, vector<256x128xf32>
    %1 = arith.truncf %0 : vector<256x128xf32> to vector<256x128xbf16>
    %c0_1 = arith.constant 0 : index
    %c0_2 = arith.constant 0 : index
    %2 = vector.load %arg2[%c0_1, %c0_2] : memref<128x128xbf16, #tpu.memory_space<vmem>>, vector<128x128xbf16>
    %cst = arith.constant dense<0.000000e+00> : vector<256x128xf32>
    %3 = tpu.matmul %1, %2, %cst {dimension_numbers = #tpu.dot_dimension_numbers<[1], [0], [0], [1], [0, 0, 1, 1], [], []>} : vector<256x128xbf16>, vector<128x128xbf16>, vector<256x128xf32> -> vector<256x128xf32>
    %c0_3 = arith.constant 0 : index
    %c0_4 = arith.constant 0 : index
    %4 = vector.load %arg5[%c0_3, %c0_4] : memref<1x128xf32, #tpu.memory_space<vmem>>, vector<1x128xf32>
    %5 = vector.broadcast %4 : vector<1x128xf32> to vector<256x128xf32>
    %6 = arith.addf %3, %5 : vector<256x128xf32>
    %cst_5 = arith.constant 7.812500e-03 : f32
    %7 = vector.broadcast %cst_5 : f32 to vector<256x128xf32>
    %8 = arith.mulf %6, %7 : vector<256x128xf32>
    %c0_6 = arith.constant 0 : index
    %c0_7 = arith.constant 0 : index
    %9 = vector.load %arg3[%c0_6, %c0_7] : memref<128x128xbf16, #tpu.memory_space<vmem>>, vector<128x128xbf16>
    %cst_8 = arith.constant dense<0.000000e+00> : vector<256x128xf32>
    %10 = tpu.matmul %1, %9, %cst_8 {dimension_numbers = #tpu.dot_dimension_numbers<[1], [0], [0], [1], [0, 0, 1, 1], [], []>} : vector<256x128xbf16>, vector<128x128xbf16>, vector<256x128xf32> -> vector<256x128xf32>
    %c0_9 = arith.constant 0 : index
    %c0_10 = arith.constant 0 : index
    %11 = vector.load %arg6[%c0_9, %c0_10] : memref<1x128xf32, #tpu.memory_space<vmem>>, vector<1x128xf32>
    %12 = vector.broadcast %11 : vector<1x128xf32> to vector<256x128xf32>
    %13 = arith.addf %10, %12 : vector<256x128xf32>
    %c0_11 = arith.constant 0 : index
    %c0_12 = arith.constant 0 : index
    %14 = vector.load %arg4[%c0_11, %c0_12] : memref<128x128xbf16, #tpu.memory_space<vmem>>, vector<128x128xbf16>
    %cst_13 = arith.constant dense<0.000000e+00> : vector<256x128xf32>
    %15 = tpu.matmul %1, %14, %cst_13 {dimension_numbers = #tpu.dot_dimension_numbers<[1], [0], [0], [1], [0, 0, 1, 1], [], []>} : vector<256x128xbf16>, vector<128x128xbf16>, vector<256x128xf32> -> vector<256x128xf32>
    %c0_14 = arith.constant 0 : index
    %c0_15 = arith.constant 0 : index
    %16 = vector.load %arg7[%c0_14, %c0_15] : memref<1x128xf32, #tpu.memory_space<vmem>>, vector<1x128xf32>
    %17 = vector.broadcast %16 : vector<1x128xf32> to vector<256x128xf32>
    %18 = arith.addf %15, %17 : vector<256x128xf32>
    %19 = arith.truncf %8 : vector<256x128xf32> to vector<256x128xbf16>
    %20 = vector.shape_cast %19 : vector<256x128xbf16> to vector<2x128x128xbf16>
    %21 = arith.truncf %13 : vector<256x128xf32> to vector<256x128xbf16>
    %22 = vector.shape_cast %21 : vector<256x128xbf16> to vector<2x128x128xbf16>
    %23 = arith.truncf %18 : vector<256x128xf32> to vector<256x128xbf16>
    %24 = vector.shape_cast %23 : vector<256x128xbf16> to vector<2x128x128xbf16>
    "tpu.trace_start"() <{level = 10 : i32, message = "bqd,bkd->bqk"}> : () -> ()
    %cst_16 = arith.constant dense<0.000000e+00> : vector<2x128x128xf32>
    %25 = tpu.matmul %20, %22, %cst_16 {dimension_numbers = #tpu.dot_dimension_numbers<[2], [2], [1], [1], [0, 0, 0, 1, 1, 1], [0], [0]>} : vector<2x128x128xbf16>, vector<2x128x128xbf16>, vector<2x128x128xf32> -> vector<2x128x128xf32>
    "tpu.trace_stop"() : () -> ()
    %cst_17 = arith.constant dense<0xFF800000> : vector<2x128xf32>
    %26 = vector.multi_reduction <maximumf>, %25, %cst_17 [2] : vector<2x128x128xf32> to vector<2x128xf32>
    %27 = vector.shape_cast %26 : vector<2x128xf32> to vector<2x128x1xf32>
    %28 = vector.broadcast %27 : vector<2x128x1xf32> to vector<2x128x128xf32>
    %29 = arith.subf %25, %28 : vector<2x128x128xf32>
    %30 = math.exp %29 : vector<2x128x128xf32>
    %cst_18 = arith.constant dense<0.000000e+00> : vector<2x128xf32>
    %31 = vector.multi_reduction <add>, %30, %cst_18 [2] : vector<2x128x128xf32> to vector<2x128xf32>
    %32 = vector.shape_cast %31 : vector<2x128xf32> to vector<2x128x1xf32>
    %33 = arith.truncf %30 : vector<2x128x128xf32> to vector<2x128x128xbf16>
    "tpu.trace_start"() <{level = 10 : i32, message = "bqk,bkd->bqd"}> : () -> ()
    %cst_19 = arith.constant dense<0.000000e+00> : vector<2x128x128xf32>
    %34 = tpu.matmul %33, %24, %cst_19 {dimension_numbers = #tpu.dot_dimension_numbers<[2], [1], [1], [2], [0, 0, 0, 1, 1, 2], [0], [0]>} : vector<2x128x128xbf16>, vector<2x128x128xbf16>, vector<2x128x128xf32> -> vector<2x128x128xf32>
    "tpu.trace_stop"() : () -> ()
    %35 = tpu.reciprocal %32 {approx = true} : vector<2x128x1xf32> -> vector<2x128x1xf32>
    %36 = vector.broadcast %35 : vector<2x128x1xf32> to vector<2x128x128xf32>
    %37 = arith.mulf %34, %36 : vector<2x128x128xf32>
    %38 = vector.shape_cast %37 : vector<2x128x128xf32> to vector<256x128xf32>
    %c0_20 = arith.constant 0 : index
    %c0_21 = arith.constant 0 : index
    %39 = vector.load %arg8[%c0_20, %c0_21] : memref<256x128xf32, #tpu.memory_space<vmem>>, vector<256x128xf32>
    tpu.vector_store %arg8[%c0_20, %c0_21], %38 {strides = array<i32>} : memref<256x128xf32, #tpu.memory_space<vmem>>, vector<256x128xf32>,
    return
  }
  func.func @transform_0(%arg0: i32) -> (i32, i32) {
    %c0_i32 = arith.constant 0 : i32
    %c0_i32_0 = arith.constant 0 : i32
    return %arg0, %c0_i32 : i32, i32
  }
  func.func @transform_1(%arg0: i32) -> (i32, i32) {
    %c0_i32 = arith.constant 0 : i32
    %c0_i32_0 = arith.constant 0 : i32
    %c0_i32_1 = arith.constant 0 : i32
    return %c0_i32, %c0_i32_0 : i32, i32
  }
  func.func @transform_2(%arg0: i32) -> (i32, i32) {
    %c0_i32 = arith.constant 0 : i32
    %c0_i32_0 = arith.constant 0 : i32
    %c0_i32_1 = arith.constant 0 : i32
    return %c0_i32, %c0_i32_0 : i32, i32
  }
  func.func @transform_3(%arg0: i32) -> (i32, i32) {
    %c0_i32 = arith.constant 0 : i32
    %c0_i32_0 = arith.constant 0 : i32
    %c0_i32_1 = arith.constant 0 : i32
    return %c0_i32, %c0_i32_0 : i32, i32
  }
  func.func @transform_4(%arg0: i32) -> (i32, i32) {
    %c0_i32 = arith.constant 0 : i32
    %c0_i32_0 = arith.constant 0 : i32
    %c0_i32_1 = arith.constant 0 : i32
    return %c0_i32, %c0_i32_0 : i32, i32
  }
  func.func @transform_5(%arg0: i32) -> (i32, i32) {
    %c0_i32 = arith.constant 0 : i32
    %c0_i32_0 = arith.constant 0 : i32
    %c0_i32_1 = arith.constant 0 : i32
    return %c0_i32, %c0_i32_0 : i32, i32
  }
  func.func @transform_6(%arg0: i32) -> (i32, i32) {
    %c0_i32 = arith.constant 0 : i32
    %c0_i32_0 = arith.constant 0 : i32
    %c0_i32_1 = arith.constant 0 : i32
    return %c0_i32, %c0_i32_0 : i32, i32
  }
  func.func @transform_7(%arg0: i32) -> (i32, i32) {
    %c0_i32 = arith.constant 0 : i32
    %c0_i32_0 = arith.constant 0 : i32
    return %arg0, %c0_i32 : i32, i32
  }
}

module attributes {stable_mosaic.version = 11 : i64} {
  func.func @attention_kernel(%arg0: i32, %arg1: memref<256x128xf32, #tpu.memory_space<vmem>>, %arg2: memref<128x128xbf16, #tpu.memory_space<vmem>>, %arg3: memref<128x128xbf16, #tpu.memory_space<vmem>>, %arg4: memref<128x128xbf16, #tpu.memory_space<vmem>>, %arg5: memref<1x128xf32, #tpu.memory_space<vmem>>, %arg6: memref<1x128xf32, #tpu.memory_space<vmem>>, %arg7: memref<1x128xf32, #tpu.memory_space<vmem>>, %arg8: memref<256x128xf32, #tpu.memory_space<vmem>>) attributes {dimension_semantics = [#tpu.dimension_semantics<parallel>], iteration_bounds = array<i64: 4>, scalar_prefetch = 0 : i64, scratch_operands = 0 : i64, tpu.core_type = #tpu.core_type<tc>, window_params = [{transform_indices = @transform_0, window_bounds = array<i64: 256, 128>}, {pipeline_mode = #tpu.pipeline_mode<synchronous>, transform_indices = @transform_1, window_bounds = array<i64: 128, 128>}, {pipeline_mode = #tpu.pipeline_mode<synchronous>, transform_indices = @transform_2, window_bounds = array<i64: 128, 128>}, {pipeline_mode = #tpu.pipeline_mode<synchronous>, transform_indices = @transform_3, window_bounds = array<i64: 128, 128>}, {pipeline_mode = #tpu.pipeline_mode<synchronous>, transform_indices = @transform_4, window_bounds = array<i64: 1, 128>}, {pipeline_mode = #tpu.pipeline_mode<synchronous>, transform_indices = @transform_5, window_bounds = array<i64: 1, 128>}, {pipeline_mode = #tpu.pipeline_mode<synchronous>, transform_indices = @transform_6, window_bounds = array<i64: 1, 128>}, {transform_indices = @transform_7, window_bounds = array<i64: 256, 128>}]} {
    %c0 = arith.constant 0 : index
    %c0_0 = arith.constant 0 : index
    %0 = vector.load %arg1[%c0, %c0_0] : memref<256x128xf32, #tpu.memory_space<vmem>>, vector<256x128xf32>
    %1 = arith.truncf %0 : vector<256x128xf32> to vector<256x128xbf16>
    %c0_1 = arith.constant 0 : index
    %c0_2 = arith.constant 0 : index
    %2 = vector.load %arg2[%c0_1, %c0_2] : memref<128x128xbf16, #tpu.memory_space<vmem>>, vector<128x128xbf16>
    %cst = arith.constant dense<0.000000e+00> : vector<256x128xf32>
    %3 = tpu.matmul %1, %2, %cst {dimension_numbers = #tpu.dot_dimension_numbers<[1], [0], [0], [1], [0, 0, 1, 1], [], []>} : vector<256x128xbf16>, vector<128x128xbf16>, vector<256x128xf32> -> vector<256x128xf32>
    %c0_3 = arith.constant 0 : index
    %c0_4 = arith.constant 0 : index
    %4 = vector.load %arg5[%c0_3, %c0_4] : memref<1x128xf32, #tpu.memory_space<vmem>>, vector<1x128xf32>
    %5 = vector.broadcast %4 : vector<1x128xf32> to vector<256x128xf32>
    %6 = arith.addf %3, %5 : vector<256x128xf32>
    %cst_5 = arith.constant 7.812500e-03 : f32
    %7 = vector.broadcast %cst_5 : f32 to vector<256x128xf32>
    %8 = arith.mulf %6, %7 : vector<256x128xf32>
    %c0_6 = arith.constant 0 : index
    %c0_7 = arith.constant 0 : index
    %9 = vector.load %arg3[%c0_6, %c0_7] : memref<128x128xbf16, #tpu.memory_space<vmem>>, vector<128x128xbf16>
    %cst_8 = arith.constant dense<0.000000e+00> : vector<256x128xf32>
    %10 = tpu.matmul %1, %9, %cst_8 {dimension_numbers = #tpu.dot_dimension_numbers<[1], [0], [0], [1], [0, 0, 1, 1], [], []>} : vector<256x128xbf16>, vector<128x128xbf16>, vector<256x128xf32> -> vector<256x128xf32>
    %c0_9 = arith.constant 0 : index
    %c0_10 = arith.constant 0 : index
    %11 = vector.load %arg6[%c0_9, %c0_10] : memref<1x128xf32, #tpu.memory_space<vmem>>, vector<1x128xf32>
    %12 = vector.broadcast %11 : vector<1x128xf32> to vector<256x128xf32>
    %13 = arith.addf %10, %12 : vector<256x128xf32>
    %c0_11 = arith.constant 0 : index
    %c0_12 = arith.constant 0 : index
    %14 = vector.load %arg4[%c0_11, %c0_12] : memref<128x128xbf16, #tpu.memory_space<vmem>>, vector<128x128xbf16>
    %cst_13 = arith.constant dense<0.000000e+00> : vector<256x128xf32>
    %15 = tpu.matmul %1, %14, %cst_13 {dimension_numbers = #tpu.dot_dimension_numbers<[1], [0], [0], [1], [0, 0, 1, 1], [], []>} : vector<256x128xbf16>, vector<128x128xbf16>, vector<256x128xf32> -> vector<256x128xf32>
    %c0_14 = arith.constant 0 : index
    %c0_15 = arith.constant 0 : index
    %16 = vector.load %arg7[%c0_14, %c0_15] : memref<1x128xf32, #tpu.memory_space<vmem>>, vector<1x128xf32>
    %17 = vector.broadcast %16 : vector<1x128xf32> to vector<256x128xf32>
    %18 = arith.addf %15, %17 : vector<256x128xf32>
    %19 = arith.truncf %8 : vector<256x128xf32> to vector<256x128xbf16>
    %20 = vector.shape_cast %19 : vector<256x128xbf16> to vector<2x128x128xbf16>
    %21 = arith.truncf %13 : vector<256x128xf32> to vector<256x128xbf16>
    %22 = vector.shape_cast %21 : vector<256x128xbf16> to vector<2x128x128xbf16>
    %23 = arith.truncf %18 : vector<256x128xf32> to vector<256x128xbf16>
    %24 = vector.shape_cast %23 : vector<256x128xbf16> to vector<2x128x128xbf16>
    "tpu.trace_start"() <{level = 10 : i32, message = "bqd,bkd->bqk"}> : () -> ()
    %cst_16 = arith.constant dense<0.000000e+00> : vector<2x128x128xf32>
    %25 = tpu.matmul %20, %22, %cst_16 {dimension_numbers = #tpu.dot_dimension_numbers<[2], [2], [1], [1], [0, 0, 0, 1, 1, 1], [0], [0]>} : vector<2x128x128xbf16>, vector<2x128x128xbf16>, vector<2x128x128xf32> -> vector<2x128x128xf32>
    "tpu.trace_stop"() : () -> ()
    %cst_17 = arith.constant dense<0xFF800000> : vector<2x128xf32>
    %26 = vector.multi_reduction <maximumf>, %25, %cst_17 [2] : vector<2x128x128xf32> to vector<2x128xf32>
    %27 = vector.shape_cast %26 : vector<2x128xf32> to vector<2x128x1xf32>
    %28 = vector.broadcast %27 : vector<2x128x1xf32> to vector<2x128x128xf32>
    %29 = arith.subf %25, %28 : vector<2x128x128xf32>
    %30 = math.exp %29 : vector<2x128x128xf32>
    %cst_18 = arith.constant dense<0.000000e+00> : vector<2x128xf32>
    %31 = vector.multi_reduction <add>, %30, %cst_18 [2] : vector<2x128x128xf32> to vector<2x128xf32>
    %32 = vector.shape_cast %31 : vector<2x128xf32> to vector<2x128x1xf32>
    %33 = arith.truncf %30 : vector<2x128x128xf32> to vector<2x128x128xbf16>
    "tpu.trace_start"() <{level = 10 : i32, message = "bqk,bkd->bqd"}> : () -> ()
    %cst_19 = arith.constant dense<0.000000e+00> : vector<2x128x128xf32>
    %34 = tpu.matmul %33, %24, %cst_19 {dimension_numbers = #tpu.dot_dimension_numbers<[2], [1], [1], [2], [0, 0, 0, 1, 1, 2], [0], [0]>} : vector<2x128x128xbf16>, vector<2x128x128xbf16>, vector<2x128x128xf32> -> vector<2x128x128xf32>
    "tpu.trace_stop"() : () -> ()
    %35 = tpu.reciprocal %32 {approx = true} : vector<2x128x1xf32> -> vector<2x128x1xf32>
    %36 = vector.broadcast %35 : vector<2x128x1xf32> to vector<2x128x128xf32>
    %37 = arith.mulf %34, %36 : vector<2x128x128xf32>
    %38 = vector.shape_cast %37 : vector<2x128x128xf32> to vector<256x128xf32>
    %c0_20 = arith.constant 0 : index
    %c0_21 = arith.constant 0 : index
    %39 = vector.load %arg8[%c0_20, %c0_21] : memref<256x128xf32, #tpu.memory_space<vmem>>, vector<256x128xf32>
    tpu.vector_store %arg8[%c0_20, %c0_21], %38 {strides = array<i32>} : memref<256x128xf32, #tpu.memory_space<vmem>>, vector<256x128xf32>,
    return
  }
  func.func @transform_0(%arg0: i32) -> (i32, i32) {
    %c0_i32 = arith.constant 0 : i32
    %c0_i32_0 = arith.constant 0 : i32
    return %arg0, %c0_i32 : i32, i32
  }
  func.func @transform_1(%arg0: i32) -> (i32, i32) {
    %c0_i32 = arith.constant 0 : i32
    %c0_i32_0 = arith.constant 0 : i32
    %c0_i32_1 = arith.constant 0 : i32
    return %c0_i32, %c0_i32_0 : i32, i32
  }
  func.func @transform_2(%arg0: i32) -> (i32, i32) {
    %c0_i32 = arith.constant 0 : i32
    %c0_i32_0 = arith.constant 0 : i32
    %c0_i32_1 = arith.constant 0 : i32
    return %c0_i32, %c0_i32_0 : i32, i32
  }
  func.func @transform_3(%arg0: i32) -> (i32, i32) {
    %c0_i32 = arith.constant 0 : i32
    %c0_i32_0 = arith.constant 0 : i32
    %c0_i32_1 = arith.constant 0 : i32
    return %c0_i32, %c0_i32_0 : i32, i32
  }
  func.func @transform_4(%arg0: i32) -> (i32, i32) {
    %c0_i32 = arith.constant 0 : i32
    %c0_i32_0 = arith.constant 0 : i32
    %c0_i32_1 = arith.constant 0 : i32
    return %c0_i32, %c0_i32_0 : i32, i32
  }
  func.func @transform_5(%arg0: i32) -> (i32, i32) {
    %c0_i32 = arith.constant 0 : i32
    %c0_i32_0 = arith.constant 0 : i32
    %c0_i32_1 = arith.constant 0 : i32
    return %c0_i32, %c0_i32_0 : i32, i32
  }
  func.func @transform_6(%arg0: i32) -> (i32, i32) {
    %c0_i32 = arith.constant 0 : i32
    %c0_i32_0 = arith.constant 0 : i32
    %c0_i32_1 = arith.constant 0 : i32
    return %c0_i32, %c0_i32_0 : i32, i32
  }
  func.func @transform_7(%arg0: i32) -> (i32, i32) {
    %c0_i32 = arith.constant 0 : i32
    %c0_i32_0 = arith.constant 0 : i32
    return %arg0, %c0_i32 : i32, i32
  }
}

</mosaic_0001>

<llo_original>
// kernel: tpu_custom_call.1
$region0: #{tpu_custom_call.1}
  #allocation0 [shape = 'u32[]', space=smem, size = 0x4, offset = 0x4, fixed_abs, tag = 'smem constant byte address 0x4 - core index']
  #allocation1 [shape = 'u32[144,128]{1,0:T(1,128)}', space=vmem, size = 0x12000, scoped, tag = 'internal scratch']
  %s0 = inlined_call_operand.hbm [shape: f32[1024,128], index: 0, kind: input, shape index: {}]
  %s1 = inlined_call_operand.hbm [shape: bf16[128,128], index: 1, kind: input, shape index: {}]
  %s2 = inlined_call_operand.hbm [shape: bf16[128,128], index: 2, kind: input, shape index: {}]
  %s3 = inlined_call_operand.hbm [shape: bf16[128,128], index: 3, kind: input, shape index: {}]
  %s4 = inlined_call_operand.vmem [shape: f32[1,128], index: 4, kind: input, shape index: {}]
  %s5 = inlined_call_operand.vmem [shape: f32[1,128], index: 5, kind: input, shape index: {}]
  %s6 = inlined_call_operand.vmem [shape: f32[1,128], index: 6, kind: input, shape index: {}]
  %s7 = inlined_call_operand.hbm [shape: f32[1024,128], index: 7, kind: output, shape index: {}]
  %s8 = sld [smem:[#allocation0]]
  $region77: #{tpu_custom_call.1} parent=0
    _
  %s10 = ssub.s32 1, %s8
  %s11 = scalar_select 0, %s10, %s8
  $region1: #{tpu_custom_call.1} parent=0
    #allocation2 [shape = 'u8[262144]{0}', space=vmem, size = 0x40000, scoped, tag = 'input window, operand 0']
    #allocation3 [shape = 's32[2]{0}', space=sflag, size = 0x8, scoped, tag = 'scoped memory for tpu_custom_call.1']
    #allocation4 [shape = 's32[2]{0}', space=sflag, size = 0x8, scoped, tag = 'scoped memory for tpu_custom_call.1']
    #allocation5 [shape = 'u8[32768]{0}', space=vmem, size = 0x8000, scoped, tag = 'input window, operand 1, single buffered']
    #allocation6 [shape = 's32[1]{0}', space=sflag, size = 0x4, scoped, tag = 'scoped memory for tpu_custom_call.1']
    #allocation7 [shape = 'u8[32768]{0}', space=vmem, size = 0x8000, scoped, tag = 'input window, operand 2, single buffered']
    #allocation8 [shape = 'u8[32768]{0}', space=vmem, size = 0x8000, scoped, tag = 'input window, operand 3, single buffered']
    #allocation9 [shape = 's32[1]{0}', space=sflag, size = 0x4, scoped, tag = 'scoped memory for tpu_custom_call.1']
    #allocation10 [shape = 'u8[262144]{0}', space=vmem, size = 0x40000, scoped, tag = 'output window, operand 0']
    %12 = vsyncpa [#allocation3], 0
    %s13 = scalar_lea.sflag [#allocation3], 1
    %14 = vsyncpa %s13, 0
    %15 = vsyncpa [#allocation6], 0
    %16 = vsyncpa [#allocation9], 0
    %17 = vsyncpa [#allocation4], 0
    %s18 = scalar_lea.sflag [#allocation4], 1
    %19 = vsyncpa %s18, 0
    loop: start=0, step=1, limit=6
    $region2: #{tpu_custom_call.1} parent=1 // loop_pre_header
      _
    $region3: #{tpu_custom_call.1} parent=1 // loop_header
      %s21 = sphi 0, %s25
      %p22 = scmp.ge.s32.totalorder %s21, 6
      %s31 = sphi 0, %s33
      %s34 = sphi 0, %s31
      %s35 = sphi 0, %s34
      %s51 = sphi 0, %s35
      %s55 = sphi 0, %s55
      %s57 = sphi 0, %s55
      %s58 = sphi 0, %s57
      %s72 = sphi 0, %s58
      %s76 = sphi 0, %s76
      %s78 = sphi 0, %s76
      %s79 = sphi 0, %s78
      %s93 = sphi 0, %s79
      %s97 = sphi 0, %s97
      %s99 = sphi 0, %s97
      %s100 = sphi 0, %s99
      %s114 = sphi 0, %s100
      %s118 = sphi 0, %s118
      %s120 = sphi 0, %s118
      %s121 = sphi 0, %s120
      %s135 = sphi 0, %s121
      %s139 = sphi 0, %s139
      %s141 = sphi 0, %s139
      %s142 = sphi 0, %s141
      %s156 = sphi 0, %s142
      %s160 = sphi 0, %s160
      %s162 = sphi 0, %s160
      %s163 = sphi 0, %s162
      %s177 = sphi 0, %s163
      %s183 = sphi 0, %s185
      %s186 = sphi 0, %s183
      %s187 = sphi 0, %s186
      %s203 = sphi 0, %s187
    $region4: #{tpu_custom_call.1} parent=1 // loop_header_branch
      %24 = sbr.rel (%p22) target = $region8
    $region5: #{tpu_custom_call.1} parent=1 // loop_body
      %s26 = ssub.s32 %s21, 1
      %s27 = ssub.s32 %s21, 2
      %s28 = sadd.s32 %s21, 1
      %s29 = ssub.s32 %s21, %s28
      %p30 = scmp.eq.s32.totalorder %s29, 0
      %s32 = sadd.s32 %s31, 1
      %s33 = scalar_select %p30, %s31, %s32
      %p36 = pneg %p30
      %p37 = scmp.eq.s32.totalorder %s21, 3
      %p38 = por %p36, %p37
      %p39 = scmp.ne.s32.totalorder %s31, %s34
      %p40 = scmp.eq.s32.totalorder %s21, 0
      %p41 = por %p39, %p40
      %p42 = scmp.ne.s32.totalorder %s31, %s34
      %p43 = scmp.eq.s32.totalorder %s26, 3
      %p44 = por %p42, %p43
      %p45 = scmp.ne.s32.totalorder %s34, %s35
      %p46 = scmp.eq.s32.totalorder %s26, 0
      %p47 = por %p45, %p46
      %p48 = scmp.ne.s32.totalorder %s34, %s35
      %p49 = scmp.eq.s32.totalorder %s27, 3
      %p50 = por %p48, %p49
      %p52 = scmp.ne.s32.totalorder %s35, %s51
      %p53 = scmp.eq.s32.totalorder %s27, 0
      %p54 = por %p52, %p53
      %s56 = sadd.s32 %s55, 1
      %p59 = scmp.eq.s32.totalorder %s21, 3
      %p60 = scmp.ne.s32.totalorder %s55, %s57
      %p61 = scmp.eq.s32.totalorder %s21, 0
      %p62 = por %p60, %p61
      %p63 = scmp.ne.s32.totalorder %s55, %s57
      %p64 = scmp.eq.s32.totalorder %s26, 3
      %p65 = por %p63, %p64
      %p66 = scmp.ne.s32.totalorder %s57, %s58
      %p67 = scmp.eq.s32.totalorder %s26, 0
      %p68 = por %p66, %p67
      %p69 = scmp.ne.s32.totalorder %s57, %s58
      %p70 = scmp.eq.s32.totalorder %s27, 3
      %p71 = por %p69, %p70
      %p73 = scmp.ne.s32.totalorder %s58, %s72
      %p74 = scmp.eq.s32.totalorder %s27, 0
      %p75 = por %p73, %p74
      %s77 = sadd.s32 %s76, 1
      %p80 = scmp.eq.s32.totalorder %s21, 3
      %p81 = scmp.ne.s32.totalorder %s76, %s78
      %p82 = scmp.eq.s32.totalorder %s21, 0
      %p83 = por %p81, %p82
      %p84 = scmp.ne.s32.totalorder %s76, %s78
      %p85 = scmp.eq.s32.totalorder %s26, 3
      %p86 = por %p84, %p85
      %p87 = scmp.ne.s32.totalorder %s78, %s79
      %p88 = scmp.eq.s32.totalorder %s26, 0
      %p89 = por %p87, %p88
      %p90 = scmp.ne.s32.totalorder %s78, %s79
      %p91 = scmp.eq.s32.totalorder %s27, 3
      %p92 = por %p90, %p91
      %p94 = scmp.ne.s32.totalorder %s79, %s93
      %p95 = scmp.eq.s32.totalorder %s27, 0
      %p96 = por %p94, %p95
      %s98 = sadd.s32 %s97, 1
      %p101 = scmp.eq.s32.totalorder %s21, 3
      %p102 = scmp.ne.s32.totalorder %s97, %s99
      %p103 = scmp.eq.s32.totalorder %s21, 0
      %p104 = por %p102, %p103
      %p105 = scmp.ne.s32.totalorder %s97, %s99
      %p106 = scmp.eq.s32.totalorder %s26, 3
      %p107 = por %p105, %p106
      %p108 = scmp.ne.s32.totalorder %s99, %s100
      %p109 = scmp.eq.s32.totalorder %s26, 0
      %p110 = por %p108, %p109
      %p111 = scmp.ne.s32.totalorder %s99, %s100
      %p112 = scmp.eq.s32.totalorder %s27, 3
      %p113 = por %p111, %p112
      %p115 = scmp.ne.s32.totalorder %s100, %s114
      %p116 = scmp.eq.s32.totalorder %s27, 0
      %p117 = por %p115, %p116
      %s119 = sadd.s32 %s118, 1
      %p122 = scmp.eq.s32.totalorder %s21, 3
      %p123 = scmp.ne.s32.totalorder %s118, %s120
      %p124 = scmp.eq.s32.totalorder %s21, 0
      %p125 = por %p123, %p124
      %p126 = scmp.ne.s32.totalorder %s118, %s120
      %p127 = scmp.eq.s32.totalorder %s26, 3
      %p128 = por %p126, %p127
      %p129 = scmp.ne.s32.totalorder %s120, %s121
      %p130 = scmp.eq.s32.totalorder %s26, 0
      %p131 = por %p129, %p130
      %p132 = scmp.ne.s32.totalorder %s120, %s121
      %p133 = scmp.eq.s32.totalorder %s27, 3
      %p134 = por %p132, %p133
      %p136 = scmp.ne.s32.totalorder %s121, %s135
      %p137 = scmp.eq.s32.totalorder %s27, 0
      %p138 = por %p136, %p137
      %s140 = sadd.s32 %s139, 1
      %p143 = scmp.eq.s32.totalorder %s21, 3
      %p144 = scmp.ne.s32.totalorder %s139, %s141
      %p145 = scmp.eq.s32.totalorder %s21, 0
      %p146 = por %p144, %p145
      %p147 = scmp.ne.s32.totalorder %s139, %s141
      %p148 = scmp.eq.s32.totalorder %s26, 3
      %p149 = por %p147, %p148
      %p150 = scmp.ne.s32.totalorder %s141, %s142
      %p151 = scmp.eq.s32.totalorder %s26, 0
      %p152 = por %p150, %p151
      %p153 = scmp.ne.s32.totalorder %s141, %s142
      %p154 = scmp.eq.s32.totalorder %s27, 3
      %p155 = por %p153, %p154
      %p157 = scmp.ne.s32.totalorder %s142, %s156
      %p158 = scmp.eq.s32.totalorder %s27, 0
      %p159 = por %p157, %p158
      %s161 = sadd.s32 %s160, 1
      %p164 = scmp.eq.s32.totalorder %s21, 3
      %p165 = scmp.ne.s32.totalorder %s160, %s162
      %p166 = scmp.eq.s32.totalorder %s21, 0
      %p167 = por %p165, %p166
      %p168 = scmp.ne.s32.totalorder %s160, %s162
      %p169 = scmp.eq.s32.totalorder %s26, 3
      %p170 = por %p168, %p169
      %p171 = scmp.ne.s32.totalorder %s162, %s163
      %p172 = scmp.eq.s32.totalorder %s26, 0
      %p173 = por %p171, %p172
      %p174 = scmp.ne.s32.totalorder %s162, %s163
      %p175 = scmp.eq.s32.totalorder %s27, 3
      %p176 = por %p174, %p175
      %p178 = scmp.ne.s32.totalorder %s163, %s177
      %p179 = scmp.eq.s32.totalorder %s27, 0
      %p180 = por %p178, %p179
      %s181 = ssub.s32 %s21, %s28
      %p182 = scmp.eq.s32.totalorder %s181, 0
      %s184 = sadd.s32 %s183, 1
      %s185 = scalar_select %p182, %s183, %s184
      %p188 = pneg %p182
      %p189 = scmp.eq.s32.totalorder %s21, 3
      %p190 = por %p188, %p189
      %p191 = scmp.ne.s32.totalorder %s183, %s186
      %p192 = scmp.eq.s32.totalorder %s21, 0
      %p193 = por %p191, %p192
      %p194 = scmp.ne.s32.totalorder %s183, %s186
      %p195 = scmp.eq.s32.totalorder %s26, 3
      %p196 = por %p194, %p195
      %p197 = scmp.ne.s32.totalorder %s186, %s187
      %p198 = scmp.eq.s32.totalorder %s26, 0
      %p199 = por %p197, %p198
      %p200 = scmp.ne.s32.totalorder %s186, %s187
      %p201 = scmp.eq.s32.totalorder %s27, 3
      %p202 = por %p200, %p201
      %p204 = scmp.ne.s32.totalorder %s187, %s203
      %p205 = scmp.eq.s32.totalorder %s27, 0
      %p206 = por %p204, %p205
      %p207 = scmp.le.s32.totalorder 1, %s21
      %p208 = scmp.lt.s32.totalorder %s21, 5
      %p209 = pnand %p207, %p208
      %p210 = pneg %p209
      // Predicated region
      $region9: #{tpu_custom_call.1} parent=5 // pred_check
        _
      $region10: #{tpu_custom_call.1} parent=5 // pred_check_branch
        %212 = sbr.rel (%p209) target = $region12
      $region11: #{tpu_custom_call.1} parent=5 // pred_region
        %s213 = ssub.s32 %s21, 1
        // Predicated region
        $region13: #{tpu_custom_call.1} parent=11 // pred_check
          %p214 = pneg %p68
        $region14: #{tpu_custom_call.1} parent=11 // pred_check_branch
          %216 = sbr.rel (%p214) target = $region16
        $region15: #{tpu_custom_call.1} parent=11 // pred_region
          %s218 = ssub.s32 1024, 1024
          %219 = vsyncadd [#allocation6], %s218
          %s220 = sshll.u32 [#allocation5], 4
          %s221 = int_to_ptr.vmem [resolvable:$true] %s220
          %226 = dma.hbm_to_vmem [thread:$0]  %s1, 1024, %s221, [#allocation6], 64, 64, 4
        $region16: #{tpu_custom_call.1} parent=11 // pred_fallthru
          _
        // Predicated region
        $region17: #{tpu_custom_call.1} parent=11 // pred_check
          %p227 = pneg %p89
        $region18: #{tpu_custom_call.1} parent=11 // pred_check_branch
          %229 = sbr.rel (%p227) target = $region20
        $region19: #{tpu_custom_call.1} parent=11 // pred_region
          %s231 = ssub.s32 1024, 1024
          %232 = vsyncadd [#allocation6], %s231
          %s233 = sshll.u32 [#allocation7], 4
          %s234 = int_to_ptr.vmem [resolvable:$true] %s233
          %239 = dma.hbm_to_vmem [thread:$0]  %s2, 1024, %s234, [#allocation6], 64, 64, 4
        $region20: #{tpu_custom_call.1} parent=11 // pred_fallthru
          _
        // Predicated region
        $region21: #{tpu_custom_call.1} parent=11 // pred_check
          %p240 = pneg %p110
        $region22: #{tpu_custom_call.1} parent=11 // pred_check_branch
          %242 = sbr.rel (%p240) target = $region24
        $region23: #{tpu_custom_call.1} parent=11 // pred_region
          %s244 = ssub.s32 1024, 1024
          %245 = vsyncadd [#allocation9], %s244
          %s246 = sshll.u32 [#allocation8], 4
          %s247 = int_to_ptr.vmem [resolvable:$true] %s246
          %252 = dma.hbm_to_vmem [thread:$0]  %s3, 1024, %s247, [#allocation9], 64, 64, 4
        $region24: #{tpu_custom_call.1} parent=11 // pred_fallthru
          _
        // Predicated region
        $region25: #{tpu_custom_call.1} parent=11 // pred_check
          %p253 = pneg %p131
        $region26: #{tpu_custom_call.1} parent=11 // pred_check_branch
          %255 = sbr.rel (%p253) target = $region28
        $region27: #{tpu_custom_call.1} parent=11 // pred_region
          _
        $region28: #{tpu_custom_call.1} parent=11 // pred_fallthru
          _
        // Predicated region
        $region29: #{tpu_custom_call.1} parent=11 // pred_check
          %p256 = pneg %p152
        $region30: #{tpu_custom_call.1} parent=11 // pred_check_branch
          %258 = sbr.rel (%p256) target = $region32
        $region31: #{tpu_custom_call.1} parent=11 // pred_region
          _
        $region32: #{tpu_custom_call.1} parent=11 // pred_fallthru
          _
        // Predicated region
        $region33: #{tpu_custom_call.1} parent=11 // pred_check
          %p259 = pneg %p173
        $region34: #{tpu_custom_call.1} parent=11 // pred_check_branch
          %261 = sbr.rel (%p259) target = $region36
        $region35: #{tpu_custom_call.1} parent=11 // pred_region
          _
        $region36: #{tpu_custom_call.1} parent=11 // pred_fallthru
          _
      $region12: #{tpu_custom_call.1} parent=5 // pred_fallthru
        _
      %p262 = scmp.lt.s32.totalorder %s21, 4
      // Predicated region
      $region37: #{tpu_custom_call.1} parent=5 // pred_check
        %p263 = pneg %p262
      $region38: #{tpu_custom_call.1} parent=5 // pred_check_branch
        %265 = sbr.rel (%p263) target = $region40
      $region39: #{tpu_custom_call.1} parent=5 // pred_region
        // Predicated region
        $region41: #{tpu_custom_call.1} parent=39 // pred_check
          %p266 = pneg %p41
        $region42: #{tpu_custom_call.1} parent=39 // pred_check_branch
          %268 = sbr.rel (%p266) target = $region44
        $region43: #{tpu_custom_call.1} parent=39 // pred_region
          %s269 = sand.u32 %s31, 1
          %s270 = scalar_lea.sflag [#allocation3], %s269
          %s271 = sand.u32 %s31, 1
          %s272 = smul.addr %s271, 256
          %s273 = scalar_lea.vmem [#allocation2], %s272
          %s274 = smul.u32 32, %s21
          %s276 = ssub.s32 4096, 4096
          %277 = vsyncadd %s270, %s276
          %s278 = smul.addr %s274, 128
          %s279 = scalar_lea.hbm %s0, %s278
          %s280 = sshll.u32 %s273, 4
          %s281 = int_to_ptr.vmem [resolvable:$true] %s280
          %286 = dma.hbm_to_vmem [thread:$0]  %s279, 4096, %s281, %s270, 128, 128, 8
        $region44: #{tpu_custom_call.1} parent=39 // pred_fallthru
          _
      $region40: #{tpu_custom_call.1} parent=5 // pred_fallthru
        _
      %p287 = scmp.le.s32.totalorder 1, %s21
      %p288 = scmp.lt.s32.totalorder %s21, 5
      %p289 = pnand %p287, %p288
      %p290 = pneg %p289
      // Predicated region
      $region45: #{tpu_custom_call.1} parent=5 // pred_check
        _
      $region46: #{tpu_custom_call.1} parent=5 // pred_check_branch
        %292 = sbr.rel (%p289) target = $region48
      $region47: #{tpu_custom_call.1} parent=5 // pred_region
        %s293 = ssub.s32 %s21, 1
        %s294 = sand.u32 %s34, 1
        %s295 = scalar_lea.sflag [#allocation3], %s294
        %s296 = sand.u32 %s34, 1
        %s297 = smul.addr %s296, 256
        %s298 = scalar_lea.vmem [#allocation2], %s297
        // Predicated region
        $region49: #{tpu_custom_call.1} parent=47 // pred_check
          %p299 = pneg %p47
        $region50: #{tpu_custom_call.1} parent=47 // pred_check_branch
          %301 = sbr.rel (%p299) target = $region52
        $region51: #{tpu_custom_call.1} parent=47 // pred_region
          %302 = dma.done %s295, 4096
        $region52: #{tpu_custom_call.1} parent=47 // pred_fallthru
          _
        // Predicated region
        $region53: #{tpu_custom_call.1} parent=47 // pred_check
          %p303 = pneg %p68
        $region54: #{tpu_custom_call.1} parent=47 // pred_check_branch
          %305 = sbr.rel (%p303) target = $region56
        $region55: #{tpu_custom_call.1} parent=47 // pred_region
          %306 = dma.done [#allocation6], 1024
        $region56: #{tpu_custom_call.1} parent=47 // pred_fallthru
          _
        // Predicated region
        $region57: #{tpu_custom_call.1} parent=47 // pred_check
          %p307 = pneg %p89
        $region58: #{tpu_custom_call.1} parent=47 // pred_check_branch
          %309 = sbr.rel (%p307) target = $region60
        $region59: #{tpu_custom_call.1} parent=47 // pred_region
          %310 = dma.done [#allocation6], 1024
        $region60: #{tpu_custom_call.1} parent=47 // pred_fallthru
          _
        // Predicated region
        $region61: #{tpu_custom_call.1} parent=47 // pred_check
          %p311 = pneg %p110
        $region62: #{tpu_custom_call.1} parent=47 // pred_check_branch
          %313 = sbr.rel (%p311) target = $region64
        $region63: #{tpu_custom_call.1} parent=47 // pred_region
          %314 = dma.done [#allocation9], 1024
        $region64: #{tpu_custom_call.1} parent=47 // pred_fallthru
          _
        %s315 = sand.u32 %s34, 1
        %s316 = scalar_lea.sflag [#allocation3], %s315
        %s317 = sand.u32 %s34, 1
        %s318 = smul.addr %s317, 256
        %s319 = scalar_lea.vmem [#allocation2], %s318
        %p320 = pneg %p47
        %p321 = pneg %p44
        %p322 = pneg %p68
        %p323 = pneg %p65
        %p324 = pneg %p89
        %p325 = pneg %p86
        %p326 = pneg %p110
        %p327 = pneg %p107
        %p328 = pneg %p131
        %p329 = pneg %p128
        %p330 = pneg %p152
        %p331 = pneg %p149
        %p332 = pneg %p173
        %p333 = pneg %p170
        %p334 = pneg %p199
        %p335 = pneg %p196
        %s336 = sand.u32 %s186, 1
        %s337 = scalar_lea.sflag [#allocation4], %s336
        %s338 = sand.u32 %s186, 1
        %s339 = smul.addr %s338, 256
        %s340 = scalar_lea.vmem [#allocation10], %s339
        %s341 = smul.u32 32, %s26
        %s342 = smul.u32 32, %s26
        %v344 = vld [vmem:[%s298] sm:$0xff]
        %v345 = vld [vmem:[%s298 + $0x8] sm:$0xff]
        %v346 = vld [vmem:[%s298 + $0x10] sm:$0xff]
        %v347 = vld [vmem:[%s298 + $0x18] sm:$0xff]
        %v348 = vld [vmem:[%s298 + $0x20] sm:$0xff]
        %v349 = vld [vmem:[%s298 + $0x28] sm:$0xff]
        %v350 = vld [vmem:[%s298 + $0x30] sm:$0xff]
        %v351 = vld [vmem:[%s298 + $0x38] sm:$0xff]
        %v352 = vld [vmem:[%s298 + $0x40] sm:$0xff]
        %v353 = vld [vmem:[%s298 + $0x48] sm:$0xff]
        %v354 = vld [vmem:[%s298 + $0x50] sm:$0xff]
        %v355 = vld [vmem:[%s298 + $0x58] sm:$0xff]
        %v356 = vld [vmem:[%s298 + $0x60] sm:$0xff]
        %v357 = vld [vmem:[%s298 + $0x68] sm:$0xff]
        %v358 = vld [vmem:[%s298 + $0x70] sm:$0xff]
        %v359 = vld [vmem:[%s298 + $0x78] sm:$0xff]
        %v360 = vld [vmem:[%s298 + $0x80] sm:$0xff]
        %v361 = vld [vmem:[%s298 + $0x88] sm:$0xff]
        %v362 = vld [vmem:[%s298 + $0x90] sm:$0xff]
        %v363 = vld [vmem:[%s298 + $0x98] sm:$0xff]
        %v364 = vld [vmem:[%s298 + $0xa0] sm:$0xff]
        %v365 = vld [vmem:[%s298 + $0xa8] sm:$0xff]
        %v366 = vld [vmem:[%s298 + $0xb0] sm:$0xff]
        %v367 = vld [vmem:[%s298 + $0xb8] sm:$0xff]
        %v368 = vld [vmem:[%s298 + $0xc0] sm:$0xff]
        %v369 = vld [vmem:[%s298 + $0xc8] sm:$0xff]
        %v370 = vld [vmem:[%s298 + $0xd0] sm:$0xff]
        %v371 = vld [vmem:[%s298 + $0xd8] sm:$0xff]
        %v372 = vld [vmem:[%s298 + $0xe0] sm:$0xff]
        %v373 = vld [vmem:[%s298 + $0xe8] sm:$0xff]
        %v374 = vld [vmem:[%s298 + $0xf0] sm:$0xff]
        %v375 = vld [vmem:[%s298 + $0xf8] sm:$0xff]
        %v376 = vpack.c.bf16 %v345, %v344
        %v377 = vpack.c.bf16 %v347, %v346
        %v378 = vpack.c.bf16 %v349, %v348
        %v379 = vpack.c.bf16 %v351, %v350
        %v380 = vpack.c.bf16 %v353, %v352
        %v381 = vpack.c.bf16 %v355, %v354
        %v382 = vpack.c.bf16 %v357, %v356
        %v383 = vpack.c.bf16 %v359, %v358
        %v384 = vpack.c.bf16 %v361, %v360
        %v385 = vpack.c.bf16 %v363, %v362
        %v386 = vpack.c.bf16 %v365, %v364
        %v387 = vpack.c.bf16 %v367, %v366
        %v388 = vpack.c.bf16 %v369, %v368
        %v389 = vpack.c.bf16 %v371, %v370
        %v390 = vpack.c.bf16 %v373, %v372
        %v391 = vpack.c.bf16 %v375, %v374
        %v392 = vld [vmem:[#allocation5] sm:$0xf]
        %v393 = vld [vmem:[#allocation5 + $0x4] sm:$0xf]
        %v394 = vld [vmem:[#allocation5 + $0x8] sm:$0xf]
        %v395 = vld [vmem:[#allocation5 + $0xc] sm:$0xf]
        %v396 = vld [vmem:[#allocation5 + $0x10] sm:$0xf]
        %v397 = vld [vmem:[#allocation5 + $0x14] sm:$0xf]
        %v398 = vld [vmem:[#allocation5 + $0x18] sm:$0xf]
        %v399 = vld [vmem:[#allocation5 + $0x1c] sm:$0xf]
        %v400 = vld [vmem:[#allocation5 + $0x20] sm:$0xf]
        %v401 = vld [vmem:[#allocation5 + $0x24] sm:$0xf]
        %v402 = vld [vmem:[#allocation5 + $0x28] sm:$0xf]
        %v403 = vld [vmem:[#allocation5 + $0x2c] sm:$0xf]
        %v404 = vld [vmem:[#allocation5 + $0x30] sm:$0xf]
        %v405 = vld [vmem:[#allocation5 + $0x34] sm:$0xf]
        %v406 = vld [vmem:[#allocation5 + $0x38] sm:$0xf]
        %v407 = vld [vmem:[#allocation5 + $0x3c] sm:$0xf]
        %v408 = vld [vmem:[%s4] sm:$0x1]
        %v410 = vlaneseq
        %v411 = vshrl.u32 %v410, 7
        %v412 = vsub.s32 0, %v411
        %v413 = vrot.slane %v408, %v412
        %v431 = vunpack.c.l.b16 %v392
        %v432 = vunpack.c.l.b16 %v393
        %v433 = vunpack.c.l.b16 %v394
        %v434 = vunpack.c.l.b16 %v395
        %v435 = vunpack.c.l.b16 %v396
        %v436 = vunpack.c.l.b16 %v397
        %v437 = vunpack.c.l.b16 %v398
        %v438 = vunpack.c.l.b16 %v399
        %v439 = vunpack.c.l.b16 %v400
        %v440 = vunpack.c.l.b16 %v401
        %v441 = vunpack.c.l.b16 %v402
        %v442 = vunpack.c.l.b16 %v403
        %v443 = vunpack.c.l.b16 %v404
        %v444 = vunpack.c.l.b16 %v405
        %v445 = vunpack.c.l.b16 %v406
        %v446 = vunpack.c.l.b16 %v407
        %v447 = vpack.c.b16 %v432, %v431
        %v448 = vpack.c.b16 %v434, %v433
        %v449 = vpack.c.b16 %v436, %v435
        %v450 = vpack.c.b16 %v438, %v437
        %v451 = vpack.c.b16 %v440, %v439
        %v452 = vpack.c.b16 %v442, %v441
        %v453 = vpack.c.b16 %v444, %v443
        %v454 = vpack.c.b16 %v446, %v445
        %463 = vmatprep.subr.bf16.mxu0 0
        %464 = vmatpush1.bf16.msra.mxu0 %v454
        %465 = vmatprep.subr.bf16.mxu0 0
        %466 = vmatpush1.bf16.msra.mxu0 %v453
        %467 = vmatprep.subr.bf16.mxu0 0
        %468 = vmatpush1.bf16.msra.mxu0 %v452
        %469 = vmatprep.subr.bf16.mxu0 0
        %470 = vmatpush1.bf16.msra.mxu0 %v451
        %471 = vmatprep.subr.bf16.mxu0 0
        %472 = vmatpush1.bf16.msra.mxu0 %v450
        %473 = vmatprep.subr.bf16.mxu0 0
        %474 = vmatpush1.bf16.msra.mxu0 %v449
        %475 = vmatprep.subr.bf16.mxu0 0
        %476 = vmatpush1.bf16.msra.mxu0 %v448
        %477 = vmatprep.subr.bf16.mxu0 0
        %478 = vmatpush1.bf16.msra.mxu0 %v447
        %479 = vmatprep.subr.bf16.mxu0 0
        %480 = vmatpush2.bf16.msra.mxu0 0
        %481 = vmatprep.subr.bf16.mxu0 0
        %482 = vmatpush2.bf16.msra.mxu0 0
        %483 = vmatprep.subr.bf16.mxu0 0
        %484 = vmatpush2.bf16.msra.mxu0 0
        %485 = vmatprep.subr.bf16.mxu0 0
        %486 = vmatpush2.bf16.msra.mxu0 0
        %487 = vmatprep.subr.bf16.mxu0 0
        %488 = vmatpush2.bf16.msra.mxu0 0
        %489 = vmatprep.subr.bf16.mxu0 0
        %490 = vmatpush2.bf16.msra.mxu0 0
        %491 = vmatprep.subr.bf16.mxu0 0
        %492 = vmatpush2.bf16.msra.mxu0 0
        %493 = vmatprep.subr.bf16.mxu0 0
        %494 = vmatpush2.bf16.msra.mxu0 0
        %495 = vmatprep.mubr.bf16.mxu0 0
        %496 = vmatmul.mubr.bf16.gmra.mxu0 %v376
        %v497 = vpop.f32.mrf.mxu0
        %v498 = vadd.f32 %v413, %v497
        %v499 = vpop.f32.mrf.mxu0
        %v500 = vpop.f32.mrf.mxu0
        %v501 = vadd.f32 %v413, %v500
        %v502 = vpop.f32.mrf.mxu0
        %503 = vmatprep.mubr.bf16.mxu0 0
        %504 = vmatmul.mubr.bf16.gmra.mxu0 %v377
        %v505 = vpop.f32.mrf.mxu0
        %v506 = vadd.f32 %v413, %v505
        %v507 = vpop.f32.mrf.mxu0
        %v508 = vpop.f32.mrf.mxu0
        %v509 = vadd.f32 %v413, %v508
        %v510 = vpop.f32.mrf.mxu0
        %511 = vmatprep.mubr.bf16.mxu0 0
        %512 = vmatmul.mubr.bf16.gmra.mxu0 %v378
        %v513 = vpop.f32.mrf.mxu0
        %v514 = vadd.f32 %v413, %v513
        %v515 = vpop.f32.mrf.mxu0
        %v516 = vpop.f32.mrf.mxu0
        %v517 = vadd.f32 %v413, %v516
        %v518 = vpop.f32.mrf.mxu0
        %519 = vmatprep.mubr.bf16.mxu0 0
        %520 = vmatmul.mubr.bf16.gmra.mxu0 %v379
        %v521 = vpop.f32.mrf.mxu0
        %v522 = vadd.f32 %v413, %v521
        %v523 = vpop.f32.mrf.mxu0
        %v524 = vpop.f32.mrf.mxu0
        %v525 = vadd.f32 %v413, %v524
        %v526 = vpop.f32.mrf.mxu0
        %527 = vmatprep.mubr.bf16.mxu0 0
        %528 = vmatmul.mubr.bf16.gmra.mxu0 %v380
        %v529 = vpop.f32.mrf.mxu0
        %v530 = vadd.f32 %v413, %v529
        %v531 = vpop.f32.mrf.mxu0
        %v532 = vpop.f32.mrf.mxu0
        %v533 = vadd.f32 %v413, %v532
        %v534 = vpop.f32.mrf.mxu0
        %535 = vmatprep.mubr.bf16.mxu0 0
        %536 = vmatmul.mubr.bf16.gmra.mxu0 %v381
        %v537 = vpop.f32.mrf.mxu0
        %v538 = vadd.f32 %v413, %v537
        %v539 = vpop.f32.mrf.mxu0
        %v540 = vpop.f32.mrf.mxu0
        %v541 = vadd.f32 %v413, %v540
        %v542 = vpop.f32.mrf.mxu0
        %543 = vmatprep.mubr.bf16.mxu0 0
        %544 = vmatmul.mubr.bf16.gmra.mxu0 %v382
        %v545 = vpop.f32.mrf.mxu0
        %v546 = vadd.f32 %v413, %v545
        %v547 = vpop.f32.mrf.mxu0
        %v548 = vpop.f32.mrf.mxu0
        %v549 = vadd.f32 %v413, %v548
        %v550 = vpop.f32.mrf.mxu0
        %551 = vmatprep.mubr.bf16.mxu0 0
        %552 = vmatmul.mubr.bf16.gmra.mxu0 %v383
        %v553 = vpop.f32.mrf.mxu0
        %v554 = vadd.f32 %v413, %v553
        %v555 = vpop.f32.mrf.mxu0
        %v556 = vpop.f32.mrf.mxu0
        %v557 = vadd.f32 %v413, %v556
        %v558 = vpop.f32.mrf.mxu0
        %559 = vmatprep.mubr.bf16.mxu0 0
        %560 = vmatmul.mubr.bf16.gmra.mxu0 %v384
        %v561 = vpop.f32.mrf.mxu0
        %v562 = vadd.f32 %v413, %v561
        %v563 = vpop.f32.mrf.mxu0
        %v564 = vpop.f32.mrf.mxu0
        %v565 = vadd.f32 %v413, %v564
        %v566 = vpop.f32.mrf.mxu0
        %567 = vmatprep.mubr.bf16.mxu0 0
        %568 = vmatmul.mubr.bf16.gmra.mxu0 %v385
        %v569 = vpop.f32.mrf.mxu0
        %v570 = vadd.f32 %v413, %v569
        %v571 = vpop.f32.mrf.mxu0
        %v572 = vpop.f32.mrf.mxu0
        %v573 = vadd.f32 %v413, %v572
        %v574 = vpop.f32.mrf.mxu0
        %575 = vmatprep.mubr.bf16.mxu0 0
        %576 = vmatmul.mubr.bf16.gmra.mxu0 %v386
        %v577 = vpop.f32.mrf.mxu0
        %v578 = vadd.f32 %v413, %v577
        %v579 = vpop.f32.mrf.mxu0
        %v580 = vpop.f32.mrf.mxu0
        %v581 = vadd.f32 %v413, %v580
        %v582 = vpop.f32.mrf.mxu0
        %583 = vmatprep.mubr.bf16.mxu0 0
        %584 = vmatmul.mubr.bf16.gmra.mxu0 %v387
        %v585 = vpop.f32.mrf.mxu0
        %v586 = vadd.f32 %v413, %v585
        %v587 = vpop.f32.mrf.mxu0
        %v588 = vpop.f32.mrf.mxu0
        %v589 = vadd.f32 %v413, %v588
        %v590 = vpop.f32.mrf.mxu0
        %591 = vmatprep.mubr.bf16.mxu0 0
        %592 = vmatmul.mubr.bf16.gmra.mxu0 %v388
        %v593 = vpop.f32.mrf.mxu0
        %v594 = vadd.f32 %v413, %v593
        %v595 = vpop.f32.mrf.mxu0
        %v596 = vpop.f32.mrf.mxu0
        %v597 = vadd.f32 %v413, %v596
        %v598 = vpop.f32.mrf.mxu0
        %599 = vmatprep.mubr.bf16.mxu0 0
        %600 = vmatmul.mubr.bf16.gmra.mxu0 %v389
        %v601 = vpop.f32.mrf.mxu0
        %v602 = vadd.f32 %v413, %v601
        %v603 = vpop.f32.mrf.mxu0
        %v604 = vpop.f32.mrf.mxu0
        %v605 = vadd.f32 %v413, %v604
        %v606 = vpop.f32.mrf.mxu0
        %607 = vmatprep.mubr.bf16.mxu0 0
        %608 = vmatmul.mubr.bf16.gmra.mxu0 %v390
        %v609 = vpop.f32.mrf.mxu0
        %v610 = vadd.f32 %v413, %v609
        %v611 = vpop.f32.mrf.mxu0
        %v612 = vpop.f32.mrf.mxu0
        %v613 = vadd.f32 %v413, %v612
        %v614 = vpop.f32.mrf.mxu0
        %615 = vmatprep.mubr.bf16.mxu0 0
        %616 = vmatmul.mubr.bf16.gmra.mxu0 %v391
        %v617 = vpop.f32.mrf.mxu0
        %v618 = vadd.f32 %v413, %v617
        %v619 = vpop.f32.mrf.mxu0
        %v620 = vpop.f32.mrf.mxu0
        %v621 = vadd.f32 %v413, %v620
        %v622 = vpop.f32.mrf.mxu0
        %623 = vdwg.mxu0
        %v624 = vmul.f32 %v498, 0.0078125
        %v625 = vmul.f32 %v501, 0.0078125
        %v626 = vmul.f32 %v506, 0.0078125
        %v627 = vmul.f32 %v509, 0.0078125
        %v628 = vmul.f32 %v514, 0.0078125
        %v629 = vmul.f32 %v517, 0.0078125
        %v630 = vmul.f32 %v522, 0.0078125
        %v631 = vmul.f32 %v525, 0.0078125
        %v632 = vmul.f32 %v530, 0.0078125
        %v633 = vmul.f32 %v533, 0.0078125
        %v634 = vmul.f32 %v538, 0.0078125
        %v635 = vmul.f32 %v541, 0.0078125
        %v636 = vmul.f32 %v546, 0.0078125
        %v637 = vmul.f32 %v549, 0.0078125
        %v638 = vmul.f32 %v554, 0.0078125
        %v639 = vmul.f32 %v557, 0.0078125
        %v640 = vmul.f32 %v562, 0.0078125
        %v641 = vmul.f32 %v565, 0.0078125
        %v642 = vmul.f32 %v570, 0.0078125
        %v643 = vmul.f32 %v573, 0.0078125
        %v644 = vmul.f32 %v578, 0.0078125
        %v645 = vmul.f32 %v581, 0.0078125
        %v646 = vmul.f32 %v586, 0.0078125
        %v647 = vmul.f32 %v589, 0.0078125
        %v648 = vmul.f32 %v594, 0.0078125
        %v649 = vmul.f32 %v597, 0.0078125
        %v650 = vmul.f32 %v602, 0.0078125
        %v651 = vmul.f32 %v605, 0.0078125
        %v652 = vmul.f32 %v610, 0.0078125
        %v653 = vmul.f32 %v613, 0.0078125
        %v654 = vmul.f32 %v618, 0.0078125
        %v655 = vmul.f32 %v621, 0.0078125
        %v656 = vld [vmem:[#allocation7] sm:$0xf]
        %v657 = vld [vmem:[#allocation7 + $0x4] sm:$0xf]
        %v658 = vld [vmem:[#allocation7 + $0x8] sm:$0xf]
        %v659 = vld [vmem:[#allocation7 + $0xc] sm:$0xf]
        %v660 = vld [vmem:[#allocation7 + $0x10] sm:$0xf]
        %v661 = vld [vmem:[#allocation7 + $0x14] sm:$0xf]
        %v662 = vld [vmem:[#allocation7 + $0x18] sm:$0xf]
        %v663 = vld [vmem:[#allocation7 + $0x1c] sm:$0xf]
        %v664 = vld [vmem:[#allocation7 + $0x20] sm:$0xf]
        %v665 = vld [vmem:[#allocation7 + $0x24] sm:$0xf]
        %v666 = vld [vmem:[#allocation7 + $0x28] sm:$0xf]
        %v667 = vld [vmem:[#allocation7 + $0x2c] sm:$0xf]
        %v668 = vld [vmem:[#allocation7 + $0x30] sm:$0xf]
        %v669 = vld [vmem:[#allocation7 + $0x34] sm:$0xf]
        %v670 = vld [vmem:[#allocation7 + $0x38] sm:$0xf]
        %v671 = vld [vmem:[#allocation7 + $0x3c] sm:$0xf]
        %v672 = vld [vmem:[%s5] sm:$0x1]
        %v674 = vlaneseq
        %v675 = vshrl.u32 %v674, 7
        %v676 = vsub.s32 0, %v675
        %v677 = vrot.slane %v672, %v676
        %v695 = vunpack.c.l.b16 %v656
        %v696 = vunpack.c.l.b16 %v657
        %v697 = vunpack.c.l.b16 %v658
        %v698 = vunpack.c.l.b16 %v659
        %v699 = vunpack.c.l.b16 %v660
        %v700 = vunpack.c.l.b16 %v661
        %v701 = vunpack.c.l.b16 %v662
        %v702 = vunpack.c.l.b16 %v663
        %v703 = vunpack.c.l.b16 %v664
        %v704 = vunpack.c.l.b16 %v665
        %v705 = vunpack.c.l.b16 %v666
        %v706 = vunpack.c.l.b16 %v667
        %v707 = vunpack.c.l.b16 %v668
        %v708 = vunpack.c.l.b16 %v669
        %v709 = vunpack.c.l.b16 %v670
        %v710 = vunpack.c.l.b16 %v671
        %v711 = vpack.c.b16 %v696, %v695
        %v712 = vpack.c.b16 %v698, %v697
        %v713 = vpack.c.b16 %v700, %v699
        %v714 = vpack.c.b16 %v702, %v701
        %v715 = vpack.c.b16 %v704, %v703
        %v716 = vpack.c.b16 %v706, %v705
        %v717 = vpack.c.b16 %v708, %v707
        %v718 = vpack.c.b16 %v710, %v709
        %727 = vmatprep.subr.bf16.mxu0 0
        %728 = vmatpush1.bf16.msra.mxu0 %v718
        %729 = vmatprep.subr.bf16.mxu0 0
        %730 = vmatpush1.bf16.msra.mxu0 %v717
        %731 = vmatprep.subr.bf16.mxu0 0
        %732 = vmatpush1.bf16.msra.mxu0 %v716
        %733 = vmatprep.subr.bf16.mxu0 0
        %734 = vmatpush1.bf16.msra.mxu0 %v715
        %735 = vmatprep.subr.bf16.mxu0 0
        %736 = vmatpush1.bf16.msra.mxu0 %v714
        %737 = vmatprep.subr.bf16.mxu0 0
        %738 = vmatpush1.bf16.msra.mxu0 %v713
        %739 = vmatprep.subr.bf16.mxu0 0
        %740 = vmatpush1.bf16.msra.mxu0 %v712
        %741 = vmatprep.subr.bf16.mxu0 0
        %742 = vmatpush1.bf16.msra.mxu0 %v711
        %743 = vmatprep.subr.bf16.mxu0 0
        %744 = vmatpush2.bf16.msra.mxu0 0
        %745 = vmatprep.subr.bf16.mxu0 0
        %746 = vmatpush2.bf16.msra.mxu0 0
        %747 = vmatprep.subr.bf16.mxu0 0
        %748 = vmatpush2.bf16.msra.mxu0 0
        %749 = vmatprep.subr.bf16.mxu0 0
        %750 = vmatpush2.bf16.msra.mxu0 0
        %751 = vmatprep.subr.bf16.mxu0 0
        %752 = vmatpush2.bf16.msra.mxu0 0
        %753 = vmatprep.subr.bf16.mxu0 0
        %754 = vmatpush2.bf16.msra.mxu0 0
        %755 = vmatprep.subr.bf16.mxu0 0
        %756 = vmatpush2.bf16.msra.mxu0 0
        %757 = vmatprep.subr.bf16.mxu0 0
        %758 = vmatpush2.bf16.msra.mxu0 0
        %759 = vmatprep.mubr.bf16.mxu0 0
        %760 = vmatmul.mubr.bf16.gmra.mxu0 %v376
        %v761 = vpop.f32.mrf.mxu0
        %v762 = vadd.f32 %v677, %v761
        %v763 = vpop.f32.mrf.mxu0
        %v764 = vpop.f32.mrf.mxu0
        %v765 = vadd.f32 %v677, %v764
        %v766 = vpop.f32.mrf.mxu0
        %767 = vmatprep.mubr.bf16.mxu0 0
        %768 = vmatmul.mubr.bf16.gmra.mxu0 %v377
        %v769 = vpop.f32.mrf.mxu0
        %v770 = vadd.f32 %v677, %v769
        %v771 = vpop.f32.mrf.mxu0
        %v772 = vpop.f32.mrf.mxu0
        %v773 = vadd.f32 %v677, %v772
        %v774 = vpop.f32.mrf.mxu0
        %775 = vmatprep.mubr.bf16.mxu0 0
        %776 = vmatmul.mubr.bf16.gmra.mxu0 %v378
        %v777 = vpop.f32.mrf.mxu0
        %v778 = vadd.f32 %v677, %v777
        %v779 = vpop.f32.mrf.mxu0
        %v780 = vpop.f32.mrf.mxu0
        %v781 = vadd.f32 %v677, %v780
        %v782 = vpop.f32.mrf.mxu0
        %783 = vmatprep.mubr.bf16.mxu0 0
        %784 = vmatmul.mubr.bf16.gmra.mxu0 %v379
        %v785 = vpop.f32.mrf.mxu0
        %v786 = vadd.f32 %v677, %v785
        %v787 = vpop.f32.mrf.mxu0
        %v788 = vpop.f32.mrf.mxu0
        %v789 = vadd.f32 %v677, %v788
        %v790 = vpop.f32.mrf.mxu0
        %791 = vmatprep.mubr.bf16.mxu0 0
        %792 = vmatmul.mubr.bf16.gmra.mxu0 %v380
        %v793 = vpop.f32.mrf.mxu0
        %v794 = vadd.f32 %v677, %v793
        %v795 = vpop.f32.mrf.mxu0
        %v796 = vpop.f32.mrf.mxu0
        %v797 = vadd.f32 %v677, %v796
        %v798 = vpop.f32.mrf.mxu0
        %799 = vmatprep.mubr.bf16.mxu0 0
        %800 = vmatmul.mubr.bf16.gmra.mxu0 %v381
        %v801 = vpop.f32.mrf.mxu0
        %v802 = vadd.f32 %v677, %v801
        %v803 = vpop.f32.mrf.mxu0
        %v804 = vpop.f32.mrf.mxu0
        %v805 = vadd.f32 %v677, %v804
        %v806 = vpop.f32.mrf.mxu0
        %807 = vmatprep.mubr.bf16.mxu0 0
        %808 = vmatmul.mubr.bf16.gmra.mxu0 %v382
        %v809 = vpop.f32.mrf.mxu0
        %v810 = vadd.f32 %v677, %v809
        %v811 = vpop.f32.mrf.mxu0
        %v812 = vpop.f32.mrf.mxu0
        %v813 = vadd.f32 %v677, %v812
        %v814 = vpop.f32.mrf.mxu0
        %815 = vmatprep.mubr.bf16.mxu0 0
        %816 = vmatmul.mubr.bf16.gmra.mxu0 %v383
        %v817 = vpop.f32.mrf.mxu0
        %v818 = vadd.f32 %v677, %v817
        %v819 = vpop.f32.mrf.mxu0
        %v820 = vpop.f32.mrf.mxu0
        %v821 = vadd.f32 %v677, %v820
        %v822 = vpop.f32.mrf.mxu0
        %823 = vmatprep.mubr.bf16.mxu0 0
        %824 = vmatmul.mubr.bf16.gmra.mxu0 %v384
        %v825 = vpop.f32.mrf.mxu0
        %v826 = vadd.f32 %v677, %v825
        %v827 = vpop.f32.mrf.mxu0
        %v828 = vpop.f32.mrf.mxu0
        %v829 = vadd.f32 %v677, %v828
        %v830 = vpop.f32.mrf.mxu0
        %831 = vmatprep.mubr.bf16.mxu0 0
        %832 = vmatmul.mubr.bf16.gmra.mxu0 %v385
        %v833 = vpop.f32.mrf.mxu0
        %v834 = vadd.f32 %v677, %v833
        %v835 = vpop.f32.mrf.mxu0
        %v836 = vpop.f32.mrf.mxu0
        %v837 = vadd.f32 %v677, %v836
        %v838 = vpop.f32.mrf.mxu0
        %839 = vmatprep.mubr.bf16.mxu0 0
        %840 = vmatmul.mubr.bf16.gmra.mxu0 %v386
        %v841 = vpop.f32.mrf.mxu0
        %v842 = vadd.f32 %v677, %v841
        %v843 = vpop.f32.mrf.mxu0
        %v844 = vpop.f32.mrf.mxu0
        %v845 = vadd.f32 %v677, %v844
        %v846 = vpop.f32.mrf.mxu0
        %847 = vmatprep.mubr.bf16.mxu0 0
        %848 = vmatmul.mubr.bf16.gmra.mxu0 %v387
        %v849 = vpop.f32.mrf.mxu0
        %v850 = vadd.f32 %v677, %v849
        %v851 = vpop.f32.mrf.mxu0
        %v852 = vpop.f32.mrf.mxu0
        %v853 = vadd.f32 %v677, %v852
        %v854 = vpop.f32.mrf.mxu0
        %855 = vmatprep.mubr.bf16.mxu0 0
        %856 = vmatmul.mubr.bf16.gmra.mxu0 %v388
        %v857 = vpop.f32.mrf.mxu0
        %v858 = vadd.f32 %v677, %v857
        %v859 = vpop.f32.mrf.mxu0
        %v860 = vpop.f32.mrf.mxu0
        %v861 = vadd.f32 %v677, %v860
        %v862 = vpop.f32.mrf.mxu0
        %863 = vmatprep.mubr.bf16.mxu0 0
        %864 = vmatmul.mubr.bf16.gmra.mxu0 %v389
        %v865 = vpop.f32.mrf.mxu0
        %v866 = vadd.f32 %v677, %v865
        %v867 = vpop.f32.mrf.mxu0
        %v868 = vpop.f32.mrf.mxu0
        %v869 = vadd.f32 %v677, %v868
        %v870 = vpop.f32.mrf.mxu0
        %871 = vmatprep.mubr.bf16.mxu0 0
        %872 = vmatmul.mubr.bf16.gmra.mxu0 %v390
        %v873 = vpop.f32.mrf.mxu0
        %v874 = vadd.f32 %v677, %v873
        %v875 = vpop.f32.mrf.mxu0
        %v876 = vpop.f32.mrf.mxu0
        %v877 = vadd.f32 %v677, %v876
        %v878 = vpop.f32.mrf.mxu0
        %879 = vmatprep.mubr.bf16.mxu0 0
        %880 = vmatmul.mubr.bf16.gmra.mxu0 %v391
        %v881 = vpop.f32.mrf.mxu0
        %v882 = vadd.f32 %v677, %v881
        %v883 = vpop.f32.mrf.mxu0
        %v884 = vpop.f32.mrf.mxu0
        %v885 = vadd.f32 %v677, %v884
        %v886 = vpop.f32.mrf.mxu0
        %887 = vdwg.mxu0
        %v888 = vld [vmem:[#allocation8] sm:$0xf]
        %v889 = vld [vmem:[#allocation8 + $0x4] sm:$0xf]
        %v890 = vld [vmem:[#allocation8 + $0x8] sm:$0xf]
        %v891 = vld [vmem:[#allocation8 + $0xc] sm:$0xf]
        %v892 = vld [vmem:[#allocation8 + $0x10] sm:$0xf]
        %v893 = vld [vmem:[#allocation8 + $0x14] sm:$0xf]
        %v894 = vld [vmem:[#allocation8 + $0x18] sm:$0xf]
        %v895 = vld [vmem:[#allocation8 + $0x1c] sm:$0xf]
        %v896 = vld [vmem:[#allocation8 + $0x20] sm:$0xf]
        %v897 = vld [vmem:[#allocation8 + $0x24] sm:$0xf]
        %v898 = vld [vmem:[#allocation8 + $0x28] sm:$0xf]
        %v899 = vld [vmem:[#allocation8 + $0x2c] sm:$0xf]
        %v900 = vld [vmem:[#allocation8 + $0x30] sm:$0xf]
        %v901 = vld [vmem:[#allocation8 + $0x34] sm:$0xf]
        %v902 = vld [vmem:[#allocation8 + $0x38] sm:$0xf]
        %v903 = vld [vmem:[#allocation8 + $0x3c] sm:$0xf]
        %v904 = vld [vmem:[%s6] sm:$0x1]
        %v906 = vlaneseq
        %v907 = vshrl.u32 %v906, 7
        %v908 = vsub.s32 0, %v907
        %v909 = vrot.slane %v904, %v908
        %v927 = vunpack.c.l.b16 %v888
        %v928 = vunpack.c.l.b16 %v889
        %v929 = vunpack.c.l.b16 %v890
        %v930 = vunpack.c.l.b16 %v891
        %v931 = vunpack.c.l.b16 %v892
        %v932 = vunpack.c.l.b16 %v893
        %v933 = vunpack.c.l.b16 %v894
        %v934 = vunpack.c.l.b16 %v895
        %v935 = vunpack.c.l.b16 %v896
        %v936 = vunpack.c.l.b16 %v897
        %v937 = vunpack.c.l.b16 %v898
        %v938 = vunpack.c.l.b16 %v899
        %v939 = vunpack.c.l.b16 %v900
        %v940 = vunpack.c.l.b16 %v901
        %v941 = vunpack.c.l.b16 %v902
        %v942 = vunpack.c.l.b16 %v903
        %v943 = vpack.c.b16 %v928, %v927
        %v944 = vpack.c.b16 %v930, %v929
        %v945 = vpack.c.b16 %v932, %v931
        %v946 = vpack.c.b16 %v934, %v933
        %v947 = vpack.c.b16 %v936, %v935
        %v948 = vpack.c.b16 %v938, %v937
        %v949 = vpack.c.b16 %v940, %v939
        %v950 = vpack.c.b16 %v942, %v941
        %959 = vmatprep.subr.bf16.mxu0 0
        %960 = vmatpush1.bf16.msra.mxu0 %v950
        %961 = vmatprep.subr.bf16.mxu0 0
        %962 = vmatpush1.bf16.msra.mxu0 %v949
        %963 = vmatprep.subr.bf16.mxu0 0
        %964 = vmatpush1.bf16.msra.mxu0 %v948
        %965 = vmatprep.subr.bf16.mxu0 0
        %966 = vmatpush1.bf16.msra.mxu0 %v947
        %967 = vmatprep.subr.bf16.mxu0 0
        %968 = vmatpush1.bf16.msra.mxu0 %v946
        %969 = vmatprep.subr.bf16.mxu0 0
        %970 = vmatpush1.bf16.msra.mxu0 %v945
        %971 = vmatprep.subr.bf16.mxu0 0
        %972 = vmatpush1.bf16.msra.mxu0 %v944
        %973 = vmatprep.subr.bf16.mxu0 0
        %974 = vmatpush1.bf16.msra.mxu0 %v943
        %975 = vmatprep.subr.bf16.mxu0 0
        %976 = vmatpush2.bf16.msra.mxu0 0
        %977 = vmatprep.subr.bf16.mxu0 0
        %978 = vmatpush2.bf16.msra.mxu0 0
        %979 = vmatprep.subr.bf16.mxu0 0
        %980 = vmatpush2.bf16.msra.mxu0 0
        %981 = vmatprep.subr.bf16.mxu0 0
        %982 = vmatpush2.bf16.msra.mxu0 0
        %983 = vmatprep.subr.bf16.mxu0 0
        %984 = vmatpush2.bf16.msra.mxu0 0
        %985 = vmatprep.subr.bf16.mxu0 0
        %986 = vmatpush2.bf16.msra.mxu0 0
        %987 = vmatprep.subr.bf16.mxu0 0
        %988 = vmatpush2.bf16.msra.mxu0 0
        %989 = vmatprep.subr.bf16.mxu0 0
        %990 = vmatpush2.bf16.msra.mxu0 0
        %991 = vmatprep.mubr.bf16.mxu0 0
        %992 = vmatmul.mubr.bf16.gmra.mxu0 %v376
        %v993 = vpop.f32.mrf.mxu0
        %v994 = vadd.f32 %v909, %v993
        %v995 = vpop.f32.mrf.mxu0
        %v996 = vpop.f32.mrf.mxu0
        %v997 = vadd.f32 %v909, %v996
        %v998 = vpop.f32.mrf.mxu0
        %999 = vmatprep.mubr.bf16.mxu0 0
        %1000 = vmatmul.mubr.bf16.gmra.mxu0 %v377
        %v1001 = vpop.f32.mrf.mxu0
        %v1002 = vadd.f32 %v909, %v1001
        %v1003 = vpop.f32.mrf.mxu0
        %v1004 = vpop.f32.mrf.mxu0
        %v1005 = vadd.f32 %v909, %v1004
        %v1006 = vpop.f32.mrf.mxu0
        %1007 = vmatprep.mubr.bf16.mxu0 0
        %1008 = vmatmul.mubr.bf16.gmra.mxu0 %v378
        %v1009 = vpop.f32.mrf.mxu0
        %v1010 = vadd.f32 %v909, %v1009
        %v1011 = vpop.f32.mrf.mxu0
        %v1012 = vpop.f32.mrf.mxu0
        %v1013 = vadd.f32 %v909, %v1012
        %v1014 = vpop.f32.mrf.mxu0
        %1015 = vmatprep.mubr.bf16.mxu0 0
        %1016 = vmatmul.mubr.bf16.gmra.mxu0 %v379
        %v1017 = vpop.f32.mrf.mxu0
        %v1018 = vadd.f32 %v909, %v1017
        %v1019 = vpop.f32.mrf.mxu0
        %v1020 = vpop.f32.mrf.mxu0
        %v1021 = vadd.f32 %v909, %v1020
        %v1022 = vpop.f32.mrf.mxu0
        %1023 = vmatprep.mubr.bf16.mxu0 0
        %1024 = vmatmul.mubr.bf16.gmra.mxu0 %v380
        %v1025 = vpop.f32.mrf.mxu0
        %v1026 = vadd.f32 %v909, %v1025
        %v1027 = vpop.f32.mrf.mxu0
        %v1028 = vpop.f32.mrf.mxu0
        %v1029 = vadd.f32 %v909, %v1028
        %v1030 = vpop.f32.mrf.mxu0
        %1031 = vmatprep.mubr.bf16.mxu0 0
        %1032 = vmatmul.mubr.bf16.gmra.mxu0 %v381
        %v1033 = vpop.f32.mrf.mxu0
        %v1034 = vadd.f32 %v909, %v1033
        %v1035 = vpop.f32.mrf.mxu0
        %v1036 = vpop.f32.mrf.mxu0
        %v1037 = vadd.f32 %v909, %v1036
        %v1038 = vpop.f32.mrf.mxu0
        %1039 = vmatprep.mubr.bf16.mxu0 0
        %1040 = vmatmul.mubr.bf16.gmra.mxu0 %v382
        %v1041 = vpop.f32.mrf.mxu0
        %v1042 = vadd.f32 %v909, %v1041
        %v1043 = vpop.f32.mrf.mxu0
        %v1044 = vpop.f32.mrf.mxu0
        %v1045 = vadd.f32 %v909, %v1044
        %v1046 = vpop.f32.mrf.mxu0
        %1047 = vmatprep.mubr.bf16.mxu0 0
        %1048 = vmatmul.mubr.bf16.gmra.mxu0 %v383
        %v1049 = vpop.f32.mrf.mxu0
        %v1050 = vadd.f32 %v909, %v1049
        %v1051 = vpop.f32.mrf.mxu0
        %v1052 = vpop.f32.mrf.mxu0
        %v1053 = vadd.f32 %v909, %v1052
        %v1054 = vpop.f32.mrf.mxu0
        %1055 = vmatprep.mubr.bf16.mxu0 0
        %1056 = vmatmul.mubr.bf16.gmra.mxu0 %v384
        %v1057 = vpop.f32.mrf.mxu0
        %v1058 = vadd.f32 %v909, %v1057
        %v1059 = vpop.f32.mrf.mxu0
        %v1060 = vpop.f32.mrf.mxu0
        %v1061 = vadd.f32 %v909, %v1060
        %v1062 = vpop.f32.mrf.mxu0
        %1063 = vmatprep.mubr.bf16.mxu0 0
        %1064 = vmatmul.mubr.bf16.gmra.mxu0 %v385
        %v1065 = vpop.f32.mrf.mxu0
        %v1066 = vadd.f32 %v909, %v1065
        %v1067 = vpop.f32.mrf.mxu0
        %v1068 = vpop.f32.mrf.mxu0
        %v1069 = vadd.f32 %v909, %v1068
        %v1070 = vpop.f32.mrf.mxu0
        %1071 = vmatprep.mubr.bf16.mxu0 0
        %1072 = vmatmul.mubr.bf16.gmra.mxu0 %v386
        %v1073 = vpop.f32.mrf.mxu0
        %v1074 = vadd.f32 %v909, %v1073
        %v1075 = vpop.f32.mrf.mxu0
        %v1076 = vpop.f32.mrf.mxu0
        %v1077 = vadd.f32 %v909, %v1076
        %v1078 = vpop.f32.mrf.mxu0
        %1079 = vmatprep.mubr.bf16.mxu0 0
        %1080 = vmatmul.mubr.bf16.gmra.mxu0 %v387
        %v1081 = vpop.f32.mrf.mxu0
        %v1082 = vadd.f32 %v909, %v1081
        %v1083 = vpop.f32.mrf.mxu0
        %v1084 = vpop.f32.mrf.mxu0
        %v1085 = vadd.f32 %v909, %v1084
        %v1086 = vpop.f32.mrf.mxu0
        %1087 = vmatprep.mubr.bf16.mxu0 0
        %1088 = vmatmul.mubr.bf16.gmra.mxu0 %v388
        %v1089 = vpop.f32.mrf.mxu0
        %v1090 = vadd.f32 %v909, %v1089
        %v1091 = vpop.f32.mrf.mxu0
        %v1092 = vpop.f32.mrf.mxu0
        %v1093 = vadd.f32 %v909, %v1092
        %v1094 = vpop.f32.mrf.mxu0
        %1095 = vmatprep.mubr.bf16.mxu0 0
        %1096 = vmatmul.mubr.bf16.gmra.mxu0 %v389
        %v1097 = vpop.f32.mrf.mxu0
        %v1098 = vadd.f32 %v909, %v1097
        %v1099 = vpop.f32.mrf.mxu0
        %v1100 = vpop.f32.mrf.mxu0
        %v1101 = vadd.f32 %v909, %v1100
        %v1102 = vpop.f32.mrf.mxu0
        %1103 = vmatprep.mubr.bf16.mxu0 0
        %1104 = vmatmul.mubr.bf16.gmra.mxu0 %v390
        %v1105 = vpop.f32.mrf.mxu0
        %v1106 = vadd.f32 %v909, %v1105
        %v1107 = vpop.f32.mrf.mxu0
        %v1108 = vpop.f32.mrf.mxu0
        %v1109 = vadd.f32 %v909, %v1108
        %v1110 = vpop.f32.mrf.mxu0
        %1111 = vmatprep.mubr.bf16.mxu0 0
        %1112 = vmatmul.mubr.bf16.gmra.mxu0 %v391
        %v1113 = vpop.f32.mrf.mxu0
        %v1114 = vadd.f32 %v909, %v1113
        %v1115 = vpop.f32.mrf.mxu0
        %v1116 = vpop.f32.mrf.mxu0
        %v1117 = vadd.f32 %v909, %v1116
        %v1118 = vpop.f32.mrf.mxu0
        %1119 = vdwg.mxu0
        %v1120 = vpack.c.bf16 %v625, %v624
        %v1121 = vpack.c.bf16 %v627, %v626
        %v1122 = vpack.c.bf16 %v629, %v628
        %v1123 = vpack.c.bf16 %v631, %v630
        %v1124 = vpack.c.bf16 %v633, %v632
        %v1125 = vpack.c.bf16 %v635, %v634
        %v1126 = vpack.c.bf16 %v637, %v636
        %v1127 = vpack.c.bf16 %v639, %v638
        %v1128 = vpack.c.bf16 %v641, %v640
        %v1129 = vpack.c.bf16 %v643, %v642
        %v1130 = vpack.c.bf16 %v645, %v644
        %v1131 = vpack.c.bf16 %v647, %v646
        %v1132 = vpack.c.bf16 %v649, %v648
        %v1133 = vpack.c.bf16 %v651, %v650
        %v1134 = vpack.c.bf16 %v653, %v652
        %v1135 = vpack.c.bf16 %v655, %v654
        %v1136 = vpack.c.bf16 %v765, %v762
        %v1137 = vpack.c.bf16 %v773, %v770
        %v1138 = vpack.c.bf16 %v781, %v778
        %v1139 = vpack.c.bf16 %v789, %v786
        %v1140 = vpack.c.bf16 %v797, %v794
        %v1141 = vpack.c.bf16 %v805, %v802
        %v1142 = vpack.c.bf16 %v813, %v810
        %v1143 = vpack.c.bf16 %v821, %v818
        %v1144 = vpack.c.bf16 %v829, %v826
        %v1145 = vpack.c.bf16 %v837, %v834
        %v1146 = vpack.c.bf16 %v845, %v842
        %v1147 = vpack.c.bf16 %v853, %v850
        %v1148 = vpack.c.bf16 %v861, %v858
        %v1149 = vpack.c.bf16 %v869, %v866
        %v1150 = vpack.c.bf16 %v877, %v874
        %v1151 = vpack.c.bf16 %v885, %v882
        %v1152 = vpack.c.bf16 %v997, %v994
        %v1153 = vpack.c.bf16 %v1005, %v1002
        %v1154 = vpack.c.bf16 %v1013, %v1010
        %v1155 = vpack.c.bf16 %v1021, %v1018
        %v1156 = vpack.c.bf16 %v1029, %v1026
        %v1157 = vpack.c.bf16 %v1037, %v1034
        %v1158 = vpack.c.bf16 %v1045, %v1042
        %v1159 = vpack.c.bf16 %v1053, %v1050
        %v1160 = vpack.c.bf16 %v1061, %v1058
        %v1161 = vpack.c.bf16 %v1069, %v1066
        %v1162 = vpack.c.bf16 %v1077, %v1074
        %v1163 = vpack.c.bf16 %v1085, %v1082
        %v1164 = vpack.c.bf16 %v1093, %v1090
        %v1165 = vpack.c.bf16 %v1101, %v1098
        %v1166 = vpack.c.bf16 %v1109, %v1106
        %v1167 = vpack.c.bf16 %v1117, %v1114
        %1168 = vmatprep.subr.bf16.mxu0 0
        %1169 = vmatpush1.bf16.xpose.msra.mxu0 %v1143
        %1170 = vmatprep.subr.bf16.mxu0 0
        %1171 = vmatpush1.bf16.xpose.msra.mxu0 %v1142
        %1172 = vmatprep.subr.bf16.mxu0 0
        %1173 = vmatpush1.bf16.xpose.msra.mxu0 %v1141
        %1174 = vmatprep.subr.bf16.mxu0 0
        %1175 = vmatpush1.bf16.xpose.msra.mxu0 %v1140
        %1176 = vmatprep.subr.bf16.mxu0 0
        %1177 = vmatpush1.bf16.xpose.msra.mxu0 %v1139
        %1178 = vmatprep.subr.bf16.mxu0 0
        %1179 = vmatpush1.bf16.xpose.msra.mxu0 %v1138
        %1180 = vmatprep.subr.bf16.mxu0 0
        %1181 = vmatpush1.bf16.xpose.msra.mxu0 %v1137
        %1182 = vmatprep.subr.bf16.mxu0 0
        %1183 = vmatpush1.bf16.xpose.msra.mxu0 %v1136
        %1184 = vmatprep.subr.bf16.mxu0 0
        %1185 = vmatpush2.bf16.xpose.msra.mxu0 0
        %1186 = vmatprep.subr.bf16.mxu0 0
        %1187 = vmatpush2.bf16.xpose.msra.mxu0 0
        %1188 = vmatprep.subr.bf16.mxu0 0
        %1189 = vmatpush2.bf16.xpose.msra.mxu0 0
        %1190 = vmatprep.subr.bf16.mxu0 0
        %1191 = vmatpush2.bf16.xpose.msra.mxu0 0
        %1192 = vmatprep.subr.bf16.mxu0 0
        %1193 = vmatpush2.bf16.xpose.msra.mxu0 0
        %1194 = vmatprep.subr.bf16.mxu0 0
        %1195 = vmatpush2.bf16.xpose.msra.mxu0 0
        %1196 = vmatprep.subr.bf16.mxu0 0
        %1197 = vmatpush2.bf16.xpose.msra.mxu0 0
        %1198 = vmatprep.subr.bf16.mxu0 0
        %1199 = vmatpush2.bf16.xpose.msra.mxu0 0
        %1200 = vmatprep.mubr.bf16.mxu0 0
        %1201 = vmatmul.mubr.bf16.gmra.mxu0 %v1120
        %v1202 = vpop.f32.mrf.mxu0
        %v1203 = vadd.f32 0.0, %v1202
        %v1204 = vpop.f32.mrf.mxu0
        %v1205 = vpop.f32.mrf.mxu0
        %v1206 = vadd.f32 0.0, %v1205
        %v1207 = vpop.f32.mrf.mxu0
        %1208 = vmatprep.mubr.bf16.mxu0 0
        %1209 = vmatmul.mubr.bf16.gmra.mxu0 %v1121
        %v1210 = vpop.f32.mrf.mxu0
        %v1211 = vadd.f32 0.0, %v1210
        %v1212 = vpop.f32.mrf.mxu0
        %v1213 = vpop.f32.mrf.mxu0
        %v1214 = vadd.f32 0.0, %v1213
        %v1215 = vpop.f32.mrf.mxu0
        %1216 = vmatprep.mubr.bf16.mxu0 0
        %1217 = vmatmul.mubr.bf16.gmra.mxu0 %v1122
        %v1218 = vpop.f32.mrf.mxu0
        %v1219 = vadd.f32 0.0, %v1218
        %v1220 = vpop.f32.mrf.mxu0
        %v1221 = vpop.f32.mrf.mxu0
        %v1222 = vadd.f32 0.0, %v1221
        %v1223 = vpop.f32.mrf.mxu0
        %1224 = vmatprep.mubr.bf16.mxu0 0
        %1225 = vmatmul.mubr.bf16.gmra.mxu0 %v1123
        %v1226 = vpop.f32.mrf.mxu0
        %v1227 = vadd.f32 0.0, %v1226
        %v1228 = vpop.f32.mrf.mxu0
        %v1229 = vpop.f32.mrf.mxu0
        %v1230 = vadd.f32 0.0, %v1229
        %v1231 = vpop.f32.mrf.mxu0
        %1232 = vmatprep.mubr.bf16.mxu0 0
        %1233 = vmatmul.mubr.bf16.gmra.mxu0 %v1124
        %v1234 = vpop.f32.mrf.mxu0
        %v1235 = vadd.f32 0.0, %v1234
        %v1236 = vpop.f32.mrf.mxu0
        %v1237 = vpop.f32.mrf.mxu0
        %v1238 = vadd.f32 0.0, %v1237
        %v1239 = vpop.f32.mrf.mxu0
        %1240 = vmatprep.mubr.bf16.mxu0 0
        %1241 = vmatmul.mubr.bf16.gmra.mxu0 %v1125
        %v1242 = vpop.f32.mrf.mxu0
        %v1243 = vadd.f32 0.0, %v1242
        %v1244 = vpop.f32.mrf.mxu0
        %v1245 = vpop.f32.mrf.mxu0
        %v1246 = vadd.f32 0.0, %v1245
        %v1247 = vpop.f32.mrf.mxu0
        %1248 = vmatprep.mubr.bf16.mxu0 0
        %1249 = vmatmul.mubr.bf16.gmra.mxu0 %v1126
        %v1250 = vpop.f32.mrf.mxu0
        %v1251 = vadd.f32 0.0, %v1250
        %v1252 = vpop.f32.mrf.mxu0
        %v1253 = vpop.f32.mrf.mxu0
        %v1254 = vadd.f32 0.0, %v1253
        %v1255 = vpop.f32.mrf.mxu0
        %1256 = vmatprep.mubr.bf16.mxu0 0
        %1257 = vmatmul.mubr.bf16.gmra.mxu0 %v1127
        %v1258 = vpop.f32.mrf.mxu0
        %v1259 = vadd.f32 0.0, %v1258
        %v1260 = vpop.f32.mrf.mxu0
        %v1261 = vpop.f32.mrf.mxu0
        %v1262 = vadd.f32 0.0, %v1261
        %v1263 = vpop.f32.mrf.mxu0
        %1264 = vdwg.mxu0
        %1265 = vmatprep.subr.bf16.mxu0 0
        %1266 = vmatpush1.bf16.xpose.msra.mxu0 %v1151
        %1267 = vmatprep.subr.bf16.mxu0 0
        %1268 = vmatpush1.bf16.xpose.msra.mxu0 %v1150
        %1269 = vmatprep.subr.bf16.mxu0 0
        %1270 = vmatpush1.bf16.xpose.msra.mxu0 %v1149
        %1271 = vmatprep.subr.bf16.mxu0 0
        %1272 = vmatpush1.bf16.xpose.msra.mxu0 %v1148
        %1273 = vmatprep.subr.bf16.mxu0 0
        %1274 = vmatpush1.bf16.xpose.msra.mxu0 %v1147
        %1275 = vmatprep.subr.bf16.mxu0 0
        %1276 = vmatpush1.bf16.xpose.msra.mxu0 %v1146
        %1277 = vmatprep.subr.bf16.mxu0 0
        %1278 = vmatpush1.bf16.xpose.msra.mxu0 %v1145
        %1279 = vmatprep.subr.bf16.mxu0 0
        %1280 = vmatpush1.bf16.xpose.msra.mxu0 %v1144
        %1281 = vmatprep.subr.bf16.mxu0 0
        %1282 = vmatpush2.bf16.xpose.msra.mxu0 0
        %1283 = vmatprep.subr.bf16.mxu0 0
        %1284 = vmatpush2.bf16.xpose.msra.mxu0 0
        %1285 = vmatprep.subr.bf16.mxu0 0
        %1286 = vmatpush2.bf16.xpose.msra.mxu0 0
        %1287 = vmatprep.subr.bf16.mxu0 0
        %1288 = vmatpush2.bf16.xpose.msra.mxu0 0
        %1289 = vmatprep.subr.bf16.mxu0 0
        %1290 = vmatpush2.bf16.xpose.msra.mxu0 0
        %1291 = vmatprep.subr.bf16.mxu0 0
        %1292 = vmatpush2.bf16.xpose.msra.mxu0 0
        %1293 = vmatprep.subr.bf16.mxu0 0
        %1294 = vmatpush2.bf16.xpose.msra.mxu0 0
        %1295 = vmatprep.subr.bf16.mxu0 0
        %1296 = vmatpush2.bf16.xpose.msra.mxu0 0
        %1297 = vmatprep.mubr.bf16.mxu0 0
        %1298 = vmatmul.mubr.bf16.gmra.mxu0 %v1128
        %v1299 = vpop.f32.mrf.mxu0
        %v1300 = vadd.f32 0.0, %v1299
        %v1301 = vpop.f32.mrf.mxu0
        %v1302 = vpop.f32.mrf.mxu0
        %v1303 = vadd.f32 0.0, %v1302
        %v1304 = vpop.f32.mrf.mxu0
        %1305 = vmatprep.mubr.bf16.mxu0 0
        %1306 = vmatmul.mubr.bf16.gmra.mxu0 %v1129
        %v1307 = vpop.f32.mrf.mxu0
        %v1308 = vadd.f32 0.0, %v1307
        %v1309 = vpop.f32.mrf.mxu0
        %v1310 = vpop.f32.mrf.mxu0
        %v1311 = vadd.f32 0.0, %v1310
        %v1312 = vpop.f32.mrf.mxu0
        %1313 = vmatprep.mubr.bf16.mxu0 0
        %1314 = vmatmul.mubr.bf16.gmra.mxu0 %v1130
        %v1315 = vpop.f32.mrf.mxu0
        %v1316 = vadd.f32 0.0, %v1315
        %v1317 = vpop.f32.mrf.mxu0
        %v1318 = vpop.f32.mrf.mxu0
        %v1319 = vadd.f32 0.0, %v1318
        %v1320 = vpop.f32.mrf.mxu0
        %1321 = vmatprep.mubr.bf16.mxu0 0
        %1322 = vmatmul.mubr.bf16.gmra.mxu0 %v1131
        %v1323 = vpop.f32.mrf.mxu0
        %v1324 = vadd.f32 0.0, %v1323
        %v1325 = vpop.f32.mrf.mxu0
        %v1326 = vpop.f32.mrf.mxu0
        %v1327 = vadd.f32 0.0, %v1326
        %v1328 = vpop.f32.mrf.mxu0
        %1329 = vmatprep.mubr.bf16.mxu0 0
        %1330 = vmatmul.mubr.bf16.gmra.mxu0 %v1132
        %v1331 = vpop.f32.mrf.mxu0
        %v1332 = vadd.f32 0.0, %v1331
        %v1333 = vpop.f32.mrf.mxu0
        %v1334 = vpop.f32.mrf.mxu0
        %v1335 = vadd.f32 0.0, %v1334
        %v1336 = vpop.f32.mrf.mxu0
        %1337 = vmatprep.mubr.bf16.mxu0 0
        %1338 = vmatmul.mubr.bf16.gmra.mxu0 %v1133
        %v1339 = vpop.f32.mrf.mxu0
        %v1340 = vadd.f32 0.0, %v1339
        %v1341 = vpop.f32.mrf.mxu0
        %v1342 = vpop.f32.mrf.mxu0
        %v1343 = vadd.f32 0.0, %v1342
        %v1344 = vpop.f32.mrf.mxu0
        %1345 = vmatprep.mubr.bf16.mxu0 0
        %1346 = vmatmul.mubr.bf16.gmra.mxu0 %v1134
        %v1347 = vpop.f32.mrf.mxu0
        %v1348 = vadd.f32 0.0, %v1347
        %v1349 = vpop.f32.mrf.mxu0
        %v1350 = vpop.f32.mrf.mxu0
        %v1351 = vadd.f32 0.0, %v1350
        %v1352 = vpop.f32.mrf.mxu0
        %1353 = vmatprep.mubr.bf16.mxu0 0
        %1354 = vmatmul.mubr.bf16.gmra.mxu0 %v1135
        %v1355 = vpop.f32.mrf.mxu0
        %v1356 = vadd.f32 0.0, %v1355
        %v1357 = vpop.f32.mrf.mxu0
        %v1358 = vpop.f32.mrf.mxu0
        %v1359 = vadd.f32 0.0, %v1358
        %v1360 = vpop.f32.mrf.mxu0
        %1361 = vdwg.mxu0
        %1362 = vmax.xlane.f32.xlu0 %v1203
        %v1363 = vpop.xlane.xlu0 %1362
        %1364 = vmax.xlane.f32.xlu0 %v1206
        %v1365 = vpop.xlane.xlu0 %1364
        %1366 = vmax.xlane.f32.xlu0 %v1211
        %v1367 = vpop.xlane.xlu0 %1366
        %1368 = vmax.xlane.f32.xlu0 %v1214
        %v1369 = vpop.xlane.xlu0 %1368
        %1370 = vmax.xlane.f32.xlu0 %v1219
        %v1371 = vpop.xlane.xlu0 %1370
        %1372 = vmax.xlane.f32.xlu0 %v1222
        %v1373 = vpop.xlane.xlu0 %1372
        %1374 = vmax.xlane.f32.xlu0 %v1227
        %v1375 = vpop.xlane.xlu0 %1374
        %1376 = vmax.xlane.f32.xlu0 %v1230
        %v1377 = vpop.xlane.xlu0 %1376
        %1378 = vmax.xlane.f32.xlu0 %v1235
        %v1379 = vpop.xlane.xlu0 %1378
        %1380 = vmax.xlane.f32.xlu0 %v1238
        %v1381 = vpop.xlane.xlu0 %1380
        %1382 = vmax.xlane.f32.xlu0 %v1243
        %v1383 = vpop.xlane.xlu0 %1382
        %1384 = vmax.xlane.f32.xlu0 %v1246
        %v1385 = vpop.xlane.xlu0 %1384
        %1386 = vmax.xlane.f32.xlu0 %v1251
        %v1387 = vpop.xlane.xlu0 %1386
        %1388 = vmax.xlane.f32.xlu0 %v1254
        %v1389 = vpop.xlane.xlu0 %1388
        %1390 = vmax.xlane.f32.xlu0 %v1259
        %v1391 = vpop.xlane.xlu0 %1390
        %1392 = vmax.xlane.f32.xlu0 %v1262
        %v1393 = vpop.xlane.xlu0 %1392
        %1394 = vmax.xlane.f32.xlu0 %v1300
        %v1395 = vpop.xlane.xlu0 %1394
        %1396 = vmax.xlane.f32.xlu0 %v1303
        %v1397 = vpop.xlane.xlu0 %1396
        %1398 = vmax.xlane.f32.xlu0 %v1308
        %v1399 = vpop.xlane.xlu0 %1398
        %1400 = vmax.xlane.f32.xlu0 %v1311
        %v1401 = vpop.xlane.xlu0 %1400
        %1402 = vmax.xlane.f32.xlu0 %v1316
        %v1403 = vpop.xlane.xlu0 %1402
        %1404 = vmax.xlane.f32.xlu0 %v1319
        %v1405 = vpop.xlane.xlu0 %1404
        %1406 = vmax.xlane.f32.xlu0 %v1324
        %v1407 = vpop.xlane.xlu0 %1406
        %1408 = vmax.xlane.f32.xlu0 %v1327
        %v1409 = vpop.xlane.xlu0 %1408
        %1410 = vmax.xlane.f32.xlu0 %v1332
        %v1411 = vpop.xlane.xlu0 %1410
        %1412 = vmax.xlane.f32.xlu0 %v1335
        %v1413 = vpop.xlane.xlu0 %1412
        %1414 = vmax.xlane.f32.xlu0 %v1340
        %v1415 = vpop.xlane.xlu0 %1414
        %1416 = vmax.xlane.f32.xlu0 %v1343
        %v1417 = vpop.xlane.xlu0 %1416
        %1418 = vmax.xlane.f32.xlu0 %v1348
        %v1419 = vpop.xlane.xlu0 %1418
        %1420 = vmax.xlane.f32.xlu0 %v1351
        %v1421 = vpop.xlane.xlu0 %1420
        %1422 = vmax.xlane.f32.xlu0 %v1356
        %v1423 = vpop.xlane.xlu0 %1422
        %1424 = vmax.xlane.f32.xlu0 %v1359
        %v1425 = vpop.xlane.xlu0 %1424
        %v1426 = vsub.f32 %v1203, %v1363
        %v1427 = vsub.f32 %v1206, %v1365
        %v1428 = vsub.f32 %v1211, %v1367
        %v1429 = vsub.f32 %v1214, %v1369
        %v1430 = vsub.f32 %v1219, %v1371
        %v1431 = vsub.f32 %v1222, %v1373
        %v1432 = vsub.f32 %v1227, %v1375
        %v1433 = vsub.f32 %v1230, %v1377
        %v1434 = vsub.f32 %v1235, %v1379
        %v1435 = vsub.f32 %v1238, %v1381
        %v1436 = vsub.f32 %v1243, %v1383
        %v1437 = vsub.f32 %v1246, %v1385
        %v1438 = vsub.f32 %v1251, %v1387
        %v1439 = vsub.f32 %v1254, %v1389
        %v1440 = vsub.f32 %v1259, %v1391
        %v1441 = vsub.f32 %v1262, %v1393
        %v1442 = vsub.f32 %v1300, %v1395
        %v1443 = vsub.f32 %v1303, %v1397
        %v1444 = vsub.f32 %v1308, %v1399
        %v1445 = vsub.f32 %v1311, %v1401
        %v1446 = vsub.f32 %v1316, %v1403
        %v1447 = vsub.f32 %v1319, %v1405
        %v1448 = vsub.f32 %v1324, %v1407
        %v1449 = vsub.f32 %v1327, %v1409
        %v1450 = vsub.f32 %v1332, %v1411
        %v1451 = vsub.f32 %v1335, %v1413
        %v1452 = vsub.f32 %v1340, %v1415
        %v1453 = vsub.f32 %v1343, %v1417
        %v1454 = vsub.f32 %v1348, %v1419
        %v1455 = vsub.f32 %v1351, %v1421
        %v1456 = vsub.f32 %v1356, %v1423
        %v1457 = vsub.f32 %v1359, %v1425
        %v1458 = vmul.f32 %v1426, 1.442695
        %v1459 = vpow.pop %v1458
        %v1460 = vmul.f32 %v1427, 1.442695
        %v1461 = vpow.pop %v1460
        %v1462 = vmul.f32 %v1428, 1.442695
        %v1463 = vpow.pop %v1462
        %v1464 = vmul.f32 %v1429, 1.442695
        %v1465 = vpow.pop %v1464
        %v1466 = vmul.f32 %v1430, 1.442695
        %v1467 = vpow.pop %v1466
        %v1468 = vmul.f32 %v1431, 1.442695
        %v1469 = vpow.pop %v1468
        %v1470 = vmul.f32 %v1432, 1.442695
        %v1471 = vpow.pop %v1470
        %v1472 = vmul.f32 %v1433, 1.442695
        %v1473 = vpow.pop %v1472
        %v1474 = vmul.f32 %v1434, 1.442695
        %v1475 = vpow.pop %v1474
        %v1476 = vmul.f32 %v1435, 1.442695
        %v1477 = vpow.pop %v1476
        %v1478 = vmul.f32 %v1436, 1.442695
        %v1479 = vpow.pop %v1478
        %v1480 = vmul.f32 %v1437, 1.442695
        %v1481 = vpow.pop %v1480
        %v1482 = vmul.f32 %v1438, 1.442695
        %v1483 = vpow.pop %v1482
        %v1484 = vmul.f32 %v1439, 1.442695
        %v1485 = vpow.pop %v1484
        %v1486 = vmul.f32 %v1440, 1.442695
        %v1487 = vpow.pop %v1486
        %v1488 = vmul.f32 %v1441, 1.442695
        %v1489 = vpow.pop %v1488
        %v1490 = vmul.f32 %v1442, 1.442695
        %v1491 = vpow.pop %v1490
        %v1492 = vmul.f32 %v1443, 1.442695
        %v1493 = vpow.pop %v1492
        %v1494 = vmul.f32 %v1444, 1.442695
        %v1495 = vpow.pop %v1494
        %v1496 = vmul.f32 %v1445, 1.442695
        %v1497 = vpow.pop %v1496
        %v1498 = vmul.f32 %v1446, 1.442695
        %v1499 = vpow.pop %v1498
        %v1500 = vmul.f32 %v1447, 1.442695
        %v1501 = vpow.pop %v1500
        %v1502 = vmul.f32 %v1448, 1.442695
        %v1503 = vpow.pop %v1502
        %v1504 = vmul.f32 %v1449, 1.442695
        %v1505 = vpow.pop %v1504
        %v1506 = vmul.f32 %v1450, 1.442695
        %v1507 = vpow.pop %v1506
        %v1508 = vmul.f32 %v1451, 1.442695
        %v1509 = vpow.pop %v1508
        %v1510 = vmul.f32 %v1452, 1.442695
        %v1511 = vpow.pop %v1510
        %v1512 = vmul.f32 %v1453, 1.442695
        %v1513 = vpow.pop %v1512
        %v1514 = vmul.f32 %v1454, 1.442695
        %v1515 = vpow.pop %v1514
        %v1516 = vmul.f32 %v1455, 1.442695
        %v1517 = vpow.pop %v1516
        %v1518 = vmul.f32 %v1456, 1.442695
        %v1519 = vpow.pop %v1518
        %v1520 = vmul.f32 %v1457, 1.442695
        %v1521 = vpow.pop %v1520
        %1522 = vadd.xlane.f32.xlu0 %v1459
        %v1523 = vpop.xlane.xlu0 %1522
        %1524 = vadd.xlane.f32.xlu0 %v1461
        %v1525 = vpop.xlane.xlu0 %1524
        %1526 = vadd.xlane.f32.xlu0 %v1463
        %v1527 = vpop.xlane.xlu0 %1526
        %1528 = vadd.xlane.f32.xlu0 %v1465
        %v1529 = vpop.xlane.xlu0 %1528
        %1530 = vadd.xlane.f32.xlu0 %v1467
        %v1531 = vpop.xlane.xlu0 %1530
        %1532 = vadd.xlane.f32.xlu0 %v1469
        %v1533 = vpop.xlane.xlu0 %1532
        %1534 = vadd.xlane.f32.xlu0 %v1471
        %v1535 = vpop.xlane.xlu0 %1534
        %1536 = vadd.xlane.f32.xlu0 %v1473
        %v1537 = vpop.xlane.xlu0 %1536
        %1538 = vadd.xlane.f32.xlu0 %v1475
        %v1539 = vpop.xlane.xlu0 %1538
        %1540 = vadd.xlane.f32.xlu0 %v1477
        %v1541 = vpop.xlane.xlu0 %1540
        %1542 = vadd.xlane.f32.xlu0 %v1479
        %v1543 = vpop.xlane.xlu0 %1542
        %1544 = vadd.xlane.f32.xlu0 %v1481
        %v1545 = vpop.xlane.xlu0 %1544
        %1546 = vadd.xlane.f32.xlu0 %v1483
        %v1547 = vpop.xlane.xlu0 %1546
        %1548 = vadd.xlane.f32.xlu0 %v1485
        %v1549 = vpop.xlane.xlu0 %1548
        %1550 = vadd.xlane.f32.xlu0 %v1487
        %v1551 = vpop.xlane.xlu0 %1550
        %1552 = vadd.xlane.f32.xlu0 %v1489
        %v1553 = vpop.xlane.xlu0 %1552
        %1554 = vadd.xlane.f32.xlu0 %v1491
        %v1555 = vpop.xlane.xlu0 %1554
        %1556 = vadd.xlane.f32.xlu0 %v1493
        %v1557 = vpop.xlane.xlu0 %1556
        %1558 = vadd.xlane.f32.xlu0 %v1495
        %v1559 = vpop.xlane.xlu0 %1558
        %1560 = vadd.xlane.f32.xlu0 %v1497
        %v1561 = vpop.xlane.xlu0 %1560
        %1562 = vadd.xlane.f32.xlu0 %v1499
        %v1563 = vpop.xlane.xlu0 %1562
        %1564 = vadd.xlane.f32.xlu0 %v1501
        %v1565 = vpop.xlane.xlu0 %1564
        %1566 = vadd.xlane.f32.xlu0 %v1503
        %v1567 = vpop.xlane.xlu0 %1566
        %1568 = vadd.xlane.f32.xlu0 %v1505
        %v1569 = vpop.xlane.xlu0 %1568
        %1570 = vadd.xlane.f32.xlu0 %v1507
        %v1571 = vpop.xlane.xlu0 %1570
        %1572 = vadd.xlane.f32.xlu0 %v1509
        %v1573 = vpop.xlane.xlu0 %1572
        %1574 = vadd.xlane.f32.xlu0 %v1511
        %v1575 = vpop.xlane.xlu0 %1574
        %1576 = vadd.xlane.f32.xlu0 %v1513
        %v1577 = vpop.xlane.xlu0 %1576
        %1578 = vadd.xlane.f32.xlu0 %v1515
        %v1579 = vpop.xlane.xlu0 %1578
        %1580 = vadd.xlane.f32.xlu0 %v1517
        %v1581 = vpop.xlane.xlu0 %1580
        %1582 = vadd.xlane.f32.xlu0 %v1519
        %v1583 = vpop.xlane.xlu0 %1582
        %1584 = vadd.xlane.f32.xlu0 %v1521
        %v1585 = vpop.xlane.xlu0 %1584
        %v1586 = vpack.c.bf16 %v1461, %v1459
        %v1587 = vpack.c.bf16 %v1465, %v1463
        %v1588 = vpack.c.bf16 %v1469, %v1467
        %v1589 = vpack.c.bf16 %v1473, %v1471
        %v1590 = vpack.c.bf16 %v1477, %v1475
        %v1591 = vpack.c.bf16 %v1481, %v1479
        %v1592 = vpack.c.bf16 %v1485, %v1483
        %v1593 = vpack.c.bf16 %v1489, %v1487
        %v1594 = vpack.c.bf16 %v1493, %v1491
        %v1595 = vpack.c.bf16 %v1497, %v1495
        %v1596 = vpack.c.bf16 %v1501, %v1499
        %v1597 = vpack.c.bf16 %v1505, %v1503
        %v1598 = vpack.c.bf16 %v1509, %v1507
        %v1599 = vpack.c.bf16 %v1513, %v1511
        %v1600 = vpack.c.bf16 %v1517, %v1515
        %v1601 = vpack.c.bf16 %v1521, %v1519
        %1602 = vmatprep.subr.bf16.mxu0 0
        %1603 = vmatpush1.bf16.msra.mxu0 %v1159
        %1604 = vmatprep.subr.bf16.mxu0 0
        %1605 = vmatpush1.bf16.msra.mxu0 %v1158
        %1606 = vmatprep.subr.bf16.mxu0 0
        %1607 = vmatpush1.bf16.msra.mxu0 %v1157
        %1608 = vmatprep.subr.bf16.mxu0 0
        %1609 = vmatpush1.bf16.msra.mxu0 %v1156
        %1610 = vmatprep.subr.bf16.mxu0 0
        %1611 = vmatpush1.bf16.msra.mxu0 %v1155
        %1612 = vmatprep.subr.bf16.mxu0 0
        %1613 = vmatpush1.bf16.msra.mxu0 %v1154
        %1614 = vmatprep.subr.bf16.mxu0 0
        %1615 = vmatpush1.bf16.msra.mxu0 %v1153
        %1616 = vmatprep.subr.bf16.mxu0 0
        %1617 = vmatpush1.bf16.msra.mxu0 %v1152
        %1618 = vmatprep.subr.bf16.mxu0 0
        %1619 = vmatpush2.bf16.msra.mxu0 0
        %1620 = vmatprep.subr.bf16.mxu0 0
        %1621 = vmatpush2.bf16.msra.mxu0 0
        %1622 = vmatprep.subr.bf16.mxu0 0
        %1623 = vmatpush2.bf16.msra.mxu0 0
        %1624 = vmatprep.subr.bf16.mxu0 0
        %1625 = vmatpush2.bf16.msra.mxu0 0
        %1626 = vmatprep.subr.bf16.mxu0 0
        %1627 = vmatpush2.bf16.msra.mxu0 0
        %1628 = vmatprep.subr.bf16.mxu0 0
        %1629 = vmatpush2.bf16.msra.mxu0 0
        %1630 = vmatprep.subr.bf16.mxu0 0
        %1631 = vmatpush2.bf16.msra.mxu0 0
        %1632 = vmatprep.subr.bf16.mxu0 0
        %1633 = vmatpush2.bf16.msra.mxu0 0
        %1634 = vmatprep.mubr.bf16.mxu0 0
        %1635 = vmatmul.mubr.bf16.gmra.mxu0 %v1586
        %v1636 = vpop.f32.mrf.mxu0
        %v1637 = vadd.f32 0.0, %v1636
        %v1638 = vpop.f32.mrf.mxu0
        %v1639 = vpop.f32.mrf.mxu0
        %v1640 = vadd.f32 0.0, %v1639
        %v1641 = vpop.f32.mrf.mxu0
        %1642 = vmatprep.mubr.bf16.mxu0 0
        %1643 = vmatmul.mubr.bf16.gmra.mxu0 %v1587
        %v1644 = vpop.f32.mrf.mxu0
        %v1645 = vadd.f32 0.0, %v1644
        %v1646 = vpop.f32.mrf.mxu0
        %v1647 = vpop.f32.mrf.mxu0
        %v1648 = vadd.f32 0.0, %v1647
        %v1649 = vpop.f32.mrf.mxu0
        %1650 = vmatprep.mubr.bf16.mxu0 0
        %1651 = vmatmul.mubr.bf16.gmra.mxu0 %v1588
        %v1652 = vpop.f32.mrf.mxu0
        %v1653 = vadd.f32 0.0, %v1652
        %v1654 = vpop.f32.mrf.mxu0
        %v1655 = vpop.f32.mrf.mxu0
        %v1656 = vadd.f32 0.0, %v1655
        %v1657 = vpop.f32.mrf.mxu0
        %1658 = vmatprep.mubr.bf16.mxu0 0
        %1659 = vmatmul.mubr.bf16.gmra.mxu0 %v1589
        %v1660 = vpop.f32.mrf.mxu0
        %v1661 = vadd.f32 0.0, %v1660
        %v1662 = vpop.f32.mrf.mxu0
        %v1663 = vpop.f32.mrf.mxu0
        %v1664 = vadd.f32 0.0, %v1663
        %v1665 = vpop.f32.mrf.mxu0
        %1666 = vmatprep.mubr.bf16.mxu0 0
        %1667 = vmatmul.mubr.bf16.gmra.mxu0 %v1590
        %v1668 = vpop.f32.mrf.mxu0
        %v1669 = vadd.f32 0.0, %v1668
        %v1670 = vpop.f32.mrf.mxu0
        %v1671 = vpop.f32.mrf.mxu0
        %v1672 = vadd.f32 0.0, %v1671
        %v1673 = vpop.f32.mrf.mxu0
        %1674 = vmatprep.mubr.bf16.mxu0 0
        %1675 = vmatmul.mubr.bf16.gmra.mxu0 %v1591
        %v1676 = vpop.f32.mrf.mxu0
        %v1677 = vadd.f32 0.0, %v1676
        %v1678 = vpop.f32.mrf.mxu0
        %v1679 = vpop.f32.mrf.mxu0
        %v1680 = vadd.f32 0.0, %v1679
        %v1681 = vpop.f32.mrf.mxu0
        %1682 = vmatprep.mubr.bf16.mxu0 0
        %1683 = vmatmul.mubr.bf16.gmra.mxu0 %v1592
        %v1684 = vpop.f32.mrf.mxu0
        %v1685 = vadd.f32 0.0, %v1684
        %v1686 = vpop.f32.mrf.mxu0
        %v1687 = vpop.f32.mrf.mxu0
        %v1688 = vadd.f32 0.0, %v1687
        %v1689 = vpop.f32.mrf.mxu0
        %1690 = vmatprep.mubr.bf16.mxu0 0
        %1691 = vmatmul.mubr.bf16.gmra.mxu0 %v1593
        %v1692 = vpop.f32.mrf.mxu0
        %v1693 = vadd.f32 0.0, %v1692
        %v1694 = vpop.f32.mrf.mxu0
        %v1695 = vpop.f32.mrf.mxu0
        %v1696 = vadd.f32 0.0, %v1695
        %v1697 = vpop.f32.mrf.mxu0
        %1698 = vdwg.mxu0
        %1699 = vmatprep.subr.bf16.mxu0 0
        %1700 = vmatpush1.bf16.msra.mxu0 %v1167
        %1701 = vmatprep.subr.bf16.mxu0 0
        %1702 = vmatpush1.bf16.msra.mxu0 %v1166
        %1703 = vmatprep.subr.bf16.mxu0 0
        %1704 = vmatpush1.bf16.msra.mxu0 %v1165
        %1705 = vmatprep.subr.bf16.mxu0 0
        %1706 = vmatpush1.bf16.msra.mxu0 %v1164
        %1707 = vmatprep.subr.bf16.mxu0 0
        %1708 = vmatpush1.bf16.msra.mxu0 %v1163
        %1709 = vmatprep.subr.bf16.mxu0 0
        %1710 = vmatpush1.bf16.msra.mxu0 %v1162
        %1711 = vmatprep.subr.bf16.mxu0 0
        %1712 = vmatpush1.bf16.msra.mxu0 %v1161
        %1713 = vmatprep.subr.bf16.mxu0 0
        %1714 = vmatpush1.bf16.msra.mxu0 %v1160
        %1715 = vmatprep.subr.bf16.mxu0 0
        %1716 = vmatpush2.bf16.msra.mxu0 0
        %1717 = vmatprep.subr.bf16.mxu0 0
        %1718 = vmatpush2.bf16.msra.mxu0 0
        %1719 = vmatprep.subr.bf16.mxu0 0
        %1720 = vmatpush2.bf16.msra.mxu0 0
        %1721 = vmatprep.subr.bf16.mxu0 0
        %1722 = vmatpush2.bf16.msra.mxu0 0
        %1723 = vmatprep.subr.bf16.mxu0 0
        %1724 = vmatpush2.bf16.msra.mxu0 0
        %1725 = vmatprep.subr.bf16.mxu0 0
        %1726 = vmatpush2.bf16.msra.mxu0 0
        %1727 = vmatprep.subr.bf16.mxu0 0
        %1728 = vmatpush2.bf16.msra.mxu0 0
        %1729 = vmatprep.subr.bf16.mxu0 0
        %1730 = vmatpush2.bf16.msra.mxu0 0
        %1731 = vmatprep.mubr.bf16.mxu0 0
        %1732 = vmatmul.mubr.bf16.gmra.mxu0 %v1594
        %v1733 = vpop.f32.mrf.mxu0
        %v1734 = vadd.f32 0.0, %v1733
        %v1735 = vpop.f32.mrf.mxu0
        %v1736 = vpop.f32.mrf.mxu0
        %v1737 = vadd.f32 0.0, %v1736
        %v1738 = vpop.f32.mrf.mxu0
        %1739 = vmatprep.mubr.bf16.mxu0 0
        %1740 = vmatmul.mubr.bf16.gmra.mxu0 %v1595
        %v1741 = vpop.f32.mrf.mxu0
        %v1742 = vadd.f32 0.0, %v1741
        %v1743 = vpop.f32.mrf.mxu0
        %v1744 = vpop.f32.mrf.mxu0
        %v1745 = vadd.f32 0.0, %v1744
        %v1746 = vpop.f32.mrf.mxu0
        %1747 = vmatprep.mubr.bf16.mxu0 0
        %1748 = vmatmul.mubr.bf16.gmra.mxu0 %v1596
        %v1749 = vpop.f32.mrf.mxu0
        %v1750 = vadd.f32 0.0, %v1749
        %v1751 = vpop.f32.mrf.mxu0
        %v1752 = vpop.f32.mrf.mxu0
        %v1753 = vadd.f32 0.0, %v1752
        %v1754 = vpop.f32.mrf.mxu0
        %1755 = vmatprep.mubr.bf16.mxu0 0
        %1756 = vmatmul.mubr.bf16.gmra.mxu0 %v1597
        %v1757 = vpop.f32.mrf.mxu0
        %v1758 = vadd.f32 0.0, %v1757
        %v1759 = vpop.f32.mrf.mxu0
        %v1760 = vpop.f32.mrf.mxu0
        %v1761 = vadd.f32 0.0, %v1760
        %v1762 = vpop.f32.mrf.mxu0
        %1763 = vmatprep.mubr.bf16.mxu0 0
        %1764 = vmatmul.mubr.bf16.gmra.mxu0 %v1598
        %v1765 = vpop.f32.mrf.mxu0
        %v1766 = vadd.f32 0.0, %v1765
        %v1767 = vpop.f32.mrf.mxu0
        %v1768 = vpop.f32.mrf.mxu0
        %v1769 = vadd.f32 0.0, %v1768
        %v1770 = vpop.f32.mrf.mxu0
        %1771 = vmatprep.mubr.bf16.mxu0 0
        %1772 = vmatmul.mubr.bf16.gmra.mxu0 %v1599
        %v1773 = vpop.f32.mrf.mxu0
        %v1774 = vadd.f32 0.0, %v1773
        %v1775 = vpop.f32.mrf.mxu0
        %v1776 = vpop.f32.mrf.mxu0
        %v1777 = vadd.f32 0.0, %v1776
        %v1778 = vpop.f32.mrf.mxu0
        %1779 = vmatprep.mubr.bf16.mxu0 0
        %1780 = vmatmul.mubr.bf16.gmra.mxu0 %v1600
        %v1781 = vpop.f32.mrf.mxu0
        %v1782 = vadd.f32 0.0, %v1781
        %v1783 = vpop.f32.mrf.mxu0
        %v1784 = vpop.f32.mrf.mxu0
        %v1785 = vadd.f32 0.0, %v1784
        %v1786 = vpop.f32.mrf.mxu0
        %1787 = vmatprep.mubr.bf16.mxu0 0
        %1788 = vmatmul.mubr.bf16.gmra.mxu0 %v1601
        %v1789 = vpop.f32.mrf.mxu0
        %v1790 = vadd.f32 0.0, %v1789
        %v1791 = vpop.f32.mrf.mxu0
        %v1792 = vpop.f32.mrf.mxu0
        %v1793 = vadd.f32 0.0, %v1792
        %v1794 = vpop.f32.mrf.mxu0
        %1795 = vdwg.mxu0
        %v1796 = vrcp.pop %v1523
        %v1797 = vrcp.pop %v1525
        %v1798 = vrcp.pop %v1527
        %v1799 = vrcp.pop %v1529
        %v1800 = vrcp.pop %v1531
        %v1801 = vrcp.pop %v1533
        %v1802 = vrcp.pop %v1535
        %v1803 = vrcp.pop %v1537
        %v1804 = vrcp.pop %v1539
        %v1805 = vrcp.pop %v1541
        %v1806 = vrcp.pop %v1543
        %v1807 = vrcp.pop %v1545
        %v1808 = vrcp.pop %v1547
        %v1809 = vrcp.pop %v1549
        %v1810 = vrcp.pop %v1551
        %v1811 = vrcp.pop %v1553
        %v1812 = vrcp.pop %v1555
        %v1813 = vrcp.pop %v1557
        %v1814 = vrcp.pop %v1559
        %v1815 = vrcp.pop %v1561
        %v1816 = vrcp.pop %v1563
        %v1817 = vrcp.pop %v1565
        %v1818 = vrcp.pop %v1567
        %v1819 = vrcp.pop %v1569
        %v1820 = vrcp.pop %v1571
        %v1821 = vrcp.pop %v1573
        %v1822 = vrcp.pop %v1575
        %v1823 = vrcp.pop %v1577
        %v1824 = vrcp.pop %v1579
        %v1825 = vrcp.pop %v1581
        %v1826 = vrcp.pop %v1583
        %v1827 = vrcp.pop %v1585
        %v1828 = vmul.f32 %v1637, %v1796
        %v1829 = vmul.f32 %v1640, %v1797
        %v1830 = vmul.f32 %v1645, %v1798
        %v1831 = vmul.f32 %v1648, %v1799
        %v1832 = vmul.f32 %v1653, %v1800
        %v1833 = vmul.f32 %v1656, %v1801
        %v1834 = vmul.f32 %v1661, %v1802
        %v1835 = vmul.f32 %v1664, %v1803
        %v1836 = vmul.f32 %v1669, %v1804
        %v1837 = vmul.f32 %v1672, %v1805
        %v1838 = vmul.f32 %v1677, %v1806
        %v1839 = vmul.f32 %v1680, %v1807
        %v1840 = vmul.f32 %v1685, %v1808
        %v1841 = vmul.f32 %v1688, %v1809
        %v1842 = vmul.f32 %v1693, %v1810
        %v1843 = vmul.f32 %v1696, %v1811
        %v1844 = vmul.f32 %v1734, %v1812
        %v1845 = vmul.f32 %v1737, %v1813
        %v1846 = vmul.f32 %v1742, %v1814
        %v1847 = vmul.f32 %v1745, %v1815
        %v1848 = vmul.f32 %v1750, %v1816
        %v1849 = vmul.f32 %v1753, %v1817
        %v1850 = vmul.f32 %v1758, %v1818
        %v1851 = vmul.f32 %v1761, %v1819
        %v1852 = vmul.f32 %v1766, %v1820
        %v1853 = vmul.f32 %v1769, %v1821
        %v1854 = vmul.f32 %v1774, %v1822
        %v1855 = vmul.f32 %v1777, %v1823
        %v1856 = vmul.f32 %v1782, %v1824
        %v1857 = vmul.f32 %v1785, %v1825
        %v1858 = vmul.f32 %v1790, %v1826
        %v1859 = vmul.f32 %v1793, %v1827
        %1860 = vst [vmem:[%s340] sm:$0xff] %v1828
        %1861 = vst [vmem:[%s340 + $0x8] sm:$0xff] %v1829
        %1862 = vst [vmem:[%s340 + $0x10] sm:$0xff] %v1830
        %1863 = vst [vmem:[%s340 + $0x18] sm:$0xff] %v1831
        %1864 = vst [vmem:[%s340 + $0x20] sm:$0xff] %v1832
        %1865 = vst [vmem:[%s340 + $0x28] sm:$0xff] %v1833
        %1866 = vst [vmem:[%s340 + $0x30] sm:$0xff] %v1834
        %1867 = vst [vmem:[%s340 + $0x38] sm:$0xff] %v1835
        %1868 = vst [vmem:[%s340 + $0x40] sm:$0xff] %v1836
        %1869 = vst [vmem:[%s340 + $0x48] sm:$0xff] %v1837
        %1870 = vst [vmem:[%s340 + $0x50] sm:$0xff] %v1838
        %1871 = vst [vmem:[%s340 + $0x58] sm:$0xff] %v1839
        %1872 = vst [vmem:[%s340 + $0x60] sm:$0xff] %v1840
        %1873 = vst [vmem:[%s340 + $0x68] sm:$0xff] %v1841
        %1874 = vst [vmem:[%s340 + $0x70] sm:$0xff] %v1842
        %1875 = vst [vmem:[%s340 + $0x78] sm:$0xff] %v1843
        %1876 = vst [vmem:[%s340 + $0x80] sm:$0xff] %v1844
        %1877 = vst [vmem:[%s340 + $0x88] sm:$0xff] %v1845
        %1878 = vst [vmem:[%s340 + $0x90] sm:$0xff] %v1846
        %1879 = vst [vmem:[%s340 + $0x98] sm:$0xff] %v1847
        %1880 = vst [vmem:[%s340 + $0xa0] sm:$0xff] %v1848
        %1881 = vst [vmem:[%s340 + $0xa8] sm:$0xff] %v1849
        %1882 = vst [vmem:[%s340 + $0xb0] sm:$0xff] %v1850
        %1883 = vst [vmem:[%s340 + $0xb8] sm:$0xff] %v1851
        %1884 = vst [vmem:[%s340 + $0xc0] sm:$0xff] %v1852
        %1885 = vst [vmem:[%s340 + $0xc8] sm:$0xff] %v1853
        %1886 = vst [vmem:[%s340 + $0xd0] sm:$0xff] %v1854
        %1887 = vst [vmem:[%s340 + $0xd8] sm:$0xff] %v1855
        %1888 = vst [vmem:[%s340 + $0xe0] sm:$0xff] %v1856
        %1889 = vst [vmem:[%s340 + $0xe8] sm:$0xff] %v1857
        %1890 = vst [vmem:[%s340 + $0xf0] sm:$0xff] %v1858
        %1891 = vst [vmem:[%s340 + $0xf8] sm:$0xff] %v1859
        %s1892 = sand.u32 %s186, 1
        %s1893 = scalar_lea.sflag [#allocation4], %s1892
        %s1894 = sand.u32 %s186, 1
        %s1895 = smul.addr %s1894, 256
        %s1896 = scalar_lea.vmem [#allocation10], %s1895
        // Predicated region
        $region65: #{tpu_custom_call.1} parent=47 // pred_check
          %p1897 = pneg %p196
        $region66: #{tpu_custom_call.1} parent=47 // pred_check_branch
          %1899 = sbr.rel (%p1897) target = $region68
        $region67: #{tpu_custom_call.1} parent=47 // pred_region
          %s1900 = smul.u32 32, %s26
          %s1902 = ssub.s32 4096, 4096
          %1903 = vsyncadd %s1893, %s1902
          %s1904 = smul.addr %s1900, 128
          %s1905 = scalar_lea.hbm %s7, %s1904
          %s1906 = sshll.u32 %s1896, 4
          %s1907 = int_to_ptr.vmem [resolvable:$true] %s1906
          %1912 = dma.vmem_to_hbm [thread:$0]  %s1907, 4096, %s1905, %s1893, 128, 128, 8
        $region68: #{tpu_custom_call.1} parent=47 // pred_fallthru
          _
      $region48: #{tpu_custom_call.1} parent=5 // pred_fallthru
        _
      %p1913 = scmp.le.s32.totalorder 2, %s21
      // Predicated region
      $region69: #{tpu_custom_call.1} parent=5 // pred_check
        %p1914 = pneg %p1913
      $region70: #{tpu_custom_call.1} parent=5 // pred_check_branch
        %1916 = sbr.rel (%p1914) target = $region72
      $region71: #{tpu_custom_call.1} parent=5 // pred_region
        %s1917 = ssub.s32 %s21, 2
        // Predicated region
        $region73: #{tpu_custom_call.1} parent=71 // pred_check
          %p1918 = pneg %p202
        $region74: #{tpu_custom_call.1} parent=71 // pred_check_branch
          %1920 = sbr.rel (%p1918) target = $region76
        $region75: #{tpu_custom_call.1} parent=71 // pred_region
          %s1921 = sand.u32 %s187, 1
          %s1922 = scalar_lea.sflag [#allocation4], %s1921
          %s1923 = sand.u32 %s187, 1
          %s1924 = smul.addr %s1923, 256
          %s1925 = scalar_lea.vmem [#allocation10], %s1924
          %1926 = dma.done %s1922, 4096
        $region76: #{tpu_custom_call.1} parent=71 // pred_fallthru
          _
      $region72: #{tpu_custom_call.1} parent=5 // pred_fallthru
        _
    $region6: #{tpu_custom_call.1} parent=1 // loop_footer
      %s25 = sadd.s32 1, %s21
    $region7: #{tpu_custom_call.1} parent=1 // loop_footer_branch
      %20 = sbr.rel target = $region3
    $region8: #{tpu_custom_call.1} parent=1 // loop_exit
      _
    %1927 = vsyncpa [#allocation3], 1
    %s1928 = scalar_lea.sflag [#allocation3], 1
    %1929 = vsyncpa %s1928, 1
    %1930 = vsyncpa [#allocation6], 1
    %1931 = vsyncpa [#allocation9], 1
    %1932 = vsyncpa [#allocation4], 1
    %s1933 = scalar_lea.sflag [#allocation4], 1
    %1934 = vsyncpa %s1933, 1

// kernel: tpu_custom_call.1
$region0: #{tpu_custom_call.1}
  #allocation0 [shape = 'u32[]', space=smem, size = 0x4, offset = 0x4, fixed_abs, tag = 'smem constant byte address 0x4 - core index']
  #allocation1 [shape = 'u32[144,128]{1,0:T(1,128)}', space=vmem, size = 0x12000, scoped, tag = 'internal scratch']
  %s0 = inlined_call_operand.hbm [shape: f32[1024,128], index: 0, kind: input, shape index: {}]
  %s1 = inlined_call_operand.hbm [shape: bf16[128,128], index: 1, kind: input, shape index: {}]
  %s2 = inlined_call_operand.hbm [shape: bf16[128,128], index: 2, kind: input, shape index: {}]
  %s3 = inlined_call_operand.hbm [shape: bf16[128,128], index: 3, kind: input, shape index: {}]
  %s4 = inlined_call_operand.vmem [shape: f32[1,128], index: 4, kind: input, shape index: {}]
  %s5 = inlined_call_operand.vmem [shape: f32[1,128], index: 5, kind: input, shape index: {}]
  %s6 = inlined_call_operand.vmem [shape: f32[1,128], index: 6, kind: input, shape index: {}]
  %s7 = inlined_call_operand.hbm [shape: f32[1024,128], index: 7, kind: output, shape index: {}]
  %s8 = sld [smem:[#allocation0]]
  $region77: #{tpu_custom_call.1} parent=0
    _
  %s10 = ssub.s32 1, %s8
  %s11 = scalar_select 0, %s10, %s8
  $region1: #{tpu_custom_call.1} parent=0
    #allocation2 [shape = 'u8[262144]{0}', space=vmem, size = 0x40000, scoped, tag = 'input window, operand 0']
    #allocation3 [shape = 's32[2]{0}', space=sflag, size = 0x8, scoped, tag = 'scoped memory for tpu_custom_call.1']
    #allocation4 [shape = 's32[2]{0}', space=sflag, size = 0x8, scoped, tag = 'scoped memory for tpu_custom_call.1']
    #allocation5 [shape = 'u8[32768]{0}', space=vmem, size = 0x8000, scoped, tag = 'input window, operand 1, single buffered']
    #allocation6 [shape = 's32[1]{0}', space=sflag, size = 0x4, scoped, tag = 'scoped memory for tpu_custom_call.1']
    #allocation7 [shape = 'u8[32768]{0}', space=vmem, size = 0x8000, scoped, tag = 'input window, operand 2, single buffered']
    #allocation8 [shape = 'u8[32768]{0}', space=vmem, size = 0x8000, scoped, tag = 'input window, operand 3, single buffered']
    #allocation9 [shape = 's32[1]{0}', space=sflag, size = 0x4, scoped, tag = 'scoped memory for tpu_custom_call.1']
    #allocation10 [shape = 'u8[262144]{0}', space=vmem, size = 0x40000, scoped, tag = 'output window, operand 0']
    %12 = vsyncpa [#allocation3], 0
    %s13 = scalar_lea.sflag [#allocation3], 1
    %14 = vsyncpa %s13, 0
    %15 = vsyncpa [#allocation6], 0
    %16 = vsyncpa [#allocation9], 0
    %17 = vsyncpa [#allocation4], 0
    %s18 = scalar_lea.sflag [#allocation4], 1
    %19 = vsyncpa %s18, 0
    loop: start=0, step=1, limit=6
    $region2: #{tpu_custom_call.1} parent=1 // loop_pre_header
      _
    $region3: #{tpu_custom_call.1} parent=1 // loop_header
      %s21 = sphi 0, %s25
      %p22 = scmp.ge.s32.totalorder %s21, 6
      %s31 = sphi 0, %s33
      %s34 = sphi 0, %s31
      %s35 = sphi 0, %s34
      %s51 = sphi 0, %s35
      %s55 = sphi 0, %s55
      %s57 = sphi 0, %s55
      %s58 = sphi 0, %s57
      %s72 = sphi 0, %s58
      %s76 = sphi 0, %s76
      %s78 = sphi 0, %s76
      %s79 = sphi 0, %s78
      %s93 = sphi 0, %s79
      %s97 = sphi 0, %s97
      %s99 = sphi 0, %s97
      %s100 = sphi 0, %s99
      %s114 = sphi 0, %s100
      %s118 = sphi 0, %s118
      %s120 = sphi 0, %s118
      %s121 = sphi 0, %s120
      %s135 = sphi 0, %s121
      %s139 = sphi 0, %s139
      %s141 = sphi 0, %s139
      %s142 = sphi 0, %s141
      %s156 = sphi 0, %s142
      %s160 = sphi 0, %s160
      %s162 = sphi 0, %s160
      %s163 = sphi 0, %s162
      %s177 = sphi 0, %s163
      %s183 = sphi 0, %s185
      %s186 = sphi 0, %s183
      %s187 = sphi 0, %s186
      %s203 = sphi 0, %s187
    $region4: #{tpu_custom_call.1} parent=1 // loop_header_branch
      %24 = sbr.rel (%p22) target = $region8
    $region5: #{tpu_custom_call.1} parent=1 // loop_body
      %s26 = ssub.s32 %s21, 1
      %s27 = ssub.s32 %s21, 2
      %s28 = sadd.s32 %s21, 1
      %s29 = ssub.s32 %s21, %s28
      %p30 = scmp.eq.s32.totalorder %s29, 0
      %s32 = sadd.s32 %s31, 1
      %s33 = scalar_select %p30, %s31, %s32
      %p36 = pneg %p30
      %p37 = scmp.eq.s32.totalorder %s21, 3
      %p38 = por %p36, %p37
      %p39 = scmp.ne.s32.totalorder %s31, %s34
      %p40 = scmp.eq.s32.totalorder %s21, 0
      %p41 = por %p39, %p40
      %p42 = scmp.ne.s32.totalorder %s31, %s34
      %p43 = scmp.eq.s32.totalorder %s26, 3
      %p44 = por %p42, %p43
      %p45 = scmp.ne.s32.totalorder %s34, %s35
      %p46 = scmp.eq.s32.totalorder %s26, 0
      %p47 = por %p45, %p46
      %p48 = scmp.ne.s32.totalorder %s34, %s35
      %p49 = scmp.eq.s32.totalorder %s27, 3
      %p50 = por %p48, %p49
      %p52 = scmp.ne.s32.totalorder %s35, %s51
      %p53 = scmp.eq.s32.totalorder %s27, 0
      %p54 = por %p52, %p53
      %s56 = sadd.s32 %s55, 1
      %p59 = scmp.eq.s32.totalorder %s21, 3
      %p60 = scmp.ne.s32.totalorder %s55, %s57
      %p61 = scmp.eq.s32.totalorder %s21, 0
      %p62 = por %p60, %p61
      %p63 = scmp.ne.s32.totalorder %s55, %s57
      %p64 = scmp.eq.s32.totalorder %s26, 3
      %p65 = por %p63, %p64
      %p66 = scmp.ne.s32.totalorder %s57, %s58
      %p67 = scmp.eq.s32.totalorder %s26, 0
      %p68 = por %p66, %p67
      %p69 = scmp.ne.s32.totalorder %s57, %s58
      %p70 = scmp.eq.s32.totalorder %s27, 3
      %p71 = por %p69, %p70
      %p73 = scmp.ne.s32.totalorder %s58, %s72
      %p74 = scmp.eq.s32.totalorder %s27, 0
      %p75 = por %p73, %p74
      %s77 = sadd.s32 %s76, 1
      %p80 = scmp.eq.s32.totalorder %s21, 3
      %p81 = scmp.ne.s32.totalorder %s76, %s78
      %p82 = scmp.eq.s32.totalorder %s21, 0
      %p83 = por %p81, %p82
      %p84 = scmp.ne.s32.totalorder %s76, %s78
      %p85 = scmp.eq.s32.totalorder %s26, 3
      %p86 = por %p84, %p85
      %p87 = scmp.ne.s32.totalorder %s78, %s79
      %p88 = scmp.eq.s32.totalorder %s26, 0
      %p89 = por %p87, %p88
      %p90 = scmp.ne.s32.totalorder %s78, %s79
      %p91 = scmp.eq.s32.totalorder %s27, 3
      %p92 = por %p90, %p91
      %p94 = scmp.ne.s32.totalorder %s79, %s93
      %p95 = scmp.eq.s32.totalorder %s27, 0
      %p96 = por %p94, %p95
      %s98 = sadd.s32 %s97, 1
      %p101 = scmp.eq.s32.totalorder %s21, 3
      %p102 = scmp.ne.s32.totalorder %s97, %s99
      %p103 = scmp.eq.s32.totalorder %s21, 0
      %p104 = por %p102, %p103
      %p105 = scmp.ne.s32.totalorder %s97, %s99
      %p106 = scmp.eq.s32.totalorder %s26, 3
      %p107 = por %p105, %p106
      %p108 = scmp.ne.s32.totalorder %s99, %s100
      %p109 = scmp.eq.s32.totalorder %s26, 0
      %p110 = por %p108, %p109
      %p111 = scmp.ne.s32.totalorder %s99, %s100
      %p112 = scmp.eq.s32.totalorder %s27, 3
      %p113 = por %p111, %p112
      %p115 = scmp.ne.s32.totalorder %s100, %s114
      %p116 = scmp.eq.s32.totalorder %s27, 0
      %p117 = por %p115, %p116
      %s119 = sadd.s32 %s118, 1
      %p122 = scmp.eq.s32.totalorder %s21, 3
      %p123 = scmp.ne.s32.totalorder %s118, %s120
      %p124 = scmp.eq.s32.totalorder %s21, 0
      %p125 = por %p123, %p124
      %p126 = scmp.ne.s32.totalorder %s118, %s120
      %p127 = scmp.eq.s32.totalorder %s26, 3
      %p128 = por %p126, %p127
      %p129 = scmp.ne.s32.totalorder %s120, %s121
      %p130 = scmp.eq.s32.totalorder %s26, 0
      %p131 = por %p129, %p130
      %p132 = scmp.ne.s32.totalorder %s120, %s121
      %p133 = scmp.eq.s32.totalorder %s27, 3
      %p134 = por %p132, %p133
      %p136 = scmp.ne.s32.totalorder %s121, %s135
      %p137 = scmp.eq.s32.totalorder %s27, 0
      %p138 = por %p136, %p137
      %s140 = sadd.s32 %s139, 1
      %p143 = scmp.eq.s32.totalorder %s21, 3
      %p144 = scmp.ne.s32.totalorder %s139, %s141
      %p145 = scmp.eq.s32.totalorder %s21, 0
      %p146 = por %p144, %p145
      %p147 = scmp.ne.s32.totalorder %s139, %s141
      %p148 = scmp.eq.s32.totalorder %s26, 3
      %p149 = por %p147, %p148
      %p150 = scmp.ne.s32.totalorder %s141, %s142
      %p151 = scmp.eq.s32.totalorder %s26, 0
      %p152 = por %p150, %p151
      %p153 = scmp.ne.s32.totalorder %s141, %s142
      %p154 = scmp.eq.s32.totalorder %s27, 3
      %p155 = por %p153, %p154
      %p157 = scmp.ne.s32.totalorder %s142, %s156
      %p158 = scmp.eq.s32.totalorder %s27, 0
      %p159 = por %p157, %p158
      %s161 = sadd.s32 %s160, 1
      %p164 = scmp.eq.s32.totalorder %s21, 3
      %p165 = scmp.ne.s32.totalorder %s160, %s162
      %p166 = scmp.eq.s32.totalorder %s21, 0
      %p167 = por %p165, %p166
      %p168 = scmp.ne.s32.totalorder %s160, %s162
      %p169 = scmp.eq.s32.totalorder %s26, 3
      %p170 = por %p168, %p169
      %p171 = scmp.ne.s32.totalorder %s162, %s163
      %p172 = scmp.eq.s32.totalorder %s26, 0
      %p173 = por %p171, %p172
      %p174 = scmp.ne.s32.totalorder %s162, %s163
      %p175 = scmp.eq.s32.totalorder %s27, 3
      %p176 = por %p174, %p175
      %p178 = scmp.ne.s32.totalorder %s163, %s177
      %p179 = scmp.eq.s32.totalorder %s27, 0
      %p180 = por %p178, %p179
      %s181 = ssub.s32 %s21, %s28
      %p182 = scmp.eq.s32.totalorder %s181, 0
      %s184 = sadd.s32 %s183, 1
      %s185 = scalar_select %p182, %s183, %s184
      %p188 = pneg %p182
      %p189 = scmp.eq.s32.totalorder %s21, 3
      %p190 = por %p188, %p189
      %p191 = scmp.ne.s32.totalorder %s183, %s186
      %p192 = scmp.eq.s32.totalorder %s21, 0
      %p193 = por %p191, %p192
      %p194 = scmp.ne.s32.totalorder %s183, %s186
      %p195 = scmp.eq.s32.totalorder %s26, 3
      %p196 = por %p194, %p195
      %p197 = scmp.ne.s32.totalorder %s186, %s187
      %p198 = scmp.eq.s32.totalorder %s26, 0
      %p199 = por %p197, %p198
      %p200 = scmp.ne.s32.totalorder %s186, %s187
      %p201 = scmp.eq.s32.totalorder %s27, 3
      %p202 = por %p200, %p201
      %p204 = scmp.ne.s32.totalorder %s187, %s203
      %p205 = scmp.eq.s32.totalorder %s27, 0
      %p206 = por %p204, %p205
      %p207 = scmp.le.s32.totalorder 1, %s21
      %p208 = scmp.lt.s32.totalorder %s21, 5
      %p209 = pnand %p207, %p208
      %p210 = pneg %p209
      // Predicated region
      $region9: #{tpu_custom_call.1} parent=5 // pred_check
        _
      $region10: #{tpu_custom_call.1} parent=5 // pred_check_branch
        %212 = sbr.rel (%p209) target = $region12
      $region11: #{tpu_custom_call.1} parent=5 // pred_region
        %s213 = ssub.s32 %s21, 1
        // Predicated region
        $region13: #{tpu_custom_call.1} parent=11 // pred_check
          %p214 = pneg %p68
        $region14: #{tpu_custom_call.1} parent=11 // pred_check_branch
          %216 = sbr.rel (%p214) target = $region16
        $region15: #{tpu_custom_call.1} parent=11 // pred_region
          %s218 = ssub.s32 1024, 1024
          %219 = vsyncadd [#allocation6], %s218
          %s220 = sshll.u32 [#allocation5], 4
          %s221 = int_to_ptr.vmem [resolvable:$true] %s220
          %226 = dma.hbm_to_vmem [thread:$0]  %s1, 1024, %s221, [#allocation6], 64, 64, 4
        $region16: #{tpu_custom_call.1} parent=11 // pred_fallthru
          _
        // Predicated region
        $region17: #{tpu_custom_call.1} parent=11 // pred_check
          %p227 = pneg %p89
        $region18: #{tpu_custom_call.1} parent=11 // pred_check_branch
          %229 = sbr.rel (%p227) target = $region20
        $region19: #{tpu_custom_call.1} parent=11 // pred_region
          %s231 = ssub.s32 1024, 1024
          %232 = vsyncadd [#allocation6], %s231
          %s233 = sshll.u32 [#allocation7], 4
          %s234 = int_to_ptr.vmem [resolvable:$true] %s233
          %239 = dma.hbm_to_vmem [thread:$0]  %s2, 1024, %s234, [#allocation6], 64, 64, 4
        $region20: #{tpu_custom_call.1} parent=11 // pred_fallthru
          _
        // Predicated region
        $region21: #{tpu_custom_call.1} parent=11 // pred_check
          %p240 = pneg %p110
        $region22: #{tpu_custom_call.1} parent=11 // pred_check_branch
          %242 = sbr.rel (%p240) target = $region24
        $region23: #{tpu_custom_call.1} parent=11 // pred_region
          %s244 = ssub.s32 1024, 1024
          %245 = vsyncadd [#allocation9], %s244
          %s246 = sshll.u32 [#allocation8], 4
          %s247 = int_to_ptr.vmem [resolvable:$true] %s246
          %252 = dma.hbm_to_vmem [thread:$0]  %s3, 1024, %s247, [#allocation9], 64, 64, 4
        $region24: #{tpu_custom_call.1} parent=11 // pred_fallthru
          _
        // Predicated region
        $region25: #{tpu_custom_call.1} parent=11 // pred_check
          %p253 = pneg %p131
        $region26: #{tpu_custom_call.1} parent=11 // pred_check_branch
          %255 = sbr.rel (%p253) target = $region28
        $region27: #{tpu_custom_call.1} parent=11 // pred_region
          _
        $region28: #{tpu_custom_call.1} parent=11 // pred_fallthru
          _
        // Predicated region
        $region29: #{tpu_custom_call.1} parent=11 // pred_check
          %p256 = pneg %p152
        $region30: #{tpu_custom_call.1} parent=11 // pred_check_branch
          %258 = sbr.rel (%p256) target = $region32
        $region31: #{tpu_custom_call.1} parent=11 // pred_region
          _
        $region32: #{tpu_custom_call.1} parent=11 // pred_fallthru
          _
        // Predicated region
        $region33: #{tpu_custom_call.1} parent=11 // pred_check
          %p259 = pneg %p173
        $region34: #{tpu_custom_call.1} parent=11 // pred_check_branch
          %261 = sbr.rel (%p259) target = $region36
        $region35: #{tpu_custom_call.1} parent=11 // pred_region
          _
        $region36: #{tpu_custom_call.1} parent=11 // pred_fallthru
          _
      $region12: #{tpu_custom_call.1} parent=5 // pred_fallthru
        _
      %p262 = scmp.lt.s32.totalorder %s21, 4
      // Predicated region
      $region37: #{tpu_custom_call.1} parent=5 // pred_check
        %p263 = pneg %p262
      $region38: #{tpu_custom_call.1} parent=5 // pred_check_branch
        %265 = sbr.rel (%p263) target = $region40
      $region39: #{tpu_custom_call.1} parent=5 // pred_region
        // Predicated region
        $region41: #{tpu_custom_call.1} parent=39 // pred_check
          %p266 = pneg %p41
        $region42: #{tpu_custom_call.1} parent=39 // pred_check_branch
          %268 = sbr.rel (%p266) target = $region44
        $region43: #{tpu_custom_call.1} parent=39 // pred_region
          %s269 = sand.u32 %s31, 1
          %s270 = scalar_lea.sflag [#allocation3], %s269
          %s271 = sand.u32 %s31, 1
          %s272 = smul.addr %s271, 256
          %s273 = scalar_lea.vmem [#allocation2], %s272
          %s274 = smul.u32 32, %s21
          %s276 = ssub.s32 4096, 4096
          %277 = vsyncadd %s270, %s276
          %s278 = smul.addr %s274, 128
          %s279 = scalar_lea.hbm %s0, %s278
          %s280 = sshll.u32 %s273, 4
          %s281 = int_to_ptr.vmem [resolvable:$true] %s280
          %286 = dma.hbm_to_vmem [thread:$0]  %s279, 4096, %s281, %s270, 128, 128, 8
        $region44: #{tpu_custom_call.1} parent=39 // pred_fallthru
          _
      $region40: #{tpu_custom_call.1} parent=5 // pred_fallthru
        _
      %p287 = scmp.le.s32.totalorder 1, %s21
      %p288 = scmp.lt.s32.totalorder %s21, 5
      %p289 = pnand %p287, %p288
      %p290 = pneg %p289
      // Predicated region
      $region45: #{tpu_custom_call.1} parent=5 // pred_check
        _
      $region46: #{tpu_custom_call.1} parent=5 // pred_check_branch
        %292 = sbr.rel (%p289) target = $region48
      $region47: #{tpu_custom_call.1} parent=5 // pred_region
        %s293 = ssub.s32 %s21, 1
        %s294 = sand.u32 %s34, 1
        %s295 = scalar_lea.sflag [#allocation3], %s294
        %s296 = sand.u32 %s34, 1
        %s297 = smul.addr %s296, 256
        %s298 = scalar_lea.vmem [#allocation2], %s297
        // Predicated region
        $region49: #{tpu_custom_call.1} parent=47 // pred_check
          %p299 = pneg %p47
        $region50: #{tpu_custom_call.1} parent=47 // pred_check_branch
          %301 = sbr.rel (%p299) target = $region52
        $region51: #{tpu_custom_call.1} parent=47 // pred_region
          %302 = dma.done %s295, 4096
        $region52: #{tpu_custom_call.1} parent=47 // pred_fallthru
          _
        // Predicated region
        $region53: #{tpu_custom_call.1} parent=47 // pred_check
          %p303 = pneg %p68
        $region54: #{tpu_custom_call.1} parent=47 // pred_check_branch
          %305 = sbr.rel (%p303) target = $region56
        $region55: #{tpu_custom_call.1} parent=47 // pred_region
          %306 = dma.done [#allocation6], 1024
        $region56: #{tpu_custom_call.1} parent=47 // pred_fallthru
          _
        // Predicated region
        $region57: #{tpu_custom_call.1} parent=47 // pred_check
          %p307 = pneg %p89
        $region58: #{tpu_custom_call.1} parent=47 // pred_check_branch
          %309 = sbr.rel (%p307) target = $region60
        $region59: #{tpu_custom_call.1} parent=47 // pred_region
          %310 = dma.done [#allocation6], 1024
        $region60: #{tpu_custom_call.1} parent=47 // pred_fallthru
          _
        // Predicated region
        $region61: #{tpu_custom_call.1} parent=47 // pred_check
          %p311 = pneg %p110
        $region62: #{tpu_custom_call.1} parent=47 // pred_check_branch
          %313 = sbr.rel (%p311) target = $region64
        $region63: #{tpu_custom_call.1} parent=47 // pred_region
          %314 = dma.done [#allocation9], 1024
        $region64: #{tpu_custom_call.1} parent=47 // pred_fallthru
          _
        %s315 = sand.u32 %s34, 1
        %s316 = scalar_lea.sflag [#allocation3], %s315
        %s317 = sand.u32 %s34, 1
        %s318 = smul.addr %s317, 256
        %s319 = scalar_lea.vmem [#allocation2], %s318
        %p320 = pneg %p47
        %p321 = pneg %p44
        %p322 = pneg %p68
        %p323 = pneg %p65
        %p324 = pneg %p89
        %p325 = pneg %p86
        %p326 = pneg %p110
        %p327 = pneg %p107
        %p328 = pneg %p131
        %p329 = pneg %p128
        %p330 = pneg %p152
        %p331 = pneg %p149
        %p332 = pneg %p173
        %p333 = pneg %p170
        %p334 = pneg %p199
        %p335 = pneg %p196
        %s336 = sand.u32 %s186, 1
        %s337 = scalar_lea.sflag [#allocation4], %s336
        %s338 = sand.u32 %s186, 1
        %s339 = smul.addr %s338, 256
        %s340 = scalar_lea.vmem [#allocation10], %s339
        %s341 = smul.u32 32, %s26
        %s342 = smul.u32 32, %s26
        %v344 = vld [vmem:[%s298] sm:$0xff]
        %v345 = vld [vmem:[%s298 + $0x8] sm:$0xff]
        %v346 = vld [vmem:[%s298 + $0x10] sm:$0xff]
        %v347 = vld [vmem:[%s298 + $0x18] sm:$0xff]
        %v348 = vld [vmem:[%s298 + $0x20] sm:$0xff]
        %v349 = vld [vmem:[%s298 + $0x28] sm:$0xff]
        %v350 = vld [vmem:[%s298 + $0x30] sm:$0xff]
        %v351 = vld [vmem:[%s298 + $0x38] sm:$0xff]
        %v352 = vld [vmem:[%s298 + $0x40] sm:$0xff]
        %v353 = vld [vmem:[%s298 + $0x48] sm:$0xff]
        %v354 = vld [vmem:[%s298 + $0x50] sm:$0xff]
        %v355 = vld [vmem:[%s298 + $0x58] sm:$0xff]
        %v356 = vld [vmem:[%s298 + $0x60] sm:$0xff]
        %v357 = vld [vmem:[%s298 + $0x68] sm:$0xff]
        %v358 = vld [vmem:[%s298 + $0x70] sm:$0xff]
        %v359 = vld [vmem:[%s298 + $0x78] sm:$0xff]
        %v360 = vld [vmem:[%s298 + $0x80] sm:$0xff]
        %v361 = vld [vmem:[%s298 + $0x88] sm:$0xff]
        %v362 = vld [vmem:[%s298 + $0x90] sm:$0xff]
        %v363 = vld [vmem:[%s298 + $0x98] sm:$0xff]
        %v364 = vld [vmem:[%s298 + $0xa0] sm:$0xff]
        %v365 = vld [vmem:[%s298 + $0xa8] sm:$0xff]
        %v366 = vld [vmem:[%s298 + $0xb0] sm:$0xff]
        %v367 = vld [vmem:[%s298 + $0xb8] sm:$0xff]
        %v368 = vld [vmem:[%s298 + $0xc0] sm:$0xff]
        %v369 = vld [vmem:[%s298 + $0xc8] sm:$0xff]
        %v370 = vld [vmem:[%s298 + $0xd0] sm:$0xff]
        %v371 = vld [vmem:[%s298 + $0xd8] sm:$0xff]
        %v372 = vld [vmem:[%s298 + $0xe0] sm:$0xff]
        %v373 = vld [vmem:[%s298 + $0xe8] sm:$0xff]
        %v374 = vld [vmem:[%s298 + $0xf0] sm:$0xff]
        %v375 = vld [vmem:[%s298 + $0xf8] sm:$0xff]
        %v376 = vpack.c.bf16 %v345, %v344
        %v377 = vpack.c.bf16 %v347, %v346
        %v378 = vpack.c.bf16 %v349, %v348
        %v379 = vpack.c.bf16 %v351, %v350
        %v380 = vpack.c.bf16 %v353, %v352
        %v381 = vpack.c.bf16 %v355, %v354
        %v382 = vpack.c.bf16 %v357, %v356
        %v383 = vpack.c.bf16 %v359, %v358
        %v384 = vpack.c.bf16 %v361, %v360
        %v385 = vpack.c.bf16 %v363, %v362
        %v386 = vpack.c.bf16 %v365, %v364
        %v387 = vpack.c.bf16 %v367, %v366
        %v388 = vpack.c.bf16 %v369, %v368
        %v389 = vpack.c.bf16 %v371, %v370
        %v390 = vpack.c.bf16 %v373, %v372
        %v391 = vpack.c.bf16 %v375, %v374
        %v392 = vld [vmem:[#allocation5] sm:$0xf]
        %v393 = vld [vmem:[#allocation5 + $0x4] sm:$0xf]
        %v394 = vld [vmem:[#allocation5 + $0x8] sm:$0xf]
        %v395 = vld [vmem:[#allocation5 + $0xc] sm:$0xf]
        %v396 = vld [vmem:[#allocation5 + $0x10] sm:$0xf]
        %v397 = vld [vmem:[#allocation5 + $0x14] sm:$0xf]
        %v398 = vld [vmem:[#allocation5 + $0x18] sm:$0xf]
        %v399 = vld [vmem:[#allocation5 + $0x1c] sm:$0xf]
        %v400 = vld [vmem:[#allocation5 + $0x20] sm:$0xf]
        %v401 = vld [vmem:[#allocation5 + $0x24] sm:$0xf]
        %v402 = vld [vmem:[#allocation5 + $0x28] sm:$0xf]
        %v403 = vld [vmem:[#allocation5 + $0x2c] sm:$0xf]
        %v404 = vld [vmem:[#allocation5 + $0x30] sm:$0xf]
        %v405 = vld [vmem:[#allocation5 + $0x34] sm:$0xf]
        %v406 = vld [vmem:[#allocation5 + $0x38] sm:$0xf]
        %v407 = vld [vmem:[#allocation5 + $0x3c] sm:$0xf]
        %v408 = vld [vmem:[%s4] sm:$0x1]
        %v410 = vlaneseq
        %v411 = vshrl.u32 %v410, 7
        %v412 = vsub.s32 0, %v411
        %v413 = vrot.slane %v408, %v412
        %v431 = vunpack.c.l.b16 %v392
        %v432 = vunpack.c.l.b16 %v393
        %v433 = vunpack.c.l.b16 %v394
        %v434 = vunpack.c.l.b16 %v395
        %v435 = vunpack.c.l.b16 %v396
        %v436 = vunpack.c.l.b16 %v397
        %v437 = vunpack.c.l.b16 %v398
        %v438 = vunpack.c.l.b16 %v399
        %v439 = vunpack.c.l.b16 %v400
        %v440 = vunpack.c.l.b16 %v401
        %v441 = vunpack.c.l.b16 %v402
        %v442 = vunpack.c.l.b16 %v403
        %v443 = vunpack.c.l.b16 %v404
        %v444 = vunpack.c.l.b16 %v405
        %v445 = vunpack.c.l.b16 %v406
        %v446 = vunpack.c.l.b16 %v407
        %v447 = vpack.c.b16 %v432, %v431
        %v448 = vpack.c.b16 %v434, %v433
        %v449 = vpack.c.b16 %v436, %v435
        %v450 = vpack.c.b16 %v438, %v437
        %v451 = vpack.c.b16 %v440, %v439
        %v452 = vpack.c.b16 %v442, %v441
        %v453 = vpack.c.b16 %v444, %v443
        %v454 = vpack.c.b16 %v446, %v445
        %463 = vmatprep.subr.bf16.mxu0 0
        %464 = vmatpush1.bf16.msra.mxu0 %v454
        %465 = vmatprep.subr.bf16.mxu0 0
        %466 = vmatpush1.bf16.msra.mxu0 %v453
        %467 = vmatprep.subr.bf16.mxu0 0
        %468 = vmatpush1.bf16.msra.mxu0 %v452
        %469 = vmatprep.subr.bf16.mxu0 0
        %470 = vmatpush1.bf16.msra.mxu0 %v451
        %471 = vmatprep.subr.bf16.mxu0 0
        %472 = vmatpush1.bf16.msra.mxu0 %v450
        %473 = vmatprep.subr.bf16.mxu0 0
        %474 = vmatpush1.bf16.msra.mxu0 %v449
        %475 = vmatprep.subr.bf16.mxu0 0
        %476 = vmatpush1.bf16.msra.mxu0 %v448
        %477 = vmatprep.subr.bf16.mxu0 0
        %478 = vmatpush1.bf16.msra.mxu0 %v447
        %479 = vmatprep.subr.bf16.mxu0 0
        %480 = vmatpush2.bf16.msra.mxu0 0
        %481 = vmatprep.subr.bf16.mxu0 0
        %482 = vmatpush2.bf16.msra.mxu0 0
        %483 = vmatprep.subr.bf16.mxu0 0
        %484 = vmatpush2.bf16.msra.mxu0 0
        %485 = vmatprep.subr.bf16.mxu0 0
        %486 = vmatpush2.bf16.msra.mxu0 0
        %487 = vmatprep.subr.bf16.mxu0 0
        %488 = vmatpush2.bf16.msra.mxu0 0
        %489 = vmatprep.subr.bf16.mxu0 0
        %490 = vmatpush2.bf16.msra.mxu0 0
        %491 = vmatprep.subr.bf16.mxu0 0
        %492 = vmatpush2.bf16.msra.mxu0 0
        %493 = vmatprep.subr.bf16.mxu0 0
        %494 = vmatpush2.bf16.msra.mxu0 0
        %495 = vmatprep.mubr.bf16.mxu0 0
        %496 = vmatmul.mubr.bf16.gmra.mxu0 %v376
        %v497 = vpop.f32.mrf.mxu0
        %v498 = vadd.f32 %v413, %v497
        %v499 = vpop.f32.mrf.mxu0
        %v500 = vpop.f32.mrf.mxu0
        %v501 = vadd.f32 %v413, %v500
        %v502 = vpop.f32.mrf.mxu0
        %503 = vmatprep.mubr.bf16.mxu0 0
        %504 = vmatmul.mubr.bf16.gmra.mxu0 %v377
        %v505 = vpop.f32.mrf.mxu0
        %v506 = vadd.f32 %v413, %v505
        %v507 = vpop.f32.mrf.mxu0
        %v508 = vpop.f32.mrf.mxu0
        %v509 = vadd.f32 %v413, %v508
        %v510 = vpop.f32.mrf.mxu0
        %511 = vmatprep.mubr.bf16.mxu0 0
        %512 = vmatmul.mubr.bf16.gmra.mxu0 %v378
        %v513 = vpop.f32.mrf.mxu0
        %v514 = vadd.f32 %v413, %v513
        %v515 = vpop.f32.mrf.mxu0
        %v516 = vpop.f32.mrf.mxu0
        %v517 = vadd.f32 %v413, %v516
        %v518 = vpop.f32.mrf.mxu0
        %519 = vmatprep.mubr.bf16.mxu0 0
        %520 = vmatmul.mubr.bf16.gmra.mxu0 %v379
        %v521 = vpop.f32.mrf.mxu0
        %v522 = vadd.f32 %v413, %v521
        %v523 = vpop.f32.mrf.mxu0
        %v524 = vpop.f32.mrf.mxu0
        %v525 = vadd.f32 %v413, %v524
        %v526 = vpop.f32.mrf.mxu0
        %527 = vmatprep.mubr.bf16.mxu0 0
        %528 = vmatmul.mubr.bf16.gmra.mxu0 %v380
        %v529 = vpop.f32.mrf.mxu0
        %v530 = vadd.f32 %v413, %v529
        %v531 = vpop.f32.mrf.mxu0
        %v532 = vpop.f32.mrf.mxu0
        %v533 = vadd.f32 %v413, %v532
        %v534 = vpop.f32.mrf.mxu0
        %535 = vmatprep.mubr.bf16.mxu0 0
        %536 = vmatmul.mubr.bf16.gmra.mxu0 %v381
        %v537 = vpop.f32.mrf.mxu0
        %v538 = vadd.f32 %v413, %v537
        %v539 = vpop.f32.mrf.mxu0
        %v540 = vpop.f32.mrf.mxu0
        %v541 = vadd.f32 %v413, %v540
        %v542 = vpop.f32.mrf.mxu0
        %543 = vmatprep.mubr.bf16.mxu0 0
        %544 = vmatmul.mubr.bf16.gmra.mxu0 %v382
        %v545 = vpop.f32.mrf.mxu0
        %v546 = vadd.f32 %v413, %v545
        %v547 = vpop.f32.mrf.mxu0
        %v548 = vpop.f32.mrf.mxu0
        %v549 = vadd.f32 %v413, %v548
        %v550 = vpop.f32.mrf.mxu0
        %551 = vmatprep.mubr.bf16.mxu0 0
        %552 = vmatmul.mubr.bf16.gmra.mxu0 %v383
        %v553 = vpop.f32.mrf.mxu0
        %v554 = vadd.f32 %v413, %v553
        %v555 = vpop.f32.mrf.mxu0
        %v556 = vpop.f32.mrf.mxu0
        %v557 = vadd.f32 %v413, %v556
        %v558 = vpop.f32.mrf.mxu0
        %559 = vmatprep.mubr.bf16.mxu0 0
        %560 = vmatmul.mubr.bf16.gmra.mxu0 %v384
        %v561 = vpop.f32.mrf.mxu0
        %v562 = vadd.f32 %v413, %v561
        %v563 = vpop.f32.mrf.mxu0
        %v564 = vpop.f32.mrf.mxu0
        %v565 = vadd.f32 %v413, %v564
        %v566 = vpop.f32.mrf.mxu0
        %567 = vmatprep.mubr.bf16.mxu0 0
        %568 = vmatmul.mubr.bf16.gmra.mxu0 %v385
        %v569 = vpop.f32.mrf.mxu0
        %v570 = vadd.f32 %v413, %v569
        %v571 = vpop.f32.mrf.mxu0
        %v572 = vpop.f32.mrf.mxu0
        %v573 = vadd.f32 %v413, %v572
        %v574 = vpop.f32.mrf.mxu0
        %575 = vmatprep.mubr.bf16.mxu0 0
        %576 = vmatmul.mubr.bf16.gmra.mxu0 %v386
        %v577 = vpop.f32.mrf.mxu0
        %v578 = vadd.f32 %v413, %v577
        %v579 = vpop.f32.mrf.mxu0
        %v580 = vpop.f32.mrf.mxu0
        %v581 = vadd.f32 %v413, %v580
        %v582 = vpop.f32.mrf.mxu0
        %583 = vmatprep.mubr.bf16.mxu0 0
        %584 = vmatmul.mubr.bf16.gmra.mxu0 %v387
        %v585 = vpop.f32.mrf.mxu0
        %v586 = vadd.f32 %v413, %v585
        %v587 = vpop.f32.mrf.mxu0
        %v588 = vpop.f32.mrf.mxu0
        %v589 = vadd.f32 %v413, %v588
        %v590 = vpop.f32.mrf.mxu0
        %591 = vmatprep.mubr.bf16.mxu0 0
        %592 = vmatmul.mubr.bf16.gmra.mxu0 %v388
        %v593 = vpop.f32.mrf.mxu0
        %v594 = vadd.f32 %v413, %v593
        %v595 = vpop.f32.mrf.mxu0
        %v596 = vpop.f32.mrf.mxu0
        %v597 = vadd.f32 %v413, %v596
        %v598 = vpop.f32.mrf.mxu0
        %599 = vmatprep.mubr.bf16.mxu0 0
        %600 = vmatmul.mubr.bf16.gmra.mxu0 %v389
        %v601 = vpop.f32.mrf.mxu0
        %v602 = vadd.f32 %v413, %v601
        %v603 = vpop.f32.mrf.mxu0
        %v604 = vpop.f32.mrf.mxu0
        %v605 = vadd.f32 %v413, %v604
        %v606 = vpop.f32.mrf.mxu0
        %607 = vmatprep.mubr.bf16.mxu0 0
        %608 = vmatmul.mubr.bf16.gmra.mxu0 %v390
        %v609 = vpop.f32.mrf.mxu0
        %v610 = vadd.f32 %v413, %v609
        %v611 = vpop.f32.mrf.mxu0
        %v612 = vpop.f32.mrf.mxu0
        %v613 = vadd.f32 %v413, %v612
        %v614 = vpop.f32.mrf.mxu0
        %615 = vmatprep.mubr.bf16.mxu0 0
        %616 = vmatmul.mubr.bf16.gmra.mxu0 %v391
        %v617 = vpop.f32.mrf.mxu0
        %v618 = vadd.f32 %v413, %v617
        %v619 = vpop.f32.mrf.mxu0
        %v620 = vpop.f32.mrf.mxu0
        %v621 = vadd.f32 %v413, %v620
        %v622 = vpop.f32.mrf.mxu0
        %623 = vdwg.mxu0
        %v624 = vmul.f32 %v498, 0.0078125
        %v625 = vmul.f32 %v501, 0.0078125
        %v626 = vmul.f32 %v506, 0.0078125
        %v627 = vmul.f32 %v509, 0.0078125
        %v628 = vmul.f32 %v514, 0.0078125
        %v629 = vmul.f32 %v517, 0.0078125
        %v630 = vmul.f32 %v522, 0.0078125
        %v631 = vmul.f32 %v525, 0.0078125
        %v632 = vmul.f32 %v530, 0.0078125
        %v633 = vmul.f32 %v533, 0.0078125
        %v634 = vmul.f32 %v538, 0.0078125
        %v635 = vmul.f32 %v541, 0.0078125
        %v636 = vmul.f32 %v546, 0.0078125
        %v637 = vmul.f32 %v549, 0.0078125
        %v638 = vmul.f32 %v554, 0.0078125
        %v639 = vmul.f32 %v557, 0.0078125
        %v640 = vmul.f32 %v562, 0.0078125
        %v641 = vmul.f32 %v565, 0.0078125
        %v642 = vmul.f32 %v570, 0.0078125
        %v643 = vmul.f32 %v573, 0.0078125
        %v644 = vmul.f32 %v578, 0.0078125
        %v645 = vmul.f32 %v581, 0.0078125
        %v646 = vmul.f32 %v586, 0.0078125
        %v647 = vmul.f32 %v589, 0.0078125
        %v648 = vmul.f32 %v594, 0.0078125
        %v649 = vmul.f32 %v597, 0.0078125
        %v650 = vmul.f32 %v602, 0.0078125
        %v651 = vmul.f32 %v605, 0.0078125
        %v652 = vmul.f32 %v610, 0.0078125
        %v653 = vmul.f32 %v613, 0.0078125
        %v654 = vmul.f32 %v618, 0.0078125
        %v655 = vmul.f32 %v621, 0.0078125
        %v656 = vld [vmem:[#allocation7] sm:$0xf]
        %v657 = vld [vmem:[#allocation7 + $0x4] sm:$0xf]
        %v658 = vld [vmem:[#allocation7 + $0x8] sm:$0xf]
        %v659 = vld [vmem:[#allocation7 + $0xc] sm:$0xf]
        %v660 = vld [vmem:[#allocation7 + $0x10] sm:$0xf]
        %v661 = vld [vmem:[#allocation7 + $0x14] sm:$0xf]
        %v662 = vld [vmem:[#allocation7 + $0x18] sm:$0xf]
        %v663 = vld [vmem:[#allocation7 + $0x1c] sm:$0xf]
        %v664 = vld [vmem:[#allocation7 + $0x20] sm:$0xf]
        %v665 = vld [vmem:[#allocation7 + $0x24] sm:$0xf]
        %v666 = vld [vmem:[#allocation7 + $0x28] sm:$0xf]
        %v667 = vld [vmem:[#allocation7 + $0x2c] sm:$0xf]
        %v668 = vld [vmem:[#allocation7 + $0x30] sm:$0xf]
        %v669 = vld [vmem:[#allocation7 + $0x34] sm:$0xf]
        %v670 = vld [vmem:[#allocation7 + $0x38] sm:$0xf]
        %v671 = vld [vmem:[#allocation7 + $0x3c] sm:$0xf]
        %v672 = vld [vmem:[%s5] sm:$0x1]
        %v674 = vlaneseq
        %v675 = vshrl.u32 %v674, 7
        %v676 = vsub.s32 0, %v675
        %v677 = vrot.slane %v672, %v676
        %v695 = vunpack.c.l.b16 %v656
        %v696 = vunpack.c.l.b16 %v657
        %v697 = vunpack.c.l.b16 %v658
        %v698 = vunpack.c.l.b16 %v659
        %v699 = vunpack.c.l.b16 %v660
        %v700 = vunpack.c.l.b16 %v661
        %v701 = vunpack.c.l.b16 %v662
        %v702 = vunpack.c.l.b16 %v663
        %v703 = vunpack.c.l.b16 %v664
        %v704 = vunpack.c.l.b16 %v665
        %v705 = vunpack.c.l.b16 %v666
        %v706 = vunpack.c.l.b16 %v667
        %v707 = vunpack.c.l.b16 %v668
        %v708 = vunpack.c.l.b16 %v669
        %v709 = vunpack.c.l.b16 %v670
        %v710 = vunpack.c.l.b16 %v671
        %v711 = vpack.c.b16 %v696, %v695
        %v712 = vpack.c.b16 %v698, %v697
        %v713 = vpack.c.b16 %v700, %v699
        %v714 = vpack.c.b16 %v702, %v701
        %v715 = vpack.c.b16 %v704, %v703
        %v716 = vpack.c.b16 %v706, %v705
        %v717 = vpack.c.b16 %v708, %v707
        %v718 = vpack.c.b16 %v710, %v709
        %727 = vmatprep.subr.bf16.mxu0 0
        %728 = vmatpush1.bf16.msra.mxu0 %v718
        %729 = vmatprep.subr.bf16.mxu0 0
        %730 = vmatpush1.bf16.msra.mxu0 %v717
        %731 = vmatprep.subr.bf16.mxu0 0
        %732 = vmatpush1.bf16.msra.mxu0 %v716
        %733 = vmatprep.subr.bf16.mxu0 0
        %734 = vmatpush1.bf16.msra.mxu0 %v715
        %735 = vmatprep.subr.bf16.mxu0 0
        %736 = vmatpush1.bf16.msra.mxu0 %v714
        %737 = vmatprep.subr.bf16.mxu0 0
        %738 = vmatpush1.bf16.msra.mxu0 %v713
        %739 = vmatprep.subr.bf16.mxu0 0
        %740 = vmatpush1.bf16.msra.mxu0 %v712
        %741 = vmatprep.subr.bf16.mxu0 0
        %742 = vmatpush1.bf16.msra.mxu0 %v711
        %743 = vmatprep.subr.bf16.mxu0 0
        %744 = vmatpush2.bf16.msra.mxu0 0
        %745 = vmatprep.subr.bf16.mxu0 0
        %746 = vmatpush2.bf16.msra.mxu0 0
        %747 = vmatprep.subr.bf16.mxu0 0
        %748 = vmatpush2.bf16.msra.mxu0 0
        %749 = vmatprep.subr.bf16.mxu0 0
        %750 = vmatpush2.bf16.msra.mxu0 0
        %751 = vmatprep.subr.bf16.mxu0 0
        %752 = vmatpush2.bf16.msra.mxu0 0
        %753 = vmatprep.subr.bf16.mxu0 0
        %754 = vmatpush2.bf16.msra.mxu0 0
        %755 = vmatprep.subr.bf16.mxu0 0
        %756 = vmatpush2.bf16.msra.mxu0 0
        %757 = vmatprep.subr.bf16.mxu0 0
        %758 = vmatpush2.bf16.msra.mxu0 0
        %759 = vmatprep.mubr.bf16.mxu0 0
        %760 = vmatmul.mubr.bf16.gmra.mxu0 %v376
        %v761 = vpop.f32.mrf.mxu0
        %v762 = vadd.f32 %v677, %v761
        %v763 = vpop.f32.mrf.mxu0
        %v764 = vpop.f32.mrf.mxu0
        %v765 = vadd.f32 %v677, %v764
        %v766 = vpop.f32.mrf.mxu0
        %767 = vmatprep.mubr.bf16.mxu0 0
        %768 = vmatmul.mubr.bf16.gmra.mxu0 %v377
        %v769 = vpop.f32.mrf.mxu0
        %v770 = vadd.f32 %v677, %v769
        %v771 = vpop.f32.mrf.mxu0
        %v772 = vpop.f32.mrf.mxu0
        %v773 = vadd.f32 %v677, %v772
        %v774 = vpop.f32.mrf.mxu0
        %775 = vmatprep.mubr.bf16.mxu0 0
        %776 = vmatmul.mubr.bf16.gmra.mxu0 %v378
        %v777 = vpop.f32.mrf.mxu0
        %v778 = vadd.f32 %v677, %v777
        %v779 = vpop.f32.mrf.mxu0
        %v780 = vpop.f32.mrf.mxu0
        %v781 = vadd.f32 %v677, %v780
        %v782 = vpop.f32.mrf.mxu0
        %783 = vmatprep.mubr.bf16.mxu0 0
        %784 = vmatmul.mubr.bf16.gmra.mxu0 %v379
        %v785 = vpop.f32.mrf.mxu0
        %v786 = vadd.f32 %v677, %v785
        %v787 = vpop.f32.mrf.mxu0
        %v788 = vpop.f32.mrf.mxu0
        %v789 = vadd.f32 %v677, %v788
        %v790 = vpop.f32.mrf.mxu0
        %791 = vmatprep.mubr.bf16.mxu0 0
        %792 = vmatmul.mubr.bf16.gmra.mxu0 %v380
        %v793 = vpop.f32.mrf.mxu0
        %v794 = vadd.f32 %v677, %v793
        %v795 = vpop.f32.mrf.mxu0
        %v796 = vpop.f32.mrf.mxu0
        %v797 = vadd.f32 %v677, %v796
        %v798 = vpop.f32.mrf.mxu0
        %799 = vmatprep.mubr.bf16.mxu0 0
        %800 = vmatmul.mubr.bf16.gmra.mxu0 %v381
        %v801 = vpop.f32.mrf.mxu0
        %v802 = vadd.f32 %v677, %v801
        %v803 = vpop.f32.mrf.mxu0
        %v804 = vpop.f32.mrf.mxu0
        %v805 = vadd.f32 %v677, %v804
        %v806 = vpop.f32.mrf.mxu0
        %807 = vmatprep.mubr.bf16.mxu0 0
        %808 = vmatmul.mubr.bf16.gmra.mxu0 %v382
        %v809 = vpop.f32.mrf.mxu0
        %v810 = vadd.f32 %v677, %v809
        %v811 = vpop.f32.mrf.mxu0
        %v812 = vpop.f32.mrf.mxu0
        %v813 = vadd.f32 %v677, %v812
        %v814 = vpop.f32.mrf.mxu0
        %815 = vmatprep.mubr.bf16.mxu0 0
        %816 = vmatmul.mubr.bf16.gmra.mxu0 %v383
        %v817 = vpop.f32.mrf.mxu0
        %v818 = vadd.f32 %v677, %v817
        %v819 = vpop.f32.mrf.mxu0
        %v820 = vpop.f32.mrf.mxu0
        %v821 = vadd.f32 %v677, %v820
        %v822 = vpop.f32.mrf.mxu0
        %823 = vmatprep.mubr.bf16.mxu0 0
        %824 = vmatmul.mubr.bf16.gmra.mxu0 %v384
        %v825 = vpop.f32.mrf.mxu0
        %v826 = vadd.f32 %v677, %v825
        %v827 = vpop.f32.mrf.mxu0
        %v828 = vpop.f32.mrf.mxu0
        %v829 = vadd.f32 %v677, %v828
        %v830 = vpop.f32.mrf.mxu0
        %831 = vmatprep.mubr.bf16.mxu0 0
        %832 = vmatmul.mubr.bf16.gmra.mxu0 %v385
        %v833 = vpop.f32.mrf.mxu0
        %v834 = vadd.f32 %v677, %v833
        %v835 = vpop.f32.mrf.mxu0
        %v836 = vpop.f32.mrf.mxu0
        %v837 = vadd.f32 %v677, %v836
        %v838 = vpop.f32.mrf.mxu0
        %839 = vmatprep.mubr.bf16.mxu0 0
        %840 = vmatmul.mubr.bf16.gmra.mxu0 %v386
        %v841 = vpop.f32.mrf.mxu0
        %v842 = vadd.f32 %v677, %v841
        %v843 = vpop.f32.mrf.mxu0
        %v844 = vpop.f32.mrf.mxu0
        %v845 = vadd.f32 %v677, %v844
        %v846 = vpop.f32.mrf.mxu0
        %847 = vmatprep.mubr.bf16.mxu0 0
        %848 = vmatmul.mubr.bf16.gmra.mxu0 %v387
        %v849 = vpop.f32.mrf.mxu0
        %v850 = vadd.f32 %v677, %v849
        %v851 = vpop.f32.mrf.mxu0
        %v852 = vpop.f32.mrf.mxu0
        %v853 = vadd.f32 %v677, %v852
        %v854 = vpop.f32.mrf.mxu0
        %855 = vmatprep.mubr.bf16.mxu0 0
        %856 = vmatmul.mubr.bf16.gmra.mxu0 %v388
        %v857 = vpop.f32.mrf.mxu0
        %v858 = vadd.f32 %v677, %v857
        %v859 = vpop.f32.mrf.mxu0
        %v860 = vpop.f32.mrf.mxu0
        %v861 = vadd.f32 %v677, %v860
        %v862 = vpop.f32.mrf.mxu0
        %863 = vmatprep.mubr.bf16.mxu0 0
        %864 = vmatmul.mubr.bf16.gmra.mxu0 %v389
        %v865 = vpop.f32.mrf.mxu0
        %v866 = vadd.f32 %v677, %v865
        %v867 = vpop.f32.mrf.mxu0
        %v868 = vpop.f32.mrf.mxu0
        %v869 = vadd.f32 %v677, %v868
        %v870 = vpop.f32.mrf.mxu0
        %871 = vmatprep.mubr.bf16.mxu0 0
        %872 = vmatmul.mubr.bf16.gmra.mxu0 %v390
        %v873 = vpop.f32.mrf.mxu0
        %v874 = vadd.f32 %v677, %v873
        %v875 = vpop.f32.mrf.mxu0
        %v876 = vpop.f32.mrf.mxu0
        %v877 = vadd.f32 %v677, %v876
        %v878 = vpop.f32.mrf.mxu0
        %879 = vmatprep.mubr.bf16.mxu0 0
        %880 = vmatmul.mubr.bf16.gmra.mxu0 %v391
        %v881 = vpop.f32.mrf.mxu0
        %v882 = vadd.f32 %v677, %v881
        %v883 = vpop.f32.mrf.mxu0
        %v884 = vpop.f32.mrf.mxu0
        %v885 = vadd.f32 %v677, %v884
        %v886 = vpop.f32.mrf.mxu0
        %887 = vdwg.mxu0
        %v888 = vld [vmem:[#allocation8] sm:$0xf]
        %v889 = vld [vmem:[#allocation8 + $0x4] sm:$0xf]
        %v890 = vld [vmem:[#allocation8 + $0x8] sm:$0xf]
        %v891 = vld [vmem:[#allocation8 + $0xc] sm:$0xf]
        %v892 = vld [vmem:[#allocation8 + $0x10] sm:$0xf]
        %v893 = vld [vmem:[#allocation8 + $0x14] sm:$0xf]
        %v894 = vld [vmem:[#allocation8 + $0x18] sm:$0xf]
        %v895 = vld [vmem:[#allocation8 + $0x1c] sm:$0xf]
        %v896 = vld [vmem:[#allocation8 + $0x20] sm:$0xf]
        %v897 = vld [vmem:[#allocation8 + $0x24] sm:$0xf]
        %v898 = vld [vmem:[#allocation8 + $0x28] sm:$0xf]
        %v899 = vld [vmem:[#allocation8 + $0x2c] sm:$0xf]
        %v900 = vld [vmem:[#allocation8 + $0x30] sm:$0xf]
        %v901 = vld [vmem:[#allocation8 + $0x34] sm:$0xf]
        %v902 = vld [vmem:[#allocation8 + $0x38] sm:$0xf]
        %v903 = vld [vmem:[#allocation8 + $0x3c] sm:$0xf]
        %v904 = vld [vmem:[%s6] sm:$0x1]
        %v906 = vlaneseq
        %v907 = vshrl.u32 %v906, 7
        %v908 = vsub.s32 0, %v907
        %v909 = vrot.slane %v904, %v908
        %v927 = vunpack.c.l.b16 %v888
        %v928 = vunpack.c.l.b16 %v889
        %v929 = vunpack.c.l.b16 %v890
        %v930 = vunpack.c.l.b16 %v891
        %v931 = vunpack.c.l.b16 %v892
        %v932 = vunpack.c.l.b16 %v893
        %v933 = vunpack.c.l.b16 %v894
        %v934 = vunpack.c.l.b16 %v895
        %v935 = vunpack.c.l.b16 %v896
        %v936 = vunpack.c.l.b16 %v897
        %v937 = vunpack.c.l.b16 %v898
        %v938 = vunpack.c.l.b16 %v899
        %v939 = vunpack.c.l.b16 %v900
        %v940 = vunpack.c.l.b16 %v901
        %v941 = vunpack.c.l.b16 %v902
        %v942 = vunpack.c.l.b16 %v903
        %v943 = vpack.c.b16 %v928, %v927
        %v944 = vpack.c.b16 %v930, %v929
        %v945 = vpack.c.b16 %v932, %v931
        %v946 = vpack.c.b16 %v934, %v933
        %v947 = vpack.c.b16 %v936, %v935
        %v948 = vpack.c.b16 %v938, %v937
        %v949 = vpack.c.b16 %v940, %v939
        %v950 = vpack.c.b16 %v942, %v941
        %959 = vmatprep.subr.bf16.mxu0 0
        %960 = vmatpush1.bf16.msra.mxu0 %v950
        %961 = vmatprep.subr.bf16.mxu0 0
        %962 = vmatpush1.bf16.msra.mxu0 %v949
        %963 = vmatprep.subr.bf16.mxu0 0
        %964 = vmatpush1.bf16.msra.mxu0 %v948
        %965 = vmatprep.subr.bf16.mxu0 0
        %966 = vmatpush1.bf16.msra.mxu0 %v947
        %967 = vmatprep.subr.bf16.mxu0 0
        %968 = vmatpush1.bf16.msra.mxu0 %v946
        %969 = vmatprep.subr.bf16.mxu0 0
        %970 = vmatpush1.bf16.msra.mxu0 %v945
        %971 = vmatprep.subr.bf16.mxu0 0
        %972 = vmatpush1.bf16.msra.mxu0 %v944
        %973 = vmatprep.subr.bf16.mxu0 0
        %974 = vmatpush1.bf16.msra.mxu0 %v943
        %975 = vmatprep.subr.bf16.mxu0 0
        %976 = vmatpush2.bf16.msra.mxu0 0
        %977 = vmatprep.subr.bf16.mxu0 0
        %978 = vmatpush2.bf16.msra.mxu0 0
        %979 = vmatprep.subr.bf16.mxu0 0
        %980 = vmatpush2.bf16.msra.mxu0 0
        %981 = vmatprep.subr.bf16.mxu0 0
        %982 = vmatpush2.bf16.msra.mxu0 0
        %983 = vmatprep.subr.bf16.mxu0 0
        %984 = vmatpush2.bf16.msra.mxu0 0
        %985 = vmatprep.subr.bf16.mxu0 0
        %986 = vmatpush2.bf16.msra.mxu0 0
        %987 = vmatprep.subr.bf16.mxu0 0
        %988 = vmatpush2.bf16.msra.mxu0 0
        %989 = vmatprep.subr.bf16.mxu0 0
        %990 = vmatpush2.bf16.msra.mxu0 0
        %991 = vmatprep.mubr.bf16.mxu0 0
        %992 = vmatmul.mubr.bf16.gmra.mxu0 %v376
        %v993 = vpop.f32.mrf.mxu0
        %v994 = vadd.f32 %v909, %v993
        %v995 = vpop.f32.mrf.mxu0
        %v996 = vpop.f32.mrf.mxu0
        %v997 = vadd.f32 %v909, %v996
        %v998 = vpop.f32.mrf.mxu0
        %999 = vmatprep.mubr.bf16.mxu0 0
        %1000 = vmatmul.mubr.bf16.gmra.mxu0 %v377
        %v1001 = vpop.f32.mrf.mxu0
        %v1002 = vadd.f32 %v909, %v1001
        %v1003 = vpop.f32.mrf.mxu0
        %v1004 = vpop.f32.mrf.mxu0
        %v1005 = vadd.f32 %v909, %v1004
        %v1006 = vpop.f32.mrf.mxu0
        %1007 = vmatprep.mubr.bf16.mxu0 0
        %1008 = vmatmul.mubr.bf16.gmra.mxu0 %v378
        %v1009 = vpop.f32.mrf.mxu0
        %v1010 = vadd.f32 %v909, %v1009
        %v1011 = vpop.f32.mrf.mxu0
        %v1012 = vpop.f32.mrf.mxu0
        %v1013 = vadd.f32 %v909, %v1012
        %v1014 = vpop.f32.mrf.mxu0
        %1015 = vmatprep.mubr.bf16.mxu0 0
        %1016 = vmatmul.mubr.bf16.gmra.mxu0 %v379
        %v1017 = vpop.f32.mrf.mxu0
        %v1018 = vadd.f32 %v909, %v1017
        %v1019 = vpop.f32.mrf.mxu0
        %v1020 = vpop.f32.mrf.mxu0
        %v1021 = vadd.f32 %v909, %v1020
        %v1022 = vpop.f32.mrf.mxu0
        %1023 = vmatprep.mubr.bf16.mxu0 0
        %1024 = vmatmul.mubr.bf16.gmra.mxu0 %v380
        %v1025 = vpop.f32.mrf.mxu0
        %v1026 = vadd.f32 %v909, %v1025
        %v1027 = vpop.f32.mrf.mxu0
        %v1028 = vpop.f32.mrf.mxu0
        %v1029 = vadd.f32 %v909, %v1028
        %v1030 = vpop.f32.mrf.mxu0
        %1031 = vmatprep.mubr.bf16.mxu0 0
        %1032 = vmatmul.mubr.bf16.gmra.mxu0 %v381
        %v1033 = vpop.f32.mrf.mxu0
        %v1034 = vadd.f32 %v909, %v1033
        %v1035 = vpop.f32.mrf.mxu0
        %v1036 = vpop.f32.mrf.mxu0
        %v1037 = vadd.f32 %v909, %v1036
        %v1038 = vpop.f32.mrf.mxu0
        %1039 = vmatprep.mubr.bf16.mxu0 0
        %1040 = vmatmul.mubr.bf16.gmra.mxu0 %v382
        %v1041 = vpop.f32.mrf.mxu0
        %v1042 = vadd.f32 %v909, %v1041
        %v1043 = vpop.f32.mrf.mxu0
        %v1044 = vpop.f32.mrf.mxu0
        %v1045 = vadd.f32 %v909, %v1044
        %v1046 = vpop.f32.mrf.mxu0
        %1047 = vmatprep.mubr.bf16.mxu0 0
        %1048 = vmatmul.mubr.bf16.gmra.mxu0 %v383
        %v1049 = vpop.f32.mrf.mxu0
        %v1050 = vadd.f32 %v909, %v1049
        %v1051 = vpop.f32.mrf.mxu0
        %v1052 = vpop.f32.mrf.mxu0
        %v1053 = vadd.f32 %v909, %v1052
        %v1054 = vpop.f32.mrf.mxu0
        %1055 = vmatprep.mubr.bf16.mxu0 0
        %1056 = vmatmul.mubr.bf16.gmra.mxu0 %v384
        %v1057 = vpop.f32.mrf.mxu0
        %v1058 = vadd.f32 %v909, %v1057
        %v1059 = vpop.f32.mrf.mxu0
        %v1060 = vpop.f32.mrf.mxu0
        %v1061 = vadd.f32 %v909, %v1060
        %v1062 = vpop.f32.mrf.mxu0
        %1063 = vmatprep.mubr.bf16.mxu0 0
        %1064 = vmatmul.mubr.bf16.gmra.mxu0 %v385
        %v1065 = vpop.f32.mrf.mxu0
        %v1066 = vadd.f32 %v909, %v1065
        %v1067 = vpop.f32.mrf.mxu0
        %v1068 = vpop.f32.mrf.mxu0
        %v1069 = vadd.f32 %v909, %v1068
        %v1070 = vpop.f32.mrf.mxu0
        %1071 = vmatprep.mubr.bf16.mxu0 0
        %1072 = vmatmul.mubr.bf16.gmra.mxu0 %v386
        %v1073 = vpop.f32.mrf.mxu0
        %v1074 = vadd.f32 %v909, %v1073
        %v1075 = vpop.f32.mrf.mxu0
        %v1076 = vpop.f32.mrf.mxu0
        %v1077 = vadd.f32 %v909, %v1076
        %v1078 = vpop.f32.mrf.mxu0
        %1079 = vmatprep.mubr.bf16.mxu0 0
        %1080 = vmatmul.mubr.bf16.gmra.mxu0 %v387
        %v1081 = vpop.f32.mrf.mxu0
        %v1082 = vadd.f32 %v909, %v1081
        %v1083 = vpop.f32.mrf.mxu0
        %v1084 = vpop.f32.mrf.mxu0
        %v1085 = vadd.f32 %v909, %v1084
        %v1086 = vpop.f32.mrf.mxu0
        %1087 = vmatprep.mubr.bf16.mxu0 0
        %1088 = vmatmul.mubr.bf16.gmra.mxu0 %v388
        %v1089 = vpop.f32.mrf.mxu0
        %v1090 = vadd.f32 %v909, %v1089
        %v1091 = vpop.f32.mrf.mxu0
        %v1092 = vpop.f32.mrf.mxu0
        %v1093 = vadd.f32 %v909, %v1092
        %v1094 = vpop.f32.mrf.mxu0
        %1095 = vmatprep.mubr.bf16.mxu0 0
        %1096 = vmatmul.mubr.bf16.gmra.mxu0 %v389
        %v1097 = vpop.f32.mrf.mxu0
        %v1098 = vadd.f32 %v909, %v1097
        %v1099 = vpop.f32.mrf.mxu0
        %v1100 = vpop.f32.mrf.mxu0
        %v1101 = vadd.f32 %v909, %v1100
        %v1102 = vpop.f32.mrf.mxu0
        %1103 = vmatprep.mubr.bf16.mxu0 0
        %1104 = vmatmul.mubr.bf16.gmra.mxu0 %v390
        %v1105 = vpop.f32.mrf.mxu0
        %v1106 = vadd.f32 %v909, %v1105
        %v1107 = vpop.f32.mrf.mxu0
        %v1108 = vpop.f32.mrf.mxu0
        %v1109 = vadd.f32 %v909, %v1108
        %v1110 = vpop.f32.mrf.mxu0
        %1111 = vmatprep.mubr.bf16.mxu0 0
        %1112 = vmatmul.mubr.bf16.gmra.mxu0 %v391
        %v1113 = vpop.f32.mrf.mxu0
        %v1114 = vadd.f32 %v909, %v1113
        %v1115 = vpop.f32.mrf.mxu0
        %v1116 = vpop.f32.mrf.mxu0
        %v1117 = vadd.f32 %v909, %v1116
        %v1118 = vpop.f32.mrf.mxu0
        %1119 = vdwg.mxu0
        %v1120 = vpack.c.bf16 %v625, %v624
        %v1121 = vpack.c.bf16 %v627, %v626
        %v1122 = vpack.c.bf16 %v629, %v628
        %v1123 = vpack.c.bf16 %v631, %v630
        %v1124 = vpack.c.bf16 %v633, %v632
        %v1125 = vpack.c.bf16 %v635, %v634
        %v1126 = vpack.c.bf16 %v637, %v636
        %v1127 = vpack.c.bf16 %v639, %v638
        %v1128 = vpack.c.bf16 %v641, %v640
        %v1129 = vpack.c.bf16 %v643, %v642
        %v1130 = vpack.c.bf16 %v645, %v644
        %v1131 = vpack.c.bf16 %v647, %v646
        %v1132 = vpack.c.bf16 %v649, %v648
        %v1133 = vpack.c.bf16 %v651, %v650
        %v1134 = vpack.c.bf16 %v653, %v652
        %v1135 = vpack.c.bf16 %v655, %v654
        %v1136 = vpack.c.bf16 %v765, %v762
        %v1137 = vpack.c.bf16 %v773, %v770
        %v1138 = vpack.c.bf16 %v781, %v778
        %v1139 = vpack.c.bf16 %v789, %v786
        %v1140 = vpack.c.bf16 %v797, %v794
        %v1141 = vpack.c.bf16 %v805, %v802
        %v1142 = vpack.c.bf16 %v813, %v810
        %v1143 = vpack.c.bf16 %v821, %v818
        %v1144 = vpack.c.bf16 %v829, %v826
        %v1145 = vpack.c.bf16 %v837, %v834
        %v1146 = vpack.c.bf16 %v845, %v842
        %v1147 = vpack.c.bf16 %v853, %v850
        %v1148 = vpack.c.bf16 %v861, %v858
        %v1149 = vpack.c.bf16 %v869, %v866
        %v1150 = vpack.c.bf16 %v877, %v874
        %v1151 = vpack.c.bf16 %v885, %v882
        %v1152 = vpack.c.bf16 %v997, %v994
        %v1153 = vpack.c.bf16 %v1005, %v1002
        %v1154 = vpack.c.bf16 %v1013, %v1010
        %v1155 = vpack.c.bf16 %v1021, %v1018
        %v1156 = vpack.c.bf16 %v1029, %v1026
        %v1157 = vpack.c.bf16 %v1037, %v1034
        %v1158 = vpack.c.bf16 %v1045, %v1042
        %v1159 = vpack.c.bf16 %v1053, %v1050
        %v1160 = vpack.c.bf16 %v1061, %v1058
        %v1161 = vpack.c.bf16 %v1069, %v1066
        %v1162 = vpack.c.bf16 %v1077, %v1074
        %v1163 = vpack.c.bf16 %v1085, %v1082
        %v1164 = vpack.c.bf16 %v1093, %v1090
        %v1165 = vpack.c.bf16 %v1101, %v1098
        %v1166 = vpack.c.bf16 %v1109, %v1106
        %v1167 = vpack.c.bf16 %v1117, %v1114
        %1168 = vmatprep.subr.bf16.mxu0 0
        %1169 = vmatpush1.bf16.xpose.msra.mxu0 %v1143
        %1170 = vmatprep.subr.bf16.mxu0 0
        %1171 = vmatpush1.bf16.xpose.msra.mxu0 %v1142
        %1172 = vmatprep.subr.bf16.mxu0 0
        %1173 = vmatpush1.bf16.xpose.msra.mxu0 %v1141
        %1174 = vmatprep.subr.bf16.mxu0 0
        %1175 = vmatpush1.bf16.xpose.msra.mxu0 %v1140
        %1176 = vmatprep.subr.bf16.mxu0 0
        %1177 = vmatpush1.bf16.xpose.msra.mxu0 %v1139
        %1178 = vmatprep.subr.bf16.mxu0 0
        %1179 = vmatpush1.bf16.xpose.msra.mxu0 %v1138
        %1180 = vmatprep.subr.bf16.mxu0 0
        %1181 = vmatpush1.bf16.xpose.msra.mxu0 %v1137
        %1182 = vmatprep.subr.bf16.mxu0 0
        %1183 = vmatpush1.bf16.xpose.msra.mxu0 %v1136
        %1184 = vmatprep.subr.bf16.mxu0 0
        %1185 = vmatpush2.bf16.xpose.msra.mxu0 0
        %1186 = vmatprep.subr.bf16.mxu0 0
        %1187 = vmatpush2.bf16.xpose.msra.mxu0 0
        %1188 = vmatprep.subr.bf16.mxu0 0
        %1189 = vmatpush2.bf16.xpose.msra.mxu0 0
        %1190 = vmatprep.subr.bf16.mxu0 0
        %1191 = vmatpush2.bf16.xpose.msra.mxu0 0
        %1192 = vmatprep.subr.bf16.mxu0 0
        %1193 = vmatpush2.bf16.xpose.msra.mxu0 0
        %1194 = vmatprep.subr.bf16.mxu0 0
        %1195 = vmatpush2.bf16.xpose.msra.mxu0 0
        %1196 = vmatprep.subr.bf16.mxu0 0
        %1197 = vmatpush2.bf16.xpose.msra.mxu0 0
        %1198 = vmatprep.subr.bf16.mxu0 0
        %1199 = vmatpush2.bf16.xpose.msra.mxu0 0
        %1200 = vmatprep.mubr.bf16.mxu0 0
        %1201 = vmatmul.mubr.bf16.gmra.mxu0 %v1120
        %v1202 = vpop.f32.mrf.mxu0
        %v1203 = vadd.f32 0.0, %v1202
        %v1204 = vpop.f32.mrf.mxu0
        %v1205 = vpop.f32.mrf.mxu0
        %v1206 = vadd.f32 0.0, %v1205
        %v1207 = vpop.f32.mrf.mxu0
        %1208 = vmatprep.mubr.bf16.mxu0 0
        %1209 = vmatmul.mubr.bf16.gmra.mxu0 %v1121
        %v1210 = vpop.f32.mrf.mxu0
        %v1211 = vadd.f32 0.0, %v1210
        %v1212 = vpop.f32.mrf.mxu0
        %v1213 = vpop.f32.mrf.mxu0
        %v1214 = vadd.f32 0.0, %v1213
        %v1215 = vpop.f32.mrf.mxu0
        %1216 = vmatprep.mubr.bf16.mxu0 0
        %1217 = vmatmul.mubr.bf16.gmra.mxu0 %v1122
        %v1218 = vpop.f32.mrf.mxu0
        %v1219 = vadd.f32 0.0, %v1218
        %v1220 = vpop.f32.mrf.mxu0
        %v1221 = vpop.f32.mrf.mxu0
        %v1222 = vadd.f32 0.0, %v1221
        %v1223 = vpop.f32.mrf.mxu0
        %1224 = vmatprep.mubr.bf16.mxu0 0
        %1225 = vmatmul.mubr.bf16.gmra.mxu0 %v1123
        %v1226 = vpop.f32.mrf.mxu0
        %v1227 = vadd.f32 0.0, %v1226
        %v1228 = vpop.f32.mrf.mxu0
        %v1229 = vpop.f32.mrf.mxu0
        %v1230 = vadd.f32 0.0, %v1229
        %v1231 = vpop.f32.mrf.mxu0
        %1232 = vmatprep.mubr.bf16.mxu0 0
        %1233 = vmatmul.mubr.bf16.gmra.mxu0 %v1124
        %v1234 = vpop.f32.mrf.mxu0
        %v1235 = vadd.f32 0.0, %v1234
        %v1236 = vpop.f32.mrf.mxu0
        %v1237 = vpop.f32.mrf.mxu0
        %v1238 = vadd.f32 0.0, %v1237
        %v1239 = vpop.f32.mrf.mxu0
        %1240 = vmatprep.mubr.bf16.mxu0 0
        %1241 = vmatmul.mubr.bf16.gmra.mxu0 %v1125
        %v1242 = vpop.f32.mrf.mxu0
        %v1243 = vadd.f32 0.0, %v1242
        %v1244 = vpop.f32.mrf.mxu0
        %v1245 = vpop.f32.mrf.mxu0
        %v1246 = vadd.f32 0.0, %v1245
        %v1247 = vpop.f32.mrf.mxu0
        %1248 = vmatprep.mubr.bf16.mxu0 0
        %1249 = vmatmul.mubr.bf16.gmra.mxu0 %v1126
        %v1250 = vpop.f32.mrf.mxu0
        %v1251 = vadd.f32 0.0, %v1250
        %v1252 = vpop.f32.mrf.mxu0
        %v1253 = vpop.f32.mrf.mxu0
        %v1254 = vadd.f32 0.0, %v1253
        %v1255 = vpop.f32.mrf.mxu0
        %1256 = vmatprep.mubr.bf16.mxu0 0
        %1257 = vmatmul.mubr.bf16.gmra.mxu0 %v1127
        %v1258 = vpop.f32.mrf.mxu0
        %v1259 = vadd.f32 0.0, %v1258
        %v1260 = vpop.f32.mrf.mxu0
        %v1261 = vpop.f32.mrf.mxu0
        %v1262 = vadd.f32 0.0, %v1261
        %v1263 = vpop.f32.mrf.mxu0
        %1264 = vdwg.mxu0
        %1265 = vmatprep.subr.bf16.mxu0 0
        %1266 = vmatpush1.bf16.xpose.msra.mxu0 %v1151
        %1267 = vmatprep.subr.bf16.mxu0 0
        %1268 = vmatpush1.bf16.xpose.msra.mxu0 %v1150
        %1269 = vmatprep.subr.bf16.mxu0 0
        %1270 = vmatpush1.bf16.xpose.msra.mxu0 %v1149
        %1271 = vmatprep.subr.bf16.mxu0 0
        %1272 = vmatpush1.bf16.xpose.msra.mxu0 %v1148
        %1273 = vmatprep.subr.bf16.mxu0 0
        %1274 = vmatpush1.bf16.xpose.msra.mxu0 %v1147
        %1275 = vmatprep.subr.bf16.mxu0 0
        %1276 = vmatpush1.bf16.xpose.msra.mxu0 %v1146
        %1277 = vmatprep.subr.bf16.mxu0 0
        %1278 = vmatpush1.bf16.xpose.msra.mxu0 %v1145
        %1279 = vmatprep.subr.bf16.mxu0 0
        %1280 = vmatpush1.bf16.xpose.msra.mxu0 %v1144
        %1281 = vmatprep.subr.bf16.mxu0 0
        %1282 = vmatpush2.bf16.xpose.msra.mxu0 0
        %1283 = vmatprep.subr.bf16.mxu0 0
        %1284 = vmatpush2.bf16.xpose.msra.mxu0 0
        %1285 = vmatprep.subr.bf16.mxu0 0
        %1286 = vmatpush2.bf16.xpose.msra.mxu0 0
        %1287 = vmatprep.subr.bf16.mxu0 0
        %1288 = vmatpush2.bf16.xpose.msra.mxu0 0
        %1289 = vmatprep.subr.bf16.mxu0 0
        %1290 = vmatpush2.bf16.xpose.msra.mxu0 0
        %1291 = vmatprep.subr.bf16.mxu0 0
        %1292 = vmatpush2.bf16.xpose.msra.mxu0 0
        %1293 = vmatprep.subr.bf16.mxu0 0
        %1294 = vmatpush2.bf16.xpose.msra.mxu0 0
        %1295 = vmatprep.subr.bf16.mxu0 0
        %1296 = vmatpush2.bf16.xpose.msra.mxu0 0
        %1297 = vmatprep.mubr.bf16.mxu0 0
        %1298 = vmatmul.mubr.bf16.gmra.mxu0 %v1128
        %v1299 = vpop.f32.mrf.mxu0
        %v1300 = vadd.f32 0.0, %v1299
        %v1301 = vpop.f32.mrf.mxu0
        %v1302 = vpop.f32.mrf.mxu0
        %v1303 = vadd.f32 0.0, %v1302
        %v1304 = vpop.f32.mrf.mxu0
        %1305 = vmatprep.mubr.bf16.mxu0 0
        %1306 = vmatmul.mubr.bf16.gmra.mxu0 %v1129
        %v1307 = vpop.f32.mrf.mxu0
        %v1308 = vadd.f32 0.0, %v1307
        %v1309 = vpop.f32.mrf.mxu0
        %v1310 = vpop.f32.mrf.mxu0
        %v1311 = vadd.f32 0.0, %v1310
        %v1312 = vpop.f32.mrf.mxu0
        %1313 = vmatprep.mubr.bf16.mxu0 0
        %1314 = vmatmul.mubr.bf16.gmra.mxu0 %v1130
        %v1315 = vpop.f32.mrf.mxu0
        %v1316 = vadd.f32 0.0, %v1315
        %v1317 = vpop.f32.mrf.mxu0
        %v1318 = vpop.f32.mrf.mxu0
        %v1319 = vadd.f32 0.0, %v1318
        %v1320 = vpop.f32.mrf.mxu0
        %1321 = vmatprep.mubr.bf16.mxu0 0
        %1322 = vmatmul.mubr.bf16.gmra.mxu0 %v1131
        %v1323 = vpop.f32.mrf.mxu0
        %v1324 = vadd.f32 0.0, %v1323
        %v1325 = vpop.f32.mrf.mxu0
        %v1326 = vpop.f32.mrf.mxu0
        %v1327 = vadd.f32 0.0, %v1326
        %v1328 = vpop.f32.mrf.mxu0
        %1329 = vmatprep.mubr.bf16.mxu0 0
        %1330 = vmatmul.mubr.bf16.gmra.mxu0 %v1132
        %v1331 = vpop.f32.mrf.mxu0
        %v1332 = vadd.f32 0.0, %v1331
        %v1333 = vpop.f32.mrf.mxu0
        %v1334 = vpop.f32.mrf.mxu0
        %v1335 = vadd.f32 0.0, %v1334
        %v1336 = vpop.f32.mrf.mxu0
        %1337 = vmatprep.mubr.bf16.mxu0 0
        %1338 = vmatmul.mubr.bf16.gmra.mxu0 %v1133
        %v1339 = vpop.f32.mrf.mxu0
        %v1340 = vadd.f32 0.0, %v1339
        %v1341 = vpop.f32.mrf.mxu0
        %v1342 = vpop.f32.mrf.mxu0
        %v1343 = vadd.f32 0.0, %v1342
        %v1344 = vpop.f32.mrf.mxu0
        %1345 = vmatprep.mubr.bf16.mxu0 0
        %1346 = vmatmul.mubr.bf16.gmra.mxu0 %v1134
        %v1347 = vpop.f32.mrf.mxu0
        %v1348 = vadd.f32 0.0, %v1347
        %v1349 = vpop.f32.mrf.mxu0
        %v1350 = vpop.f32.mrf.mxu0
        %v1351 = vadd.f32 0.0, %v1350
        %v1352 = vpop.f32.mrf.mxu0
        %1353 = vmatprep.mubr.bf16.mxu0 0
        %1354 = vmatmul.mubr.bf16.gmra.mxu0 %v1135
        %v1355 = vpop.f32.mrf.mxu0
        %v1356 = vadd.f32 0.0, %v1355
        %v1357 = vpop.f32.mrf.mxu0
        %v1358 = vpop.f32.mrf.mxu0
        %v1359 = vadd.f32 0.0, %v1358
        %v1360 = vpop.f32.mrf.mxu0
        %1361 = vdwg.mxu0
        %1362 = vmax.xlane.f32.xlu0 %v1203
        %v1363 = vpop.xlane.xlu0 %1362
        %1364 = vmax.xlane.f32.xlu0 %v1206
        %v1365 = vpop.xlane.xlu0 %1364
        %1366 = vmax.xlane.f32.xlu0 %v1211
        %v1367 = vpop.xlane.xlu0 %1366
        %1368 = vmax.xlane.f32.xlu0 %v1214
        %v1369 = vpop.xlane.xlu0 %1368
        %1370 = vmax.xlane.f32.xlu0 %v1219
        %v1371 = vpop.xlane.xlu0 %1370
        %1372 = vmax.xlane.f32.xlu0 %v1222
        %v1373 = vpop.xlane.xlu0 %1372
        %1374 = vmax.xlane.f32.xlu0 %v1227
        %v1375 = vpop.xlane.xlu0 %1374
        %1376 = vmax.xlane.f32.xlu0 %v1230
        %v1377 = vpop.xlane.xlu0 %1376
        %1378 = vmax.xlane.f32.xlu0 %v1235
        %v1379 = vpop.xlane.xlu0 %1378
        %1380 = vmax.xlane.f32.xlu0 %v1238
        %v1381 = vpop.xlane.xlu0 %1380
        %1382 = vmax.xlane.f32.xlu0 %v1243
        %v1383 = vpop.xlane.xlu0 %1382
        %1384 = vmax.xlane.f32.xlu0 %v1246
        %v1385 = vpop.xlane.xlu0 %1384
        %1386 = vmax.xlane.f32.xlu0 %v1251
        %v1387 = vpop.xlane.xlu0 %1386
        %1388 = vmax.xlane.f32.xlu0 %v1254
        %v1389 = vpop.xlane.xlu0 %1388
        %1390 = vmax.xlane.f32.xlu0 %v1259
        %v1391 = vpop.xlane.xlu0 %1390
        %1392 = vmax.xlane.f32.xlu0 %v1262
        %v1393 = vpop.xlane.xlu0 %1392
        %1394 = vmax.xlane.f32.xlu0 %v1300
        %v1395 = vpop.xlane.xlu0 %1394
        %1396 = vmax.xlane.f32.xlu0 %v1303
        %v1397 = vpop.xlane.xlu0 %1396
        %1398 = vmax.xlane.f32.xlu0 %v1308
        %v1399 = vpop.xlane.xlu0 %1398
        %1400 = vmax.xlane.f32.xlu0 %v1311
        %v1401 = vpop.xlane.xlu0 %1400
        %1402 = vmax.xlane.f32.xlu0 %v1316
        %v1403 = vpop.xlane.xlu0 %1402
        %1404 = vmax.xlane.f32.xlu0 %v1319
        %v1405 = vpop.xlane.xlu0 %1404
        %1406 = vmax.xlane.f32.xlu0 %v1324
        %v1407 = vpop.xlane.xlu0 %1406
        %1408 = vmax.xlane.f32.xlu0 %v1327
        %v1409 = vpop.xlane.xlu0 %1408
        %1410 = vmax.xlane.f32.xlu0 %v1332
        %v1411 = vpop.xlane.xlu0 %1410
        %1412 = vmax.xlane.f32.xlu0 %v1335
        %v1413 = vpop.xlane.xlu0 %1412
        %1414 = vmax.xlane.f32.xlu0 %v1340
        %v1415 = vpop.xlane.xlu0 %1414
        %1416 = vmax.xlane.f32.xlu0 %v1343
        %v1417 = vpop.xlane.xlu0 %1416
        %1418 = vmax.xlane.f32.xlu0 %v1348
        %v1419 = vpop.xlane.xlu0 %1418
        %1420 = vmax.xlane.f32.xlu0 %v1351
        %v1421 = vpop.xlane.xlu0 %1420
        %1422 = vmax.xlane.f32.xlu0 %v1356
        %v1423 = vpop.xlane.xlu0 %1422
        %1424 = vmax.xlane.f32.xlu0 %v1359
        %v1425 = vpop.xlane.xlu0 %1424
        %v1426 = vsub.f32 %v1203, %v1363
        %v1427 = vsub.f32 %v1206, %v1365
        %v1428 = vsub.f32 %v1211, %v1367
        %v1429 = vsub.f32 %v1214, %v1369
        %v1430 = vsub.f32 %v1219, %v1371
        %v1431 = vsub.f32 %v1222, %v1373
        %v1432 = vsub.f32 %v1227, %v1375
        %v1433 = vsub.f32 %v1230, %v1377
        %v1434 = vsub.f32 %v1235, %v1379
        %v1435 = vsub.f32 %v1238, %v1381
        %v1436 = vsub.f32 %v1243, %v1383
        %v1437 = vsub.f32 %v1246, %v1385
        %v1438 = vsub.f32 %v1251, %v1387
        %v1439 = vsub.f32 %v1254, %v1389
        %v1440 = vsub.f32 %v1259, %v1391
        %v1441 = vsub.f32 %v1262, %v1393
        %v1442 = vsub.f32 %v1300, %v1395
        %v1443 = vsub.f32 %v1303, %v1397
        %v1444 = vsub.f32 %v1308, %v1399
        %v1445 = vsub.f32 %v1311, %v1401
        %v1446 = vsub.f32 %v1316, %v1403
        %v1447 = vsub.f32 %v1319, %v1405
        %v1448 = vsub.f32 %v1324, %v1407
        %v1449 = vsub.f32 %v1327, %v1409
        %v1450 = vsub.f32 %v1332, %v1411
        %v1451 = vsub.f32 %v1335, %v1413
        %v1452 = vsub.f32 %v1340, %v1415
        %v1453 = vsub.f32 %v1343, %v1417
        %v1454 = vsub.f32 %v1348, %v1419
        %v1455 = vsub.f32 %v1351, %v1421
        %v1456 = vsub.f32 %v1356, %v1423
        %v1457 = vsub.f32 %v1359, %v1425
        %v1458 = vmul.f32 %v1426, 1.442695
        %v1459 = vpow.pop %v1458
        %v1460 = vmul.f32 %v1427, 1.442695
        %v1461 = vpow.pop %v1460
        %v1462 = vmul.f32 %v1428, 1.442695
        %v1463 = vpow.pop %v1462
        %v1464 = vmul.f32 %v1429, 1.442695
        %v1465 = vpow.pop %v1464
        %v1466 = vmul.f32 %v1430, 1.442695
        %v1467 = vpow.pop %v1466
        %v1468 = vmul.f32 %v1431, 1.442695
        %v1469 = vpow.pop %v1468
        %v1470 = vmul.f32 %v1432, 1.442695
        %v1471 = vpow.pop %v1470
        %v1472 = vmul.f32 %v1433, 1.442695
        %v1473 = vpow.pop %v1472
        %v1474 = vmul.f32 %v1434, 1.442695
        %v1475 = vpow.pop %v1474
        %v1476 = vmul.f32 %v1435, 1.442695
        %v1477 = vpow.pop %v1476
        %v1478 = vmul.f32 %v1436, 1.442695
        %v1479 = vpow.pop %v1478
        %v1480 = vmul.f32 %v1437, 1.442695
        %v1481 = vpow.pop %v1480
        %v1482 = vmul.f32 %v1438, 1.442695
        %v1483 = vpow.pop %v1482
        %v1484 = vmul.f32 %v1439, 1.442695
        %v1485 = vpow.pop %v1484
        %v1486 = vmul.f32 %v1440, 1.442695
        %v1487 = vpow.pop %v1486
        %v1488 = vmul.f32 %v1441, 1.442695
        %v1489 = vpow.pop %v1488
        %v1490 = vmul.f32 %v1442, 1.442695
        %v1491 = vpow.pop %v1490
        %v1492 = vmul.f32 %v1443, 1.442695
        %v1493 = vpow.pop %v1492
        %v1494 = vmul.f32 %v1444, 1.442695
        %v1495 = vpow.pop %v1494
        %v1496 = vmul.f32 %v1445, 1.442695
        %v1497 = vpow.pop %v1496
        %v1498 = vmul.f32 %v1446, 1.442695
        %v1499 = vpow.pop %v1498
        %v1500 = vmul.f32 %v1447, 1.442695
        %v1501 = vpow.pop %v1500
        %v1502 = vmul.f32 %v1448, 1.442695
        %v1503 = vpow.pop %v1502
        %v1504 = vmul.f32 %v1449, 1.442695
        %v1505 = vpow.pop %v1504
        %v1506 = vmul.f32 %v1450, 1.442695
        %v1507 = vpow.pop %v1506
        %v1508 = vmul.f32 %v1451, 1.442695
        %v1509 = vpow.pop %v1508
        %v1510 = vmul.f32 %v1452, 1.442695
        %v1511 = vpow.pop %v1510
        %v1512 = vmul.f32 %v1453, 1.442695
        %v1513 = vpow.pop %v1512
        %v1514 = vmul.f32 %v1454, 1.442695
        %v1515 = vpow.pop %v1514
        %v1516 = vmul.f32 %v1455, 1.442695
        %v1517 = vpow.pop %v1516
        %v1518 = vmul.f32 %v1456, 1.442695
        %v1519 = vpow.pop %v1518
        %v1520 = vmul.f32 %v1457, 1.442695
        %v1521 = vpow.pop %v1520
        %1522 = vadd.xlane.f32.xlu0 %v1459
        %v1523 = vpop.xlane.xlu0 %1522
        %1524 = vadd.xlane.f32.xlu0 %v1461
        %v1525 = vpop.xlane.xlu0 %1524
        %1526 = vadd.xlane.f32.xlu0 %v1463
        %v1527 = vpop.xlane.xlu0 %1526
        %1528 = vadd.xlane.f32.xlu0 %v1465
        %v1529 = vpop.xlane.xlu0 %1528
        %1530 = vadd.xlane.f32.xlu0 %v1467
        %v1531 = vpop.xlane.xlu0 %1530
        %1532 = vadd.xlane.f32.xlu0 %v1469
        %v1533 = vpop.xlane.xlu0 %1532
        %1534 = vadd.xlane.f32.xlu0 %v1471
        %v1535 = vpop.xlane.xlu0 %1534
        %1536 = vadd.xlane.f32.xlu0 %v1473
        %v1537 = vpop.xlane.xlu0 %1536
        %1538 = vadd.xlane.f32.xlu0 %v1475
        %v1539 = vpop.xlane.xlu0 %1538
        %1540 = vadd.xlane.f32.xlu0 %v1477
        %v1541 = vpop.xlane.xlu0 %1540
        %1542 = vadd.xlane.f32.xlu0 %v1479
        %v1543 = vpop.xlane.xlu0 %1542
        %1544 = vadd.xlane.f32.xlu0 %v1481
        %v1545 = vpop.xlane.xlu0 %1544
        %1546 = vadd.xlane.f32.xlu0 %v1483
        %v1547 = vpop.xlane.xlu0 %1546
        %1548 = vadd.xlane.f32.xlu0 %v1485
        %v1549 = vpop.xlane.xlu0 %1548
        %1550 = vadd.xlane.f32.xlu0 %v1487
        %v1551 = vpop.xlane.xlu0 %1550
        %1552 = vadd.xlane.f32.xlu0 %v1489
        %v1553 = vpop.xlane.xlu0 %1552
        %1554 = vadd.xlane.f32.xlu0 %v1491
        %v1555 = vpop.xlane.xlu0 %1554
        %1556 = vadd.xlane.f32.xlu0 %v1493
        %v1557 = vpop.xlane.xlu0 %1556
        %1558 = vadd.xlane.f32.xlu0 %v1495
        %v1559 = vpop.xlane.xlu0 %1558
        %1560 = vadd.xlane.f32.xlu0 %v1497
        %v1561 = vpop.xlane.xlu0 %1560
        %1562 = vadd.xlane.f32.xlu0 %v1499
        %v1563 = vpop.xlane.xlu0 %1562
        %1564 = vadd.xlane.f32.xlu0 %v1501
        %v1565 = vpop.xlane.xlu0 %1564
        %1566 = vadd.xlane.f32.xlu0 %v1503
        %v1567 = vpop.xlane.xlu0 %1566
        %1568 = vadd.xlane.f32.xlu0 %v1505
        %v1569 = vpop.xlane.xlu0 %1568
        %1570 = vadd.xlane.f32.xlu0 %v1507
        %v1571 = vpop.xlane.xlu0 %1570
        %1572 = vadd.xlane.f32.xlu0 %v1509
        %v1573 = vpop.xlane.xlu0 %1572
        %1574 = vadd.xlane.f32.xlu0 %v1511
        %v1575 = vpop.xlane.xlu0 %1574
        %1576 = vadd.xlane.f32.xlu0 %v1513
        %v1577 = vpop.xlane.xlu0 %1576
        %1578 = vadd.xlane.f32.xlu0 %v1515
        %v1579 = vpop.xlane.xlu0 %1578
        %1580 = vadd.xlane.f32.xlu0 %v1517
        %v1581 = vpop.xlane.xlu0 %1580
        %1582 = vadd.xlane.f32.xlu0 %v1519
        %v1583 = vpop.xlane.xlu0 %1582
        %1584 = vadd.xlane.f32.xlu0 %v1521
        %v1585 = vpop.xlane.xlu0 %1584
        %v1586 = vpack.c.bf16 %v1461, %v1459
        %v1587 = vpack.c.bf16 %v1465, %v1463
        %v1588 = vpack.c.bf16 %v1469, %v1467
        %v1589 = vpack.c.bf16 %v1473, %v1471
        %v1590 = vpack.c.bf16 %v1477, %v1475
        %v1591 = vpack.c.bf16 %v1481, %v1479
        %v1592 = vpack.c.bf16 %v1485, %v1483
        %v1593 = vpack.c.bf16 %v1489, %v1487
        %v1594 = vpack.c.bf16 %v1493, %v1491
        %v1595 = vpack.c.bf16 %v1497, %v1495
        %v1596 = vpack.c.bf16 %v1501, %v1499
        %v1597 = vpack.c.bf16 %v1505, %v1503
        %v1598 = vpack.c.bf16 %v1509, %v1507
        %v1599 = vpack.c.bf16 %v1513, %v1511
        %v1600 = vpack.c.bf16 %v1517, %v1515
        %v1601 = vpack.c.bf16 %v1521, %v1519
        %1602 = vmatprep.subr.bf16.mxu0 0
        %1603 = vmatpush1.bf16.msra.mxu0 %v1159
        %1604 = vmatprep.subr.bf16.mxu0 0
        %1605 = vmatpush1.bf16.msra.mxu0 %v1158
        %1606 = vmatprep.subr.bf16.mxu0 0
        %1607 = vmatpush1.bf16.msra.mxu0 %v1157
        %1608 = vmatprep.subr.bf16.mxu0 0
        %1609 = vmatpush1.bf16.msra.mxu0 %v1156
        %1610 = vmatprep.subr.bf16.mxu0 0
        %1611 = vmatpush1.bf16.msra.mxu0 %v1155
        %1612 = vmatprep.subr.bf16.mxu0 0
        %1613 = vmatpush1.bf16.msra.mxu0 %v1154
        %1614 = vmatprep.subr.bf16.mxu0 0
        %1615 = vmatpush1.bf16.msra.mxu0 %v1153
        %1616 = vmatprep.subr.bf16.mxu0 0
        %1617 = vmatpush1.bf16.msra.mxu0 %v1152
        %1618 = vmatprep.subr.bf16.mxu0 0
        %1619 = vmatpush2.bf16.msra.mxu0 0
        %1620 = vmatprep.subr.bf16.mxu0 0
        %1621 = vmatpush2.bf16.msra.mxu0 0
        %1622 = vmatprep.subr.bf16.mxu0 0
        %1623 = vmatpush2.bf16.msra.mxu0 0
        %1624 = vmatprep.subr.bf16.mxu0 0
        %1625 = vmatpush2.bf16.msra.mxu0 0
        %1626 = vmatprep.subr.bf16.mxu0 0
        %1627 = vmatpush2.bf16.msra.mxu0 0
        %1628 = vmatprep.subr.bf16.mxu0 0
        %1629 = vmatpush2.bf16.msra.mxu0 0
        %1630 = vmatprep.subr.bf16.mxu0 0
        %1631 = vmatpush2.bf16.msra.mxu0 0
        %1632 = vmatprep.subr.bf16.mxu0 0
        %1633 = vmatpush2.bf16.msra.mxu0 0
        %1634 = vmatprep.mubr.bf16.mxu0 0
        %1635 = vmatmul.mubr.bf16.gmra.mxu0 %v1586
        %v1636 = vpop.f32.mrf.mxu0
        %v1637 = vadd.f32 0.0, %v1636
        %v1638 = vpop.f32.mrf.mxu0
        %v1639 = vpop.f32.mrf.mxu0
        %v1640 = vadd.f32 0.0, %v1639
        %v1641 = vpop.f32.mrf.mxu0
        %1642 = vmatprep.mubr.bf16.mxu0 0
        %1643 = vmatmul.mubr.bf16.gmra.mxu0 %v1587
        %v1644 = vpop.f32.mrf.mxu0
        %v1645 = vadd.f32 0.0, %v1644
        %v1646 = vpop.f32.mrf.mxu0
        %v1647 = vpop.f32.mrf.mxu0
        %v1648 = vadd.f32 0.0, %v1647
        %v1649 = vpop.f32.mrf.mxu0
        %1650 = vmatprep.mubr.bf16.mxu0 0
        %1651 = vmatmul.mubr.bf16.gmra.mxu0 %v1588
        %v1652 = vpop.f32.mrf.mxu0
        %v1653 = vadd.f32 0.0, %v1652
        %v1654 = vpop.f32.mrf.mxu0
        %v1655 = vpop.f32.mrf.mxu0
        %v1656 = vadd.f32 0.0, %v1655
        %v1657 = vpop.f32.mrf.mxu0
        %1658 = vmatprep.mubr.bf16.mxu0 0
        %1659 = vmatmul.mubr.bf16.gmra.mxu0 %v1589
        %v1660 = vpop.f32.mrf.mxu0
        %v1661 = vadd.f32 0.0, %v1660
        %v1662 = vpop.f32.mrf.mxu0
        %v1663 = vpop.f32.mrf.mxu0
        %v1664 = vadd.f32 0.0, %v1663
        %v1665 = vpop.f32.mrf.mxu0
        %1666 = vmatprep.mubr.bf16.mxu0 0
        %1667 = vmatmul.mubr.bf16.gmra.mxu0 %v1590
        %v1668 = vpop.f32.mrf.mxu0
        %v1669 = vadd.f32 0.0, %v1668
        %v1670 = vpop.f32.mrf.mxu0
        %v1671 = vpop.f32.mrf.mxu0
        %v1672 = vadd.f32 0.0, %v1671
        %v1673 = vpop.f32.mrf.mxu0
        %1674 = vmatprep.mubr.bf16.mxu0 0
        %1675 = vmatmul.mubr.bf16.gmra.mxu0 %v1591
        %v1676 = vpop.f32.mrf.mxu0
        %v1677 = vadd.f32 0.0, %v1676
        %v1678 = vpop.f32.mrf.mxu0
        %v1679 = vpop.f32.mrf.mxu0
        %v1680 = vadd.f32 0.0, %v1679
        %v1681 = vpop.f32.mrf.mxu0
        %1682 = vmatprep.mubr.bf16.mxu0 0
        %1683 = vmatmul.mubr.bf16.gmra.mxu0 %v1592
        %v1684 = vpop.f32.mrf.mxu0
        %v1685 = vadd.f32 0.0, %v1684
        %v1686 = vpop.f32.mrf.mxu0
        %v1687 = vpop.f32.mrf.mxu0
        %v1688 = vadd.f32 0.0, %v1687
        %v1689 = vpop.f32.mrf.mxu0
        %1690 = vmatprep.mubr.bf16.mxu0 0
        %1691 = vmatmul.mubr.bf16.gmra.mxu0 %v1593
        %v1692 = vpop.f32.mrf.mxu0
        %v1693 = vadd.f32 0.0, %v1692
        %v1694 = vpop.f32.mrf.mxu0
        %v1695 = vpop.f32.mrf.mxu0
        %v1696 = vadd.f32 0.0, %v1695
        %v1697 = vpop.f32.mrf.mxu0
        %1698 = vdwg.mxu0
        %1699 = vmatprep.subr.bf16.mxu0 0
        %1700 = vmatpush1.bf16.msra.mxu0 %v1167
        %1701 = vmatprep.subr.bf16.mxu0 0
        %1702 = vmatpush1.bf16.msra.mxu0 %v1166
        %1703 = vmatprep.subr.bf16.mxu0 0
        %1704 = vmatpush1.bf16.msra.mxu0 %v1165
        %1705 = vmatprep.subr.bf16.mxu0 0
        %1706 = vmatpush1.bf16.msra.mxu0 %v1164
        %1707 = vmatprep.subr.bf16.mxu0 0
        %1708 = vmatpush1.bf16.msra.mxu0 %v1163
        %1709 = vmatprep.subr.bf16.mxu0 0
        %1710 = vmatpush1.bf16.msra.mxu0 %v1162
        %1711 = vmatprep.subr.bf16.mxu0 0
        %1712 = vmatpush1.bf16.msra.mxu0 %v1161
        %1713 = vmatprep.subr.bf16.mxu0 0
        %1714 = vmatpush1.bf16.msra.mxu0 %v1160
        %1715 = vmatprep.subr.bf16.mxu0 0
        %1716 = vmatpush2.bf16.msra.mxu0 0
        %1717 = vmatprep.subr.bf16.mxu0 0
        %1718 = vmatpush2.bf16.msra.mxu0 0
        %1719 = vmatprep.subr.bf16.mxu0 0
        %1720 = vmatpush2.bf16.msra.mxu0 0
        %1721 = vmatprep.subr.bf16.mxu0 0
        %1722 = vmatpush2.bf16.msra.mxu0 0
        %1723 = vmatprep.subr.bf16.mxu0 0
        %1724 = vmatpush2.bf16.msra.mxu0 0
        %1725 = vmatprep.subr.bf16.mxu0 0
        %1726 = vmatpush2.bf16.msra.mxu0 0
        %1727 = vmatprep.subr.bf16.mxu0 0
        %1728 = vmatpush2.bf16.msra.mxu0 0
        %1729 = vmatprep.subr.bf16.mxu0 0
        %1730 = vmatpush2.bf16.msra.mxu0 0
        %1731 = vmatprep.mubr.bf16.mxu0 0
        %1732 = vmatmul.mubr.bf16.gmra.mxu0 %v1594
        %v1733 = vpop.f32.mrf.mxu0
        %v1734 = vadd.f32 0.0, %v1733
        %v1735 = vpop.f32.mrf.mxu0
        %v1736 = vpop.f32.mrf.mxu0
        %v1737 = vadd.f32 0.0, %v1736
        %v1738 = vpop.f32.mrf.mxu0
        %1739 = vmatprep.mubr.bf16.mxu0 0
        %1740 = vmatmul.mubr.bf16.gmra.mxu0 %v1595
        %v1741 = vpop.f32.mrf.mxu0
        %v1742 = vadd.f32 0.0, %v1741
        %v1743 = vpop.f32.mrf.mxu0
        %v1744 = vpop.f32.mrf.mxu0
        %v1745 = vadd.f32 0.0, %v1744
        %v1746 = vpop.f32.mrf.mxu0
        %1747 = vmatprep.mubr.bf16.mxu0 0
        %1748 = vmatmul.mubr.bf16.gmra.mxu0 %v1596
        %v1749 = vpop.f32.mrf.mxu0
        %v1750 = vadd.f32 0.0, %v1749
        %v1751 = vpop.f32.mrf.mxu0
        %v1752 = vpop.f32.mrf.mxu0
        %v1753 = vadd.f32 0.0, %v1752
        %v1754 = vpop.f32.mrf.mxu0
        %1755 = vmatprep.mubr.bf16.mxu0 0
        %1756 = vmatmul.mubr.bf16.gmra.mxu0 %v1597
        %v1757 = vpop.f32.mrf.mxu0
        %v1758 = vadd.f32 0.0, %v1757
        %v1759 = vpop.f32.mrf.mxu0
        %v1760 = vpop.f32.mrf.mxu0
        %v1761 = vadd.f32 0.0, %v1760
        %v1762 = vpop.f32.mrf.mxu0
        %1763 = vmatprep.mubr.bf16.mxu0 0
        %1764 = vmatmul.mubr.bf16.gmra.mxu0 %v1598
        %v1765 = vpop.f32.mrf.mxu0
        %v1766 = vadd.f32 0.0, %v1765
        %v1767 = vpop.f32.mrf.mxu0
        %v1768 = vpop.f32.mrf.mxu0
        %v1769 = vadd.f32 0.0, %v1768
        %v1770 = vpop.f32.mrf.mxu0
        %1771 = vmatprep.mubr.bf16.mxu0 0
        %1772 = vmatmul.mubr.bf16.gmra.mxu0 %v1599
        %v1773 = vpop.f32.mrf.mxu0
        %v1774 = vadd.f32 0.0, %v1773
        %v1775 = vpop.f32.mrf.mxu0
        %v1776 = vpop.f32.mrf.mxu0
        %v1777 = vadd.f32 0.0, %v1776
        %v1778 = vpop.f32.mrf.mxu0
        %1779 = vmatprep.mubr.bf16.mxu0 0
        %1780 = vmatmul.mubr.bf16.gmra.mxu0 %v1600
        %v1781 = vpop.f32.mrf.mxu0
        %v1782 = vadd.f32 0.0, %v1781
        %v1783 = vpop.f32.mrf.mxu0
        %v1784 = vpop.f32.mrf.mxu0
        %v1785 = vadd.f32 0.0, %v1784
        %v1786 = vpop.f32.mrf.mxu0
        %1787 = vmatprep.mubr.bf16.mxu0 0
        %1788 = vmatmul.mubr.bf16.gmra.mxu0 %v1601
        %v1789 = vpop.f32.mrf.mxu0
        %v1790 = vadd.f32 0.0, %v1789
        %v1791 = vpop.f32.mrf.mxu0
        %v1792 = vpop.f32.mrf.mxu0
        %v1793 = vadd.f32 0.0, %v1792
        %v1794 = vpop.f32.mrf.mxu0
        %1795 = vdwg.mxu0
        %v1796 = vrcp.pop %v1523
        %v1797 = vrcp.pop %v1525
        %v1798 = vrcp.pop %v1527
        %v1799 = vrcp.pop %v1529
        %v1800 = vrcp.pop %v1531
        %v1801 = vrcp.pop %v1533
        %v1802 = vrcp.pop %v1535
        %v1803 = vrcp.pop %v1537
        %v1804 = vrcp.pop %v1539
        %v1805 = vrcp.pop %v1541
        %v1806 = vrcp.pop %v1543
        %v1807 = vrcp.pop %v1545
        %v1808 = vrcp.pop %v1547
        %v1809 = vrcp.pop %v1549
        %v1810 = vrcp.pop %v1551
        %v1811 = vrcp.pop %v1553
        %v1812 = vrcp.pop %v1555
        %v1813 = vrcp.pop %v1557
        %v1814 = vrcp.pop %v1559
        %v1815 = vrcp.pop %v1561
        %v1816 = vrcp.pop %v1563
        %v1817 = vrcp.pop %v1565
        %v1818 = vrcp.pop %v1567
        %v1819 = vrcp.pop %v1569
        %v1820 = vrcp.pop %v1571
        %v1821 = vrcp.pop %v1573
        %v1822 = vrcp.pop %v1575
        %v1823 = vrcp.pop %v1577
        %v1824 = vrcp.pop %v1579
        %v1825 = vrcp.pop %v1581
        %v1826 = vrcp.pop %v1583
        %v1827 = vrcp.pop %v1585
        %v1828 = vmul.f32 %v1637, %v1796
        %v1829 = vmul.f32 %v1640, %v1797
        %v1830 = vmul.f32 %v1645, %v1798
        %v1831 = vmul.f32 %v1648, %v1799
        %v1832 = vmul.f32 %v1653, %v1800
        %v1833 = vmul.f32 %v1656, %v1801
        %v1834 = vmul.f32 %v1661, %v1802
        %v1835 = vmul.f32 %v1664, %v1803
        %v1836 = vmul.f32 %v1669, %v1804
        %v1837 = vmul.f32 %v1672, %v1805
        %v1838 = vmul.f32 %v1677, %v1806
        %v1839 = vmul.f32 %v1680, %v1807
        %v1840 = vmul.f32 %v1685, %v1808
        %v1841 = vmul.f32 %v1688, %v1809
        %v1842 = vmul.f32 %v1693, %v1810
        %v1843 = vmul.f32 %v1696, %v1811
        %v1844 = vmul.f32 %v1734, %v1812
        %v1845 = vmul.f32 %v1737, %v1813
        %v1846 = vmul.f32 %v1742, %v1814
        %v1847 = vmul.f32 %v1745, %v1815
        %v1848 = vmul.f32 %v1750, %v1816
        %v1849 = vmul.f32 %v1753, %v1817
        %v1850 = vmul.f32 %v1758, %v1818
        %v1851 = vmul.f32 %v1761, %v1819
        %v1852 = vmul.f32 %v1766, %v1820
        %v1853 = vmul.f32 %v1769, %v1821
        %v1854 = vmul.f32 %v1774, %v1822
        %v1855 = vmul.f32 %v1777, %v1823
        %v1856 = vmul.f32 %v1782, %v1824
        %v1857 = vmul.f32 %v1785, %v1825
        %v1858 = vmul.f32 %v1790, %v1826
        %v1859 = vmul.f32 %v1793, %v1827
        %1860 = vst [vmem:[%s340] sm:$0xff] %v1828
        %1861 = vst [vmem:[%s340 + $0x8] sm:$0xff] %v1829
        %1862 = vst [vmem:[%s340 + $0x10] sm:$0xff] %v1830
        %1863 = vst [vmem:[%s340 + $0x18] sm:$0xff] %v1831
        %1864 = vst [vmem:[%s340 + $0x20] sm:$0xff] %v1832
        %1865 = vst [vmem:[%s340 + $0x28] sm:$0xff] %v1833
        %1866 = vst [vmem:[%s340 + $0x30] sm:$0xff] %v1834
        %1867 = vst [vmem:[%s340 + $0x38] sm:$0xff] %v1835
        %1868 = vst [vmem:[%s340 + $0x40] sm:$0xff] %v1836
        %1869 = vst [vmem:[%s340 + $0x48] sm:$0xff] %v1837
        %1870 = vst [vmem:[%s340 + $0x50] sm:$0xff] %v1838
        %1871 = vst [vmem:[%s340 + $0x58] sm:$0xff] %v1839
        %1872 = vst [vmem:[%s340 + $0x60] sm:$0xff] %v1840
        %1873 = vst [vmem:[%s340 + $0x68] sm:$0xff] %v1841
        %1874 = vst [vmem:[%s340 + $0x70] sm:$0xff] %v1842
        %1875 = vst [vmem:[%s340 + $0x78] sm:$0xff] %v1843
        %1876 = vst [vmem:[%s340 + $0x80] sm:$0xff] %v1844
        %1877 = vst [vmem:[%s340 + $0x88] sm:$0xff] %v1845
        %1878 = vst [vmem:[%s340 + $0x90] sm:$0xff] %v1846
        %1879 = vst [vmem:[%s340 + $0x98] sm:$0xff] %v1847
        %1880 = vst [vmem:[%s340 + $0xa0] sm:$0xff] %v1848
        %1881 = vst [vmem:[%s340 + $0xa8] sm:$0xff] %v1849
        %1882 = vst [vmem:[%s340 + $0xb0] sm:$0xff] %v1850
        %1883 = vst [vmem:[%s340 + $0xb8] sm:$0xff] %v1851
        %1884 = vst [vmem:[%s340 + $0xc0] sm:$0xff] %v1852
        %1885 = vst [vmem:[%s340 + $0xc8] sm:$0xff] %v1853
        %1886 = vst [vmem:[%s340 + $0xd0] sm:$0xff] %v1854
        %1887 = vst [vmem:[%s340 + $0xd8] sm:$0xff] %v1855
        %1888 = vst [vmem:[%s340 + $0xe0] sm:$0xff] %v1856
        %1889 = vst [vmem:[%s340 + $0xe8] sm:$0xff] %v1857
        %1890 = vst [vmem:[%s340 + $0xf0] sm:$0xff] %v1858
        %1891 = vst [vmem:[%s340 + $0xf8] sm:$0xff] %v1859
        %s1892 = sand.u32 %s186, 1
        %s1893 = scalar_lea.sflag [#allocation4], %s1892
        %s1894 = sand.u32 %s186, 1
        %s1895 = smul.addr %s1894, 256
        %s1896 = scalar_lea.vmem [#allocation10], %s1895
        // Predicated region
        $region65: #{tpu_custom_call.1} parent=47 // pred_check
          %p1897 = pneg %p196
        $region66: #{tpu_custom_call.1} parent=47 // pred_check_branch
          %1899 = sbr.rel (%p1897) target = $region68
        $region67: #{tpu_custom_call.1} parent=47 // pred_region
          %s1900 = smul.u32 32, %s26
          %s1902 = ssub.s32 4096, 4096
          %1903 = vsyncadd %s1893, %s1902
          %s1904 = smul.addr %s1900, 128
          %s1905 = scalar_lea.hbm %s7, %s1904
          %s1906 = sshll.u32 %s1896, 4
          %s1907 = int_to_ptr.vmem [resolvable:$true] %s1906
          %1912 = dma.vmem_to_hbm [thread:$0]  %s1907, 4096, %s1905, %s1893, 128, 128, 8
        $region68: #{tpu_custom_call.1} parent=47 // pred_fallthru
          _
      $region48: #{tpu_custom_call.1} parent=5 // pred_fallthru
        _
      %p1913 = scmp.le.s32.totalorder 2, %s21
      // Predicated region
      $region69: #{tpu_custom_call.1} parent=5 // pred_check
        %p1914 = pneg %p1913
      $region70: #{tpu_custom_call.1} parent=5 // pred_check_branch
        %1916 = sbr.rel (%p1914) target = $region72
      $region71: #{tpu_custom_call.1} parent=5 // pred_region
        %s1917 = ssub.s32 %s21, 2
        // Predicated region
        $region73: #{tpu_custom_call.1} parent=71 // pred_check
          %p1918 = pneg %p202
        $region74: #{tpu_custom_call.1} parent=71 // pred_check_branch
          %1920 = sbr.rel (%p1918) target = $region76
        $region75: #{tpu_custom_call.1} parent=71 // pred_region
          %s1921 = sand.u32 %s187, 1
          %s1922 = scalar_lea.sflag [#allocation4], %s1921
          %s1923 = sand.u32 %s187, 1
          %s1924 = smul.addr %s1923, 256
          %s1925 = scalar_lea.vmem [#allocation10], %s1924
          %1926 = dma.done %s1922, 4096
        $region76: #{tpu_custom_call.1} parent=71 // pred_fallthru
          _
      $region72: #{tpu_custom_call.1} parent=5 // pred_fallthru
        _
    $region6: #{tpu_custom_call.1} parent=1 // loop_footer
      %s25 = sadd.s32 1, %s21
    $region7: #{tpu_custom_call.1} parent=1 // loop_footer_branch
      %20 = sbr.rel target = $region3
    $region8: #{tpu_custom_call.1} parent=1 // loop_exit
      _
    %1927 = vsyncpa [#allocation3], 1
    %s1928 = scalar_lea.sflag [#allocation3], 1
    %1929 = vsyncpa %s1928, 1
    %1930 = vsyncpa [#allocation6], 1
    %1931 = vsyncpa [#allocation9], 1
    %1932 = vsyncpa [#allocation4], 1
    %s1933 = scalar_lea.sflag [#allocation4], 1
    %1934 = vsyncpa %s1933, 1

</llo_original>
